<compile_context>
chip_gen: v6e
topology: v6e:2x2x1
jax: 0.10.0
libtpu: 0.0.40
codegen_flags: <defaults>
</compile_context>

<pallas_src>
import jax
import jax.numpy as jnp
from jax.experimental import pallas as pl
from jax.experimental.pallas import tpu as pltpu


# ----------------------------------------------------------------------------- kernels


def _conv_block_kernel(x_ref, w_ref, b_ref, o_ref):
    # x_ref: (1, TILE, K*K*Cin) im2col rows for one spatial tile of one image
    # w_ref: (K*K*Cin, Cout)    flattened HWIO weights
    # b_ref: (1, Cout)
    # o_ref: (1, TILE, Cout)
    acc = jnp.dot(x_ref[0], w_ref[...], preferred_element_type=jnp.float32)
    acc = acc + b_ref[...]
    o_ref[0] = jnp.where(acc >= 0, acc, 0.1 * acc)  # LeakyReLU(0.1)


def _conv_final_kernel(x_ref, w_ref, b_ref, lw_ref, lb_ref, o_ref, lin_ref):
    # Last conv layer fused with the nn.Linear head (per image).
    # x_ref:  (1, S, K*K*Cin)   w_ref: (K*K*Cin, Cout)    b_ref: (1, Cout)
    # lw_ref: (S, Cout, Dout)   permuted linear weight (PyTorch CHW flatten order)
    # lb_ref: (1, Dout)
    # o_ref:  (1, S, Cout)      lin_ref: (1, 1, Dout)
    h = jnp.dot(x_ref[0], w_ref[...], preferred_element_type=jnp.float32)
    h = h + b_ref[...]
    h = jnp.where(h >= 0, h, 0.1 * h)           # LeakyReLU(0.1)
    o_ref[0] = h

    n_spatial = o_ref.shape[1]                  # static (== 4 for 128x128 inputs)
    acc = lb_ref[...]                           # (1, Dout)
    for s in range(n_spatial):                  # statically unrolled, tiny dots
        acc = acc + jnp.dot(
            h[s : s + 1, :], lw_ref[s], preferred_element_type=jnp.float32
        )
    lin_ref[0] = acc


# ---------------------------------------------------------------------------- wrappers


def _im2col(x_nhwc, K, stride, pad, Ho, Wo):
    """Lane-dense im2col: (N, H, W, Cin) -> (N, Ho*Wo, K*K*Cin); XLA glue."""
    N, H, W, Cin = x_nhwc.shape
    xp = jnp.pad(x_nhwc, ((0, 0), (pad, pad), (pad, pad), (0, 0)))
    taps = []
    for kh in range(K):
        for kw in range(K):
            sl = jax.lax.slice(
                xp,
                (0, kh, kw, 0),
                (N, kh + stride * (Ho - 1) + 1, kw + stride * (Wo - 1) + 1, Cin),
                (1, stride, stride, 1),
            )  # (N, Ho, Wo, Cin)
            taps.append(sl)
    cols = jnp.concatenate(taps, axis=-1)  # (N, Ho, Wo, K*K*Cin), (kh,kw,cin) order
    return cols.reshape(N, Ho * Wo, K * K * Cin)


def _conv_geometry(x_nhwc, w_hwio, stride):
    N, H, W, Cin = x_nhwc.shape
    K = w_hwio.shape[0]
    Cout = w_hwio.shape[-1]
    pad = (K - 1) // 2
    Ho = (H + 2 * pad - K) // stride + 1
    Wo = (W + 2 * pad - K) // stride + 1
    return N, K, Cin, Cout, pad, Ho, Wo


def conv2d_lrelu(x_nhwc, w_hwio, b, *, stride=2, spatial_tile=2048):
    """'same'-padded strided conv + LeakyReLU(0.1). x_nhwc: (N, H, W, Cin)."""
    N, K, Cin, Cout, pad, Ho, Wo = _conv_geometry(x_nhwc, w_hwio, stride)
    S = Ho * Wo
    KKC = K * K * Cin

    x_cols = _im2col(x_nhwc, K, stride, pad, Ho, Wo)      # (N, S, KKC)
    wf = w_hwio.reshape(KKC, Cout)
    bf = b.reshape(1, Cout)

    tile = min(spatial_tile, S)
    while S % tile:                                        # robustness; S is a pow2 here
        tile //= 2

    out = pl.pallas_call(
        _conv_block_kernel,
        out_shape=jax.ShapeDtypeStruct((N, S, Cout), jnp.float32),
        grid=(N, S // tile),
        in_specs=[
            pl.BlockSpec((1, tile, KKC), lambda n, t: (n, t, 0)),
            pl.BlockSpec((KKC, Cout), lambda n, t: (0, 0)),
            pl.BlockSpec((1, Cout), lambda n, t: (0, 0)),
        ],
        out_specs=pl.BlockSpec((1, tile, Cout), lambda n, t: (n, t, 0)),
        compiler_params=pltpu.CompilerParams(
            dimension_semantics=("parallel", "parallel")
        ),
    )(x_cols, wf, bf)

    return out.reshape(N, Ho, Wo, Cout)


def conv2d_lrelu_linear(x_nhwc, w_hwio, b, lin_w, lin_b, *, stride=2):
    """Last conv layer + fused nn.Linear head.

    Returns (conv_out_nhwc, lin_out) with lin_out: (N, Dout).
    lin_w: (S*Cout, Dout) in x @ W convention, rows in PyTorch CHW-flatten order.
    """
    N, K, Cin, Cout, pad, Ho, Wo = _conv_geometry(x_nhwc, w_hwio, stride)
    S = Ho * Wo
    KKC = K * K * Cin
    Dout = lin_w.shape[1]
    assert lin_w.shape[0] == S * Cout

    x_cols = _im2col(x_nhwc, K, stride, pad, Ho, Wo)      # (N, S, KKC)
    wf = w_hwio.reshape(KKC, Cout)
    bf = b.reshape(1, Cout)
    # PyTorch flattens NCHW as index c*S + s  ->  lw_perm[s, c, :] = lin_w[c*S + s, :]
    lw_perm = lin_w.reshape(Cout, S, Dout).transpose(1, 0, 2)  # (S, Cout, Dout)
    lbf = lin_b.reshape(1, Dout)

    conv_out, lin_out = pl.pallas_call(
        _conv_final_kernel,
        out_shape=(
            jax.ShapeDtypeStruct((N, S, Cout), jnp.float32),
            jax.ShapeDtypeStruct((N, 1, Dout), jnp.float32),
        ),
        grid=(N,),
        in_specs=[
            pl.BlockSpec((1, S, KKC), lambda n: (n, 0, 0)),
            pl.BlockSpec((KKC, Cout), lambda n: (0, 0)),
            pl.BlockSpec((1, Cout), lambda n: (0, 0)),
            pl.BlockSpec((S, Cout, Dout), lambda n: (0, 0, 0)),
            pl.BlockSpec((1, Dout), lambda n: (0, 0)),
        ],
        out_specs=(
            pl.BlockSpec((1, S, Cout), lambda n: (n, 0, 0)),
            pl.BlockSpec((1, 1, Dout), lambda n: (n, 0, 0)),
        ),
        compiler_params=pltpu.CompilerParams(dimension_semantics=("parallel",)),
    )(x_cols, wf, bf, lw_perm, lbf)

    return conv_out.reshape(N, Ho, Wo, Cout), lin_out.reshape(N, Dout)


# ------------------------------------------------------------------------------ module


class ImageEncoder:
    """JAX/Pallas port of the PyTorch ImageEncoder (6x stride-2 conv + Linear)."""

    # (Cin, Cout, kernel_size) for img_conv1..6 ; conv2d default kernel_size=3.
    def __init__(self, z_dim, key):
        self.z_dim = z_dim
        specs = [
            (3, 16, 7),
            (16, 32, 5),
            (32, 64, 5),
            (64, 64, 3),
            (64, 128, 3),
            (128, z_dim, 3),
        ]
        keys = jax.random.split(key, len(specs) + 1)
        self.conv_params = []
        for (cin, cout, k), kk in zip(specs, keys[:-1]):
            fan_in = cin * k * k
            # deterministic kaiming-normal-like init (init_weights), zero bias
            w = jax.random.normal(kk, (k, k, cin, cout), jnp.float32) * jnp.sqrt(
                2.0 / fan_in
            )
            b = jnp.zeros((cout,), jnp.float32)
            self.conv_params.append((w, b))

        # nn.Linear(4*z_dim, 2*z_dim): stored transposed (in, out) for x @ W
        din, dout = 4 * z_dim, 2 * z_dim
        bound = 1.0 / jnp.sqrt(jnp.float32(din))
        kw1, kw2 = jax.random.split(keys[-1])
        self.lin_w = jax.random.uniform(kw1, (din, dout), jnp.float32, -bound, bound)
        self.lin_b = jax.random.uniform(kw2, (dout,), jnp.float32, -bound, bound)

    def __call__(self, image_nchw):
        # image: (N, 3, H, W), NCHW as in PyTorch
        x = jnp.transpose(image_nchw, (0, 2, 3, 1))  # -> NHWC for the kernels
        conv_outs_nhwc = []
        for w, b in self.conv_params[:-1]:
            x = conv2d_lrelu(x, w, b, stride=2)
            conv_outs_nhwc.append(x)

        # last conv layer fused with the Linear head (PyTorch CHW flatten order)
        w6, b6 = self.conv_params[-1]
        out6_nhwc, lin_out = conv2d_lrelu_linear(
            x, w6, b6, self.lin_w, self.lin_b, stride=2
        )
        conv_outs_nhwc.append(out6_nhwc)

        # return intermediates in NCHW, exactly like the PyTorch module
        img_out_convs = tuple(jnp.transpose(o, (0, 3, 1, 2)) for o in conv_outs_nhwc)
        img_out = lin_out[:, :, None]  # (N, 2*z_dim, 1), matches unsqueeze(2)
        return img_out, img_out_convs


# -------------------------------------------------------------------- plain-XLA check


def _reference_forward(enc, image_nchw):
    """Pure-XLA reference of the same forward pass (for numerical cross-checking)."""
    x = jnp.transpose(image_nchw, (0, 2, 3, 1))
    conv_outs = []
    for w, b in enc.conv_params:
        K = w.shape[0]
        pad = (K - 1) // 2
        y = jax.lax.conv_general_dilated(
            x,
            w,
            window_strides=(2, 2),
            padding=[(pad, pad), (pad, pad)],
            dimension_numbers=("NHWC", "HWIO", "NHWC"),
            precision=jax.lax.Precision.HIGHEST,
        )
        y = y + b
        y = jnp.where(y >= 0, y, 0.1 * y)
        conv_outs.append(y)
        x = y
    convs_nchw = tuple(jnp.transpose(o, (0, 3, 1, 2)) for o in conv_outs)
    last = convs_nchw[-1]
    flat = last.reshape(last.shape[0], -1)  # PyTorch CHW flatten
    img_out = (
        jnp.dot(flat, enc.lin_w, precision=jax.lax.Precision.HIGHEST) + enc.lin_b
    )
    return img_out[:, :, None], convs_nchw


# -------------------------------------------------------------------------------- main


if __name__ == "__main__":
    key = jax.random.PRNGKey(0)
    k_param, k_img = jax.random.split(key)

    z_dim = 8
    enc = ImageEncoder(z_dim, k_param)

    # The 6 stride-2 convs + Linear(4*z_dim, 2*z_dim) imply a 128x128 input
    # (conv6 output spatial is 2x2 so flatten size == 4*z_dim).
    image = jax.random.normal(k_img, (2, 3, 128, 128), jnp.float32)

    img_out, img_out_convs = enc(image)
    jax.block_until_ready(img_out)
    jax.block_until_ready(img_out_convs)

    expected_conv_shapes = [
        (2, 16, 64, 64),
        (2, 32, 32, 32),
        (2, 64, 16, 16),
        (2, 64, 8, 8),
        (2, 128, 4, 4),
        (2, z_dim, 2, 2),
    ]
    assert img_out.shape == (2, 2 * z_dim, 1), img_out.shape
    assert [tuple(o.shape) for o in img_out_convs] == expected_conv_shapes
    assert bool(jnp.all(jnp.isfinite(img_out)))

    # numerical cross-check against the plain-XLA reference (loose tol: only guards
    # against layout/ordering bugs, tolerant of MXU f32 pass-precision differences)
    ref_out, ref_convs = _reference_forward(enc, image)
    for got, ref in zip(img_out_convs, ref_convs):
        assert bool(jnp.allclose(got, ref, rtol=5e-2, atol=5e-2)), float(
            jnp.max(jnp.abs(got - ref))
        )
    assert bool(jnp.allclose(img_out, ref_out, rtol=5e-2, atol=5e-2)), float(
        jnp.max(jnp.abs(img_out - ref_out))
    )

    print("KERNEL_OK")
</pallas_src>

<mosaic_0001>
module attributes {stable_mosaic.version = 11 : i64} {
  func.func @_conv_block_kernel(%arg0: i32, %arg1: i32, %arg2: memref<1x2048x147xf32, #tpu.memory_space<vmem>>, %arg3: memref<147x16xf32, #tpu.memory_space<vmem>>, %arg4: memref<1x16xf32, #tpu.memory_space<vmem>>, %arg5: memref<1x2048x16xf32, #tpu.memory_space<vmem>>) attributes {dimension_semantics = [#tpu.dimension_semantics<parallel>, #tpu.dimension_semantics<parallel>], iteration_bounds = array<i64: 2, 2>, scalar_prefetch = 0 : i64, scratch_operands = 0 : i64, tpu.core_type = #tpu.core_type<tc>, window_params = [{transform_indices = @transform_0, window_bounds = array<i64: 1, 2048, 147>}, {pipeline_mode = #tpu.pipeline_mode<synchronous>, transform_indices = @transform_1, window_bounds = array<i64: 147, 16>}, {pipeline_mode = #tpu.pipeline_mode<synchronous>, transform_indices = @transform_2, window_bounds = array<i64: 1, 16>}, {transform_indices = @transform_3, window_bounds = array<i64: 1, 2048, 16>}]} {
    %c0 = arith.constant 0 : index
    %c0_0 = arith.constant 0 : index
    %c0_1 = arith.constant 0 : index
    %0 = vector.load %arg2[%c0, %c0_0, %c0_1] : memref<1x2048x147xf32, #tpu.memory_space<vmem>>, vector<1x2048x147xf32>
    %1 = vector.shape_cast %0 : vector<1x2048x147xf32> to vector<2048x147xf32>
    %c0_2 = arith.constant 0 : index
    %c0_3 = arith.constant 0 : index
    %2 = vector.load %arg3[%c0_2, %c0_3] : memref<147x16xf32, #tpu.memory_space<vmem>>, vector<147x16xf32>
    %cst = arith.constant dense<0.000000e+00> : vector<2048x16xf32>
    %3 = tpu.matmul %1, %2, %cst {dimension_numbers = #tpu.dot_dimension_numbers<[1], [0], [0], [1], [0, 0, 1, 1], [], []>} : vector<2048x147xf32>, vector<147x16xf32>, vector<2048x16xf32> -> vector<2048x16xf32>
    %c0_4 = arith.constant 0 : index
    %c0_5 = arith.constant 0 : index
    %4 = vector.load %arg4[%c0_4, %c0_5] : memref<1x16xf32, #tpu.memory_space<vmem>>, vector<1x16xf32>
    %5 = vector.broadcast %4 : vector<1x16xf32> to vector<2048x16xf32>
    %6 = arith.addf %3, %5 : vector<2048x16xf32>
    %cst_6 = arith.constant 0.000000e+00 : f32
    %7 = vector.broadcast %cst_6 : f32 to vector<2048x16xf32>
    %8 = arith.cmpf oge, %6, %7 : vector<2048x16xf32>
    %cst_7 = arith.constant 1.000000e-01 : f32
    %9 = vector.broadcast %cst_7 : f32 to vector<2048x16xf32>
    %10 = arith.mulf %9, %6 : vector<2048x16xf32>
    %11 = arith.select %8, %6, %10 : vector<2048x16xi1>, vector<2048x16xf32>
    %c0_8 = arith.constant 0 : index
    %c0_9 = arith.constant 0 : index
    %c0_10 = arith.constant 0 : index
    %12 = vector.load %arg5[%c0_8, %c0_9, %c0_10] : memref<1x2048x16xf32, #tpu.memory_space<vmem>>, vector<1x2048x16xf32>
    %13 = vector.shape_cast %12 : vector<1x2048x16xf32> to vector<2048x16xf32>
    %14 = vector.shape_cast %11 : vector<2048x16xf32> to vector<1x2048x16xf32>
    tpu.vector_store %arg5[%c0_8, %c0_9, %c0_10], %14 {strides = array<i32>} : memref<1x2048x16xf32, #tpu.memory_space<vmem>>, vector<1x2048x16xf32>,
    return
  }
  func.func @transform_0(%arg0: i32, %arg1: i32) -> (i32, i32, i32) {
    %c0_i32 = arith.constant 0 : i32
    %c0_i32_0 = arith.constant 0 : i32
    return %arg0, %arg1, %c0_i32 : i32, i32, i32
  }
  func.func @transform_1(%arg0: i32, %arg1: i32) -> (i32, i32) {
    %c0_i32 = arith.constant 0 : i32
    %c0_i32_0 = arith.constant 0 : i32
    %c0_i32_1 = arith.constant 0 : i32
    return %c0_i32, %c0_i32_0 : i32, i32
  }
  func.func @transform_2(%arg0: i32, %arg1: i32) -> (i32, i32) {
    %c0_i32 = arith.constant 0 : i32
    %c0_i32_0 = arith.constant 0 : i32
    %c0_i32_1 = arith.constant 0 : i32
    return %c0_i32, %c0_i32_0 : i32, i32
  }
  func.func @transform_3(%arg0: i32, %arg1: i32) -> (i32, i32, i32) {
    %c0_i32 = arith.constant 0 : i32
    %c0_i32_0 = arith.constant 0 : i32
    return %arg0, %arg1, %c0_i32 : i32, i32, i32
  }
}

</mosaic_0001>

<llo_original>
// kernel: tpu_custom_call.1
$region0: #{tpu_custom_call.1}
  #allocation0 [shape = 'u32[]', space=smem, size = 0x4, offset = 0x4, fixed_abs, tag = 'smem constant byte address 0x4 - core index']
  #allocation1 [shape = 'u32[144,128]{1,0:T(1,128)}', space=vmem, size = 0x12000, scoped, tag = 'internal scratch']
  %s0 = inlined_call_operand.vmem [shape: f32[2,4096,147], index: 0, kind: input, shape index: {}]
  %s1 = inlined_call_operand.vmem [shape: f32[147,16], index: 1, kind: input, shape index: {}]
  %s2 = inlined_call_operand.vmem [shape: f32[1,16], index: 2, kind: input, shape index: {}]
  %s3 = inlined_call_operand.vmem [shape: f32[2,4096,16], index: 3, kind: output, shape index: {}]
  %s4 = sld [smem:[#allocation0]]
  $region45: #{tpu_custom_call.1} parent=0
    _
  %s6 = ssub.s32 1, %s4
  %s7 = scalar_select 0, %s6, %s4
  loop: start=0, step=1, limit=6
  $region2: #{tpu_custom_call.1} parent=0 // loop_pre_header
    _
  $region3: #{tpu_custom_call.1} parent=0 // loop_header
    %s9 = sphi 0, %s13
    %p10 = scmp.ge.s32.totalorder %s9, 6
    %s16 = sphi 0, %s28
    %s17 = sphi 0, %s24
    %s18 = sphi 0, %s16
    %s19 = sphi 0, %s17
    %s20 = sphi 0, %s18
    %s21 = sphi 0, %s19
    %s33 = sphi 0, %s35
    %s36 = sphi 0, %s33
    %s37 = sphi 0, %s36
    %s53 = sphi 0, %s37
    %s57 = sphi 0, %s57
    %s59 = sphi 0, %s57
    %s60 = sphi 0, %s59
    %s74 = sphi 0, %s60
    %s78 = sphi 0, %s78
    %s80 = sphi 0, %s78
    %s81 = sphi 0, %s80
    %s95 = sphi 0, %s81
    %s103 = sphi 0, %s105
    %s106 = sphi 0, %s103
    %s107 = sphi 0, %s106
    %s123 = sphi 0, %s107
  $region4: #{tpu_custom_call.1} parent=0 // loop_header_branch
    %12 = sbr.rel (%p10) target = $region8
  $region5: #{tpu_custom_call.1} parent=0 // loop_body
    %s14 = ssub.s32 %s9, 1
    %s15 = ssub.s32 %s9, 2
    %s22 = sadd.s32 1, %s17
    %p23 = scmp.ge.s32.totalorder %s22, 2
    %s24 = scalar_select %p23, 0, %s22
    %s25 = sadd.s32 1, %s16
    %s26 = scalar_select %p23, %s25, %s16
    %p27 = scmp.ge.s32.totalorder %s26, 2
    %s28 = scalar_select %p27, 0, %s26
    %s29 = ssub.s32 %s16, %s28
    %s30 = ssub.s32 %s17, %s24
    %s31 = sor.u32 %s29, %s30
    %p32 = scmp.eq.s32.totalorder %s31, 0
    %s34 = sadd.s32 %s33, 1
    %s35 = scalar_select %p32, %s33, %s34
    %p38 = pneg %p32
    %p39 = scmp.eq.s32.totalorder %s9, 3
    %p40 = por %p38, %p39
    %p41 = scmp.ne.s32.totalorder %s33, %s36
    %p42 = scmp.eq.s32.totalorder %s9, 0
    %p43 = por %p41, %p42
    %p44 = scmp.ne.s32.totalorder %s33, %s36
    %p45 = scmp.eq.s32.totalorder %s14, 3
    %p46 = por %p44, %p45
    %p47 = scmp.ne.s32.totalorder %s36, %s37
    %p48 = scmp.eq.s32.totalorder %s14, 0
    %p49 = por %p47, %p48
    %p50 = scmp.ne.s32.totalorder %s36, %s37
    %p51 = scmp.eq.s32.totalorder %s15, 3
    %p52 = por %p50, %p51
    %p54 = scmp.ne.s32.totalorder %s37, %s53
    %p55 = scmp.eq.s32.totalorder %s15, 0
    %p56 = por %p54, %p55
    %s58 = sadd.s32 %s57, 1
    %p61 = scmp.eq.s32.totalorder %s9, 3
    %p62 = scmp.ne.s32.totalorder %s57, %s59
    %p63 = scmp.eq.s32.totalorder %s9, 0
    %p64 = por %p62, %p63
    %p65 = scmp.ne.s32.totalorder %s57, %s59
    %p66 = scmp.eq.s32.totalorder %s14, 3
    %p67 = por %p65, %p66
    %p68 = scmp.ne.s32.totalorder %s59, %s60
    %p69 = scmp.eq.s32.totalorder %s14, 0
    %p70 = por %p68, %p69
    %p71 = scmp.ne.s32.totalorder %s59, %s60
    %p72 = scmp.eq.s32.totalorder %s15, 3
    %p73 = por %p71, %p72
    %p75 = scmp.ne.s32.totalorder %s60, %s74
    %p76 = scmp.eq.s32.totalorder %s15, 0
    %p77 = por %p75, %p76
    %s79 = sadd.s32 %s78, 1
    %p82 = scmp.eq.s32.totalorder %s9, 3
    %p83 = scmp.ne.s32.totalorder %s78, %s80
    %p84 = scmp.eq.s32.totalorder %s9, 0
    %p85 = por %p83, %p84
    %p86 = scmp.ne.s32.totalorder %s78, %s80
    %p87 = scmp.eq.s32.totalorder %s14, 3
    %p88 = por %p86, %p87
    %p89 = scmp.ne.s32.totalorder %s80, %s81
    %p90 = scmp.eq.s32.totalorder %s14, 0
    %p91 = por %p89, %p90
    %p92 = scmp.ne.s32.totalorder %s80, %s81
    %p93 = scmp.eq.s32.totalorder %s15, 3
    %p94 = por %p92, %p93
    %p96 = scmp.ne.s32.totalorder %s81, %s95
    %p97 = scmp.eq.s32.totalorder %s15, 0
    %p98 = por %p96, %p97
    %s99 = ssub.s32 %s16, %s28
    %s100 = ssub.s32 %s17, %s24
    %s101 = sor.u32 %s99, %s100
    %p102 = scmp.eq.s32.totalorder %s101, 0
    %s104 = sadd.s32 %s103, 1
    %s105 = scalar_select %p102, %s103, %s104
    %p108 = pneg %p102
    %p109 = scmp.eq.s32.totalorder %s9, 3
    %p110 = por %p108, %p109
    %p111 = scmp.ne.s32.totalorder %s103, %s106
    %p112 = scmp.eq.s32.totalorder %s9, 0
    %p113 = por %p111, %p112
    %p114 = scmp.ne.s32.totalorder %s103, %s106
    %p115 = scmp.eq.s32.totalorder %s14, 3
    %p116 = por %p114, %p115
    %p117 = scmp.ne.s32.totalorder %s106, %s107
    %p118 = scmp.eq.s32.totalorder %s14, 0
    %p119 = por %p117, %p118
    %p120 = scmp.ne.s32.totalorder %s106, %s107
    %p121 = scmp.eq.s32.totalorder %s15, 3
    %p122 = por %p120, %p121
    %p124 = scmp.ne.s32.totalorder %s107, %s123
    %p125 = scmp.eq.s32.totalorder %s15, 0
    %p126 = por %p124, %p125
    %p127 = scmp.le.s32.totalorder 1, %s9
    %p128 = scmp.lt.s32.totalorder %s9, 5
    %p129 = pnand %p127, %p128
    %p130 = pneg %p129
    // Predicated region
    $region9: #{tpu_custom_call.1} parent=5 // pred_check
      _
    $region10: #{tpu_custom_call.1} parent=5 // pred_check_branch
      %132 = sbr.rel (%p129) target = $region12
    $region11: #{tpu_custom_call.1} parent=5 // pred_region
      %s133 = ssub.s32 %s9, 1
      // Predicated region
      $region13: #{tpu_custom_call.1} parent=11 // pred_check
        %p134 = pneg %p70
      $region14: #{tpu_custom_call.1} parent=11 // pred_check_branch
        %136 = sbr.rel (%p134) target = $region16
      $region15: #{tpu_custom_call.1} parent=11 // pred_region
        _
      $region16: #{tpu_custom_call.1} parent=11 // pred_fallthru
        _
      // Predicated region
      $region17: #{tpu_custom_call.1} parent=11 // pred_check
        %p137 = pneg %p91
      $region18: #{tpu_custom_call.1} parent=11 // pred_check_branch
        %139 = sbr.rel (%p137) target = $region20
      $region19: #{tpu_custom_call.1} parent=11 // pred_region
        _
      $region20: #{tpu_custom_call.1} parent=11 // pred_fallthru
        _
    $region12: #{tpu_custom_call.1} parent=5 // pred_fallthru
      _
    %p140 = scmp.lt.s32.totalorder %s9, 4
    // Predicated region
    $region21: #{tpu_custom_call.1} parent=5 // pred_check
      %p141 = pneg %p140
    $region22: #{tpu_custom_call.1} parent=5 // pred_check_branch
      %143 = sbr.rel (%p141) target = $region24
    $region23: #{tpu_custom_call.1} parent=5 // pred_region
      // Predicated region
      $region25: #{tpu_custom_call.1} parent=23 // pred_check
        %p144 = pneg %p43
      $region26: #{tpu_custom_call.1} parent=23 // pred_check_branch
        %146 = sbr.rel (%p144) target = $region28
      $region27: #{tpu_custom_call.1} parent=23 // pred_region
        %s147 = smul.u32 256, %s17
        %p148 = scmp.lt.s32.totalorder %s16, 1
        %s149 = scalar_select %p148, %s16, 1
        %p150 = scmp.lt.s32.totalorder %s147, 511
        %s151 = scalar_select %p150, %s147, 511
        %s152 = smul.addr %s151, 2
        %s153 = smul.addr %s149, 1024
        %s154 = sadd.s32 %s152, %s153
        %s155 = smul.addr %s154, 8
        %s156 = scalar_lea.vmem %s0, %s155
        %s157 = smul.u32 256, %s17
      $region28: #{tpu_custom_call.1} parent=23 // pred_fallthru
        _
    $region24: #{tpu_custom_call.1} parent=5 // pred_fallthru
      _
    %p158 = scmp.le.s32.totalorder 1, %s9
    %p159 = scmp.lt.s32.totalorder %s9, 5
    %p160 = pnand %p158, %p159
    %p161 = pneg %p160
    // Predicated region
    $region29: #{tpu_custom_call.1} parent=5 // pred_check
      _
    $region30: #{tpu_custom_call.1} parent=5 // pred_check_branch
      %163 = sbr.rel (%p160) target = $region32
    $region31: #{tpu_custom_call.1} parent=5 // pred_region
      %s164 = ssub.s32 %s9, 1
      %s165 = smul.u32 256, %s19
      %p166 = scmp.lt.s32.totalorder %s18, 1
      %s167 = scalar_select %p166, %s18, 1
      %p168 = scmp.lt.s32.totalorder %s165, 511
      %s169 = scalar_select %p168, %s165, 511
      %s170 = smul.addr %s169, 2
      %s171 = smul.addr %s167, 1024
      %s172 = sadd.s32 %s170, %s171
      %s173 = smul.addr %s172, 8
      %s174 = scalar_lea.vmem %s0, %s173
      %p175 = pneg %p49
      %p176 = pneg %p46
      %p177 = pneg %p70
      %p178 = pneg %p67
      %p179 = pneg %p91
      %p180 = pneg %p88
      %p181 = pneg %p119
      %p182 = pneg %p116
      %s183 = smul.u32 256, %s19
      %p184 = scmp.lt.s32.totalorder %s18, 1
      %s185 = scalar_select %p184, %s18, 1
      %p186 = scmp.lt.s32.totalorder %s183, 511
      %s187 = scalar_select %p186, %s183, 511
      %s188 = smul.addr %s185, 512
      %s189 = sadd.s32 %s187, %s188
      %s190 = smul.addr %s189, 8
      %s191 = scalar_lea.vmem %s3, %s190
      %s192 = smul.u32 256, %s19
      %p193 = scmp.lt.s32.totalorder %s18, 1
      %s194 = scalar_select %p193, %s18, 1
      %p195 = scmp.lt.s32.totalorder %s192, 511
      %s196 = scalar_select %p195, %s192, 511
      %s197 = smul.addr %s196, 2
      %s198 = smul.addr %s194, 1024
      %s199 = sadd.s32 %s197, %s198
      %s200 = smul.addr %s199, 8
      %s201 = scalar_lea.vmem %s0, %s200
      %s202 = smul.u32 256, %s19
      %s203 = smul.u32 256, %s19
      %p204 = scmp.lt.s32.totalorder %s18, 1
      %s205 = scalar_select %p204, %s18, 1
      %p206 = scmp.lt.s32.totalorder %s203, 511
      %s207 = scalar_select %p206, %s203, 511
      %s208 = smul.addr %s205, 512
      %s209 = sadd.s32 %s207, %s208
      %s210 = smul.addr %s209, 8
      %s211 = scalar_lea.vmem %s3, %s210
      %s212 = smul.u32 256, %s19
      %v213 = vld [vmem:[%s201] sm:$0xff]
      %v214 = vld [vmem:[%s201 + $0x8] sm:$0xff]
      %v215 = vld [vmem:[%s201 + $0x10] sm:$0xff]
      %v216 = vld [vmem:[%s201 + $0x18] sm:$0xff]
      %v217 = vld [vmem:[%s201 + $0x20] sm:$0xff]
      %v218 = vld [vmem:[%s201 + $0x28] sm:$0xff]
      %v219 = vld [vmem:[%s201 + $0x30] sm:$0xff]
      %v220 = vld [vmem:[%s201 + $0x38] sm:$0xff]
      %v221 = vld [vmem:[%s201 + $0x40] sm:$0xff]
      %v222 = vld [vmem:[%s201 + $0x48] sm:$0xff]
      %v223 = vld [vmem:[%s201 + $0x50] sm:$0xff]
      %v224 = vld [vmem:[%s201 + $0x58] sm:$0xff]
      %v225 = vld [vmem:[%s201 + $0x60] sm:$0xff]
      %v226 = vld [vmem:[%s201 + $0x68] sm:$0xff]
      %v227 = vld [vmem:[%s201 + $0x70] sm:$0xff]
      %v228 = vld [vmem:[%s201 + $0x78] sm:$0xff]
      %v229 = vld [vmem:[%s201 + $0x80] sm:$0xff]
      %v230 = vld [vmem:[%s201 + $0x88] sm:$0xff]
      %v231 = vld [vmem:[%s201 + $0x90] sm:$0xff]
      %v232 = vld [vmem:[%s201 + $0x98] sm:$0xff]
      %v233 = vld [vmem:[%s201 + $0xa0] sm:$0xff]
      %v234 = vld [vmem:[%s201 + $0xa8] sm:$0xff]
      %v235 = vld [vmem:[%s201 + $0xb0] sm:$0xff]
      %v236 = vld [vmem:[%s201 + $0xb8] sm:$0xff]
      %v237 = vld [vmem:[%s201 + $0xc0] sm:$0xff]
      %v238 = vld [vmem:[%s201 + $0xc8] sm:$0xff]
      %v239 = vld [vmem:[%s201 + $0xd0] sm:$0xff]
      %v240 = vld [vmem:[%s201 + $0xd8] sm:$0xff]
      %v241 = vld [vmem:[%s201 + $0xe0] sm:$0xff]
      %v242 = vld [vmem:[%s201 + $0xe8] sm:$0xff]
      %v243 = vld [vmem:[%s201 + $0xf0] sm:$0xff]
      %v244 = vld [vmem:[%s201 + $0xf8] sm:$0xff]
      %v245 = vld [vmem:[%s201 + $0x100] sm:$0xff]
      %v246 = vld [vmem:[%s201 + $0x108] sm:$0xff]
      %v247 = vld [vmem:[%s201 + $0x110] sm:$0xff]
      %v248 = vld [vmem:[%s201 + $0x118] sm:$0xff]
      %v249 = vld [vmem:[%s201 + $0x120] sm:$0xff]
      %v250 = vld [vmem:[%s201 + $0x128] sm:$0xff]
      %v251 = vld [vmem:[%s201 + $0x130] sm:$0xff]
      %v252 = vld [vmem:[%s201 + $0x138] sm:$0xff]
      %v253 = vld [vmem:[%s201 + $0x140] sm:$0xff]
      %v254 = vld [vmem:[%s201 + $0x148] sm:$0xff]
      %v255 = vld [vmem:[%s201 + $0x150] sm:$0xff]
      %v256 = vld [vmem:[%s201 + $0x158] sm:$0xff]
      %v257 = vld [vmem:[%s201 + $0x160] sm:$0xff]
      %v258 = vld [vmem:[%s201 + $0x168] sm:$0xff]
      %v259 = vld [vmem:[%s201 + $0x170] sm:$0xff]
      %v260 = vld [vmem:[%s201 + $0x178] sm:$0xff]
      %v261 = vld [vmem:[%s201 + $0x180] sm:$0xff]
      %v262 = vld [vmem:[%s201 + $0x188] sm:$0xff]
      %v263 = vld [vmem:[%s201 + $0x190] sm:$0xff]
      %v264 = vld [vmem:[%s201 + $0x198] sm:$0xff]
      %v265 = vld [vmem:[%s201 + $0x1a0] sm:$0xff]
      %v266 = vld [vmem:[%s201 + $0x1a8] sm:$0xff]
      %v267 = vld [vmem:[%s201 + $0x1b0] sm:$0xff]
      %v268 = vld [vmem:[%s201 + $0x1b8] sm:$0xff]
      %v269 = vld [vmem:[%s201 + $0x1c0] sm:$0xff]
      %v270 = vld [vmem:[%s201 + $0x1c8] sm:$0xff]
      %v271 = vld [vmem:[%s201 + $0x1d0] sm:$0xff]
      %v272 = vld [vmem:[%s201 + $0x1d8] sm:$0xff]
      %v273 = vld [vmem:[%s201 + $0x1e0] sm:$0xff]
      %v274 = vld [vmem:[%s201 + $0x1e8] sm:$0xff]
      %v275 = vld [vmem:[%s201 + $0x1f0] sm:$0xff]
      %v276 = vld [vmem:[%s201 + $0x1f8] sm:$0xff]
      %v277 = vld [vmem:[%s201 + $0x200] sm:$0xff]
      %v278 = vld [vmem:[%s201 + $0x208] sm:$0xff]
      %v279 = vld [vmem:[%s201 + $0x210] sm:$0xff]
      %v280 = vld [vmem:[%s201 + $0x218] sm:$0xff]
      %v281 = vld [vmem:[%s201 + $0x220] sm:$0xff]
      %v282 = vld [vmem:[%s201 + $0x228] sm:$0xff]
      %v283 = vld [vmem:[%s201 + $0x230] sm:$0xff]
      %v284 = vld [vmem:[%s201 + $0x238] sm:$0xff]
      %v285 = vld [vmem:[%s201 + $0x240] sm:$0xff]
      %v286 = vld [vmem:[%s201 + $0x248] sm:$0xff]
      %v287 = vld [vmem:[%s201 + $0x250] sm:$0xff]
      %v288 = vld [vmem:[%s201 + $0x258] sm:$0xff]
      %v289 = vld [vmem:[%s201 + $0x260] sm:$0xff]
      %v290 = vld [vmem:[%s201 + $0x268] sm:$0xff]
      %v291 = vld [vmem:[%s201 + $0x270] sm:$0xff]
      %v292 = vld [vmem:[%s201 + $0x278] sm:$0xff]
      %v293 = vld [vmem:[%s201 + $0x280] sm:$0xff]
      %v294 = vld [vmem:[%s201 + $0x288] sm:$0xff]
      %v295 = vld [vmem:[%s201 + $0x290] sm:$0xff]
      %v296 = vld [vmem:[%s201 + $0x298] sm:$0xff]
      %v297 = vld [vmem:[%s201 + $0x2a0] sm:$0xff]
      %v298 = vld [vmem:[%s201 + $0x2a8] sm:$0xff]
      %v299 = vld [vmem:[%s201 + $0x2b0] sm:$0xff]
      %v300 = vld [vmem:[%s201 + $0x2b8] sm:$0xff]
      %v301 = vld [vmem:[%s201 + $0x2c0] sm:$0xff]
      %v302 = vld [vmem:[%s201 + $0x2c8] sm:$0xff]
      %v303 = vld [vmem:[%s201 + $0x2d0] sm:$0xff]
      %v304 = vld [vmem:[%s201 + $0x2d8] sm:$0xff]
      %v305 = vld [vmem:[%s201 + $0x2e0] sm:$0xff]
      %v306 = vld [vmem:[%s201 + $0x2e8] sm:$0xff]
      %v307 = vld [vmem:[%s201 + $0x2f0] sm:$0xff]
      %v308 = vld [vmem:[%s201 + $0x2f8] sm:$0xff]
      %v309 = vld [vmem:[%s201 + $0x300] sm:$0xff]
      %v310 = vld [vmem:[%s201 + $0x308] sm:$0xff]
      %v311 = vld [vmem:[%s201 + $0x310] sm:$0xff]
      %v312 = vld [vmem:[%s201 + $0x318] sm:$0xff]
      %v313 = vld [vmem:[%s201 + $0x320] sm:$0xff]
      %v314 = vld [vmem:[%s201 + $0x328] sm:$0xff]
      %v315 = vld [vmem:[%s201 + $0x330] sm:$0xff]
      %v316 = vld [vmem:[%s201 + $0x338] sm:$0xff]
      %v317 = vld [vmem:[%s201 + $0x340] sm:$0xff]
      %v318 = vld [vmem:[%s201 + $0x348] sm:$0xff]
      %v319 = vld [vmem:[%s201 + $0x350] sm:$0xff]
      %v320 = vld [vmem:[%s201 + $0x358] sm:$0xff]
      %v321 = vld [vmem:[%s201 + $0x360] sm:$0xff]
      %v322 = vld [vmem:[%s201 + $0x368] sm:$0xff]
      %v323 = vld [vmem:[%s201 + $0x370] sm:$0xff]
      %v324 = vld [vmem:[%s201 + $0x378] sm:$0xff]
      %v325 = vld [vmem:[%s201 + $0x380] sm:$0xff]
      %v326 = vld [vmem:[%s201 + $0x388] sm:$0xff]
      %v327 = vld [vmem:[%s201 + $0x390] sm:$0xff]
      %v328 = vld [vmem:[%s201 + $0x398] sm:$0xff]
      %v329 = vld [vmem:[%s201 + $0x3a0] sm:$0xff]
      %v330 = vld [vmem:[%s201 + $0x3a8] sm:$0xff]
      %v331 = vld [vmem:[%s201 + $0x3b0] sm:$0xff]
      %v332 = vld [vmem:[%s201 + $0x3b8] sm:$0xff]
      %v333 = vld [vmem:[%s201 + $0x3c0] sm:$0xff]
      %v334 = vld [vmem:[%s201 + $0x3c8] sm:$0xff]
      %v335 = vld [vmem:[%s201 + $0x3d0] sm:$0xff]
      %v336 = vld [vmem:[%s201 + $0x3d8] sm:$0xff]
      %v337 = vld [vmem:[%s201 + $0x3e0] sm:$0xff]
      %v338 = vld [vmem:[%s201 + $0x3e8] sm:$0xff]
      %v339 = vld [vmem:[%s201 + $0x3f0] sm:$0xff]
      %v340 = vld [vmem:[%s201 + $0x3f8] sm:$0xff]
      %v341 = vld [vmem:[%s201 + $0x400] sm:$0xff]
      %v342 = vld [vmem:[%s201 + $0x408] sm:$0xff]
      %v343 = vld [vmem:[%s201 + $0x410] sm:$0xff]
      %v344 = vld [vmem:[%s201 + $0x418] sm:$0xff]
      %v345 = vld [vmem:[%s201 + $0x420] sm:$0xff]
      %v346 = vld [vmem:[%s201 + $0x428] sm:$0xff]
      %v347 = vld [vmem:[%s201 + $0x430] sm:$0xff]
      %v348 = vld [vmem:[%s201 + $0x438] sm:$0xff]
      %v349 = vld [vmem:[%s201 + $0x440] sm:$0xff]
      %v350 = vld [vmem:[%s201 + $0x448] sm:$0xff]
      %v351 = vld [vmem:[%s201 + $0x450] sm:$0xff]
      %v352 = vld [vmem:[%s201 + $0x458] sm:$0xff]
      %v353 = vld [vmem:[%s201 + $0x460] sm:$0xff]
      %v354 = vld [vmem:[%s201 + $0x468] sm:$0xff]
      %v355 = vld [vmem:[%s201 + $0x470] sm:$0xff]
      %v356 = vld [vmem:[%s201 + $0x478] sm:$0xff]
      %v357 = vld [vmem:[%s201 + $0x480] sm:$0xff]
      %v358 = vld [vmem:[%s201 + $0x488] sm:$0xff]
      %v359 = vld [vmem:[%s201 + $0x490] sm:$0xff]
      %v360 = vld [vmem:[%s201 + $0x498] sm:$0xff]
      %v361 = vld [vmem:[%s201 + $0x4a0] sm:$0xff]
      %v362 = vld [vmem:[%s201 + $0x4a8] sm:$0xff]
      %v363 = vld [vmem:[%s201 + $0x4b0] sm:$0xff]
      %v364 = vld [vmem:[%s201 + $0x4b8] sm:$0xff]
      %v365 = vld [vmem:[%s201 + $0x4c0] sm:$0xff]
      %v366 = vld [vmem:[%s201 + $0x4c8] sm:$0xff]
      %v367 = vld [vmem:[%s201 + $0x4d0] sm:$0xff]
      %v368 = vld [vmem:[%s201 + $0x4d8] sm:$0xff]
      %v369 = vld [vmem:[%s201 + $0x4e0] sm:$0xff]
      %v370 = vld [vmem:[%s201 + $0x4e8] sm:$0xff]
      %v371 = vld [vmem:[%s201 + $0x4f0] sm:$0xff]
      %v372 = vld [vmem:[%s201 + $0x4f8] sm:$0xff]
      %v373 = vld [vmem:[%s201 + $0x500] sm:$0xff]
      %v374 = vld [vmem:[%s201 + $0x508] sm:$0xff]
      %v375 = vld [vmem:[%s201 + $0x510] sm:$0xff]
      %v376 = vld [vmem:[%s201 + $0x518] sm:$0xff]
      %v377 = vld [vmem:[%s201 + $0x520] sm:$0xff]
      %v378 = vld [vmem:[%s201 + $0x528] sm:$0xff]
      %v379 = vld [vmem:[%s201 + $0x530] sm:$0xff]
      %v380 = vld [vmem:[%s201 + $0x538] sm:$0xff]
      %v381 = vld [vmem:[%s201 + $0x540] sm:$0xff]
      %v382 = vld [vmem:[%s201 + $0x548] sm:$0xff]
      %v383 = vld [vmem:[%s201 + $0x550] sm:$0xff]
      %v384 = vld [vmem:[%s201 + $0x558] sm:$0xff]
      %v385 = vld [vmem:[%s201 + $0x560] sm:$0xff]
      %v386 = vld [vmem:[%s201 + $0x568] sm:$0xff]
      %v387 = vld [vmem:[%s201 + $0x570] sm:$0xff]
      %v388 = vld [vmem:[%s201 + $0x578] sm:$0xff]
      %v389 = vld [vmem:[%s201 + $0x580] sm:$0xff]
      %v390 = vld [vmem:[%s201 + $0x588] sm:$0xff]
      %v391 = vld [vmem:[%s201 + $0x590] sm:$0xff]
      %v392 = vld [vmem:[%s201 + $0x598] sm:$0xff]
      %v393 = vld [vmem:[%s201 + $0x5a0] sm:$0xff]
      %v394 = vld [vmem:[%s201 + $0x5a8] sm:$0xff]
      %v395 = vld [vmem:[%s201 + $0x5b0] sm:$0xff]
      %v396 = vld [vmem:[%s201 + $0x5b8] sm:$0xff]
      %v397 = vld [vmem:[%s201 + $0x5c0] sm:$0xff]
      %v398 = vld [vmem:[%s201 + $0x5c8] sm:$0xff]
      %v399 = vld [vmem:[%s201 + $0x5d0] sm:$0xff]
      %v400 = vld [vmem:[%s201 + $0x5d8] sm:$0xff]
      %v401 = vld [vmem:[%s201 + $0x5e0] sm:$0xff]
      %v402 = vld [vmem:[%s201 + $0x5e8] sm:$0xff]
      %v403 = vld [vmem:[%s201 + $0x5f0] sm:$0xff]
      %v404 = vld [vmem:[%s201 + $0x5f8] sm:$0xff]
      %v405 = vld [vmem:[%s201 + $0x600] sm:$0xff]
      %v406 = vld [vmem:[%s201 + $0x608] sm:$0xff]
      %v407 = vld [vmem:[%s201 + $0x610] sm:$0xff]
      %v408 = vld [vmem:[%s201 + $0x618] sm:$0xff]
      %v409 = vld [vmem:[%s201 + $0x620] sm:$0xff]
      %v410 = vld [vmem:[%s201 + $0x628] sm:$0xff]
      %v411 = vld [vmem:[%s201 + $0x630] sm:$0xff]
      %v412 = vld [vmem:[%s201 + $0x638] sm:$0xff]
      %v413 = vld [vmem:[%s201 + $0x640] sm:$0xff]
      %v414 = vld [vmem:[%s201 + $0x648] sm:$0xff]
      %v415 = vld [vmem:[%s201 + $0x650] sm:$0xff]
      %v416 = vld [vmem:[%s201 + $0x658] sm:$0xff]
      %v417 = vld [vmem:[%s201 + $0x660] sm:$0xff]
      %v418 = vld [vmem:[%s201 + $0x668] sm:$0xff]
      %v419 = vld [vmem:[%s201 + $0x670] sm:$0xff]
      %v420 = vld [vmem:[%s201 + $0x678] sm:$0xff]
      %v421 = vld [vmem:[%s201 + $0x680] sm:$0xff]
      %v422 = vld [vmem:[%s201 + $0x688] sm:$0xff]
      %v423 = vld [vmem:[%s201 + $0x690] sm:$0xff]
      %v424 = vld [vmem:[%s201 + $0x698] sm:$0xff]
      %v425 = vld [vmem:[%s201 + $0x6a0] sm:$0xff]
      %v426 = vld [vmem:[%s201 + $0x6a8] sm:$0xff]
      %v427 = vld [vmem:[%s201 + $0x6b0] sm:$0xff]
      %v428 = vld [vmem:[%s201 + $0x6b8] sm:$0xff]
      %v429 = vld [vmem:[%s201 + $0x6c0] sm:$0xff]
      %v430 = vld [vmem:[%s201 + $0x6c8] sm:$0xff]
      %v431 = vld [vmem:[%s201 + $0x6d0] sm:$0xff]
      %v432 = vld [vmem:[%s201 + $0x6d8] sm:$0xff]
      %v433 = vld [vmem:[%s201 + $0x6e0] sm:$0xff]
      %v434 = vld [vmem:[%s201 + $0x6e8] sm:$0xff]
      %v435 = vld [vmem:[%s201 + $0x6f0] sm:$0xff]
      %v436 = vld [vmem:[%s201 + $0x6f8] sm:$0xff]
      %v437 = vld [vmem:[%s201 + $0x700] sm:$0xff]
      %v438 = vld [vmem:[%s201 + $0x708] sm:$0xff]
      %v439 = vld [vmem:[%s201 + $0x710] sm:$0xff]
      %v440 = vld [vmem:[%s201 + $0x718] sm:$0xff]
      %v441 = vld [vmem:[%s201 + $0x720] sm:$0xff]
      %v442 = vld [vmem:[%s201 + $0x728] sm:$0xff]
      %v443 = vld [vmem:[%s201 + $0x730] sm:$0xff]
      %v444 = vld [vmem:[%s201 + $0x738] sm:$0xff]
      %v445 = vld [vmem:[%s201 + $0x740] sm:$0xff]
      %v446 = vld [vmem:[%s201 + $0x748] sm:$0xff]
      %v447 = vld [vmem:[%s201 + $0x750] sm:$0xff]
      %v448 = vld [vmem:[%s201 + $0x758] sm:$0xff]
      %v449 = vld [vmem:[%s201 + $0x760] sm:$0xff]
      %v450 = vld [vmem:[%s201 + $0x768] sm:$0xff]
      %v451 = vld [vmem:[%s201 + $0x770] sm:$0xff]
      %v452 = vld [vmem:[%s201 + $0x778] sm:$0xff]
      %v453 = vld [vmem:[%s201 + $0x780] sm:$0xff]
      %v454 = vld [vmem:[%s201 + $0x788] sm:$0xff]
      %v455 = vld [vmem:[%s201 + $0x790] sm:$0xff]
      %v456 = vld [vmem:[%s201 + $0x798] sm:$0xff]
      %v457 = vld [vmem:[%s201 + $0x7a0] sm:$0xff]
      %v458 = vld [vmem:[%s201 + $0x7a8] sm:$0xff]
      %v459 = vld [vmem:[%s201 + $0x7b0] sm:$0xff]
      %v460 = vld [vmem:[%s201 + $0x7b8] sm:$0xff]
      %v461 = vld [vmem:[%s201 + $0x7c0] sm:$0xff]
      %v462 = vld [vmem:[%s201 + $0x7c8] sm:$0xff]
      %v463 = vld [vmem:[%s201 + $0x7d0] sm:$0xff]
      %v464 = vld [vmem:[%s201 + $0x7d8] sm:$0xff]
      %v465 = vld [vmem:[%s201 + $0x7e0] sm:$0xff]
      %v466 = vld [vmem:[%s201 + $0x7e8] sm:$0xff]
      %v467 = vld [vmem:[%s201 + $0x7f0] sm:$0xff]
      %v468 = vld [vmem:[%s201 + $0x7f8] sm:$0xff]
      %v469 = vld [vmem:[%s201 + $0x800] sm:$0xff]
      %v470 = vld [vmem:[%s201 + $0x808] sm:$0xff]
      %v471 = vld [vmem:[%s201 + $0x810] sm:$0xff]
      %v472 = vld [vmem:[%s201 + $0x818] sm:$0xff]
      %v473 = vld [vmem:[%s201 + $0x820] sm:$0xff]
      %v474 = vld [vmem:[%s201 + $0x828] sm:$0xff]
      %v475 = vld [vmem:[%s201 + $0x830] sm:$0xff]
      %v476 = vld [vmem:[%s201 + $0x838] sm:$0xff]
      %v477 = vld [vmem:[%s201 + $0x840] sm:$0xff]
      %v478 = vld [vmem:[%s201 + $0x848] sm:$0xff]
      %v479 = vld [vmem:[%s201 + $0x850] sm:$0xff]
      %v480 = vld [vmem:[%s201 + $0x858] sm:$0xff]
      %v481 = vld [vmem:[%s201 + $0x860] sm:$0xff]
      %v482 = vld [vmem:[%s201 + $0x868] sm:$0xff]
      %v483 = vld [vmem:[%s201 + $0x870] sm:$0xff]
      %v484 = vld [vmem:[%s201 + $0x878] sm:$0xff]
      %v485 = vld [vmem:[%s201 + $0x880] sm:$0xff]
      %v486 = vld [vmem:[%s201 + $0x888] sm:$0xff]
      %v487 = vld [vmem:[%s201 + $0x890] sm:$0xff]
      %v488 = vld [vmem:[%s201 + $0x898] sm:$0xff]
      %v489 = vld [vmem:[%s201 + $0x8a0] sm:$0xff]
      %v490 = vld [vmem:[%s201 + $0x8a8] sm:$0xff]
      %v491 = vld [vmem:[%s201 + $0x8b0] sm:$0xff]
      %v492 = vld [vmem:[%s201 + $0x8b8] sm:$0xff]
      %v493 = vld [vmem:[%s201 + $0x8c0] sm:$0xff]
      %v494 = vld [vmem:[%s201 + $0x8c8] sm:$0xff]
      %v495 = vld [vmem:[%s201 + $0x8d0] sm:$0xff]
      %v496 = vld [vmem:[%s201 + $0x8d8] sm:$0xff]
      %v497 = vld [vmem:[%s201 + $0x8e0] sm:$0xff]
      %v498 = vld [vmem:[%s201 + $0x8e8] sm:$0xff]
      %v499 = vld [vmem:[%s201 + $0x8f0] sm:$0xff]
      %v500 = vld [vmem:[%s201 + $0x8f8] sm:$0xff]
      %v501 = vld [vmem:[%s201 + $0x900] sm:$0xff]
      %v502 = vld [vmem:[%s201 + $0x908] sm:$0xff]
      %v503 = vld [vmem:[%s201 + $0x910] sm:$0xff]
      %v504 = vld [vmem:[%s201 + $0x918] sm:$0xff]
      %v505 = vld [vmem:[%s201 + $0x920] sm:$0xff]
      %v506 = vld [vmem:[%s201 + $0x928] sm:$0xff]
      %v507 = vld [vmem:[%s201 + $0x930] sm:$0xff]
      %v508 = vld [vmem:[%s201 + $0x938] sm:$0xff]
      %v509 = vld [vmem:[%s201 + $0x940] sm:$0xff]
      %v510 = vld [vmem:[%s201 + $0x948] sm:$0xff]
      %v511 = vld [vmem:[%s201 + $0x950] sm:$0xff]
      %v512 = vld [vmem:[%s201 + $0x958] sm:$0xff]
      %v513 = vld [vmem:[%s201 + $0x960] sm:$0xff]
      %v514 = vld [vmem:[%s201 + $0x968] sm:$0xff]
      %v515 = vld [vmem:[%s201 + $0x970] sm:$0xff]
      %v516 = vld [vmem:[%s201 + $0x978] sm:$0xff]
      %v517 = vld [vmem:[%s201 + $0x980] sm:$0xff]
      %v518 = vld [vmem:[%s201 + $0x988] sm:$0xff]
      %v519 = vld [vmem:[%s201 + $0x990] sm:$0xff]
      %v520 = vld [vmem:[%s201 + $0x998] sm:$0xff]
      %v521 = vld [vmem:[%s201 + $0x9a0] sm:$0xff]
      %v522 = vld [vmem:[%s201 + $0x9a8] sm:$0xff]
      %v523 = vld [vmem:[%s201 + $0x9b0] sm:$0xff]
      %v524 = vld [vmem:[%s201 + $0x9b8] sm:$0xff]
      %v525 = vld [vmem:[%s201 + $0x9c0] sm:$0xff]
      %v526 = vld [vmem:[%s201 + $0x9c8] sm:$0xff]
      %v527 = vld [vmem:[%s201 + $0x9d0] sm:$0xff]
      %v528 = vld [vmem:[%s201 + $0x9d8] sm:$0xff]
      %v529 = vld [vmem:[%s201 + $0x9e0] sm:$0xff]
      %v530 = vld [vmem:[%s201 + $0x9e8] sm:$0xff]
      %v531 = vld [vmem:[%s201 + $0x9f0] sm:$0xff]
      %v532 = vld [vmem:[%s201 + $0x9f8] sm:$0xff]
      %v533 = vld [vmem:[%s201 + $0xa00] sm:$0xff]
      %v534 = vld [vmem:[%s201 + $0xa08] sm:$0xff]
      %v535 = vld [vmem:[%s201 + $0xa10] sm:$0xff]
      %v536 = vld [vmem:[%s201 + $0xa18] sm:$0xff]
      %v537 = vld [vmem:[%s201 + $0xa20] sm:$0xff]
      %v538 = vld [vmem:[%s201 + $0xa28] sm:$0xff]
      %v539 = vld [vmem:[%s201 + $0xa30] sm:$0xff]
      %v540 = vld [vmem:[%s201 + $0xa38] sm:$0xff]
      %v541 = vld [vmem:[%s201 + $0xa40] sm:$0xff]
      %v542 = vld [vmem:[%s201 + $0xa48] sm:$0xff]
      %v543 = vld [vmem:[%s201 + $0xa50] sm:$0xff]
      %v544 = vld [vmem:[%s201 + $0xa58] sm:$0xff]
      %v545 = vld [vmem:[%s201 + $0xa60] sm:$0xff]
      %v546 = vld [vmem:[%s201 + $0xa68] sm:$0xff]
      %v547 = vld [vmem:[%s201 + $0xa70] sm:$0xff]
      %v548 = vld [vmem:[%s201 + $0xa78] sm:$0xff]
      %v549 = vld [vmem:[%s201 + $0xa80] sm:$0xff]
      %v550 = vld [vmem:[%s201 + $0xa88] sm:$0xff]
      %v551 = vld [vmem:[%s201 + $0xa90] sm:$0xff]
      %v552 = vld [vmem:[%s201 + $0xa98] sm:$0xff]
      %v553 = vld [vmem:[%s201 + $0xaa0] sm:$0xff]
      %v554 = vld [vmem:[%s201 + $0xaa8] sm:$0xff]
      %v555 = vld [vmem:[%s201 + $0xab0] sm:$0xff]
      %v556 = vld [vmem:[%s201 + $0xab8] sm:$0xff]
      %v557 = vld [vmem:[%s201 + $0xac0] sm:$0xff]
      %v558 = vld [vmem:[%s201 + $0xac8] sm:$0xff]
      %v559 = vld [vmem:[%s201 + $0xad0] sm:$0xff]
      %v560 = vld [vmem:[%s201 + $0xad8] sm:$0xff]
      %v561 = vld [vmem:[%s201 + $0xae0] sm:$0xff]
      %v562 = vld [vmem:[%s201 + $0xae8] sm:$0xff]
      %v563 = vld [vmem:[%s201 + $0xaf0] sm:$0xff]
      %v564 = vld [vmem:[%s201 + $0xaf8] sm:$0xff]
      %v565 = vld [vmem:[%s201 + $0xb00] sm:$0xff]
      %v566 = vld [vmem:[%s201 + $0xb08] sm:$0xff]
      %v567 = vld [vmem:[%s201 + $0xb10] sm:$0xff]
      %v568 = vld [vmem:[%s201 + $0xb18] sm:$0xff]
      %v569 = vld [vmem:[%s201 + $0xb20] sm:$0xff]
      %v570 = vld [vmem:[%s201 + $0xb28] sm:$0xff]
      %v571 = vld [vmem:[%s201 + $0xb30] sm:$0xff]
      %v572 = vld [vmem:[%s201 + $0xb38] sm:$0xff]
      %v573 = vld [vmem:[%s201 + $0xb40] sm:$0xff]
      %v574 = vld [vmem:[%s201 + $0xb48] sm:$0xff]
      %v575 = vld [vmem:[%s201 + $0xb50] sm:$0xff]
      %v576 = vld [vmem:[%s201 + $0xb58] sm:$0xff]
      %v577 = vld [vmem:[%s201 + $0xb60] sm:$0xff]
      %v578 = vld [vmem:[%s201 + $0xb68] sm:$0xff]
      %v579 = vld [vmem:[%s201 + $0xb70] sm:$0xff]
      %v580 = vld [vmem:[%s201 + $0xb78] sm:$0xff]
      %v581 = vld [vmem:[%s201 + $0xb80] sm:$0xff]
      %v582 = vld [vmem:[%s201 + $0xb88] sm:$0xff]
      %v583 = vld [vmem:[%s201 + $0xb90] sm:$0xff]
      %v584 = vld [vmem:[%s201 + $0xb98] sm:$0xff]
      %v585 = vld [vmem:[%s201 + $0xba0] sm:$0xff]
      %v586 = vld [vmem:[%s201 + $0xba8] sm:$0xff]
      %v587 = vld [vmem:[%s201 + $0xbb0] sm:$0xff]
      %v588 = vld [vmem:[%s201 + $0xbb8] sm:$0xff]
      %v589 = vld [vmem:[%s201 + $0xbc0] sm:$0xff]
      %v590 = vld [vmem:[%s201 + $0xbc8] sm:$0xff]
      %v591 = vld [vmem:[%s201 + $0xbd0] sm:$0xff]
      %v592 = vld [vmem:[%s201 + $0xbd8] sm:$0xff]
      %v593 = vld [vmem:[%s201 + $0xbe0] sm:$0xff]
      %v594 = vld [vmem:[%s201 + $0xbe8] sm:$0xff]
      %v595 = vld [vmem:[%s201 + $0xbf0] sm:$0xff]
      %v596 = vld [vmem:[%s201 + $0xbf8] sm:$0xff]
      %v597 = vld [vmem:[%s201 + $0xc00] sm:$0xff]
      %v598 = vld [vmem:[%s201 + $0xc08] sm:$0xff]
      %v599 = vld [vmem:[%s201 + $0xc10] sm:$0xff]
      %v600 = vld [vmem:[%s201 + $0xc18] sm:$0xff]
      %v601 = vld [vmem:[%s201 + $0xc20] sm:$0xff]
      %v602 = vld [vmem:[%s201 + $0xc28] sm:$0xff]
      %v603 = vld [vmem:[%s201 + $0xc30] sm:$0xff]
      %v604 = vld [vmem:[%s201 + $0xc38] sm:$0xff]
      %v605 = vld [vmem:[%s201 + $0xc40] sm:$0xff]
      %v606 = vld [vmem:[%s201 + $0xc48] sm:$0xff]
      %v607 = vld [vmem:[%s201 + $0xc50] sm:$0xff]
      %v608 = vld [vmem:[%s201 + $0xc58] sm:$0xff]
      %v609 = vld [vmem:[%s201 + $0xc60] sm:$0xff]
      %v610 = vld [vmem:[%s201 + $0xc68] sm:$0xff]
      %v611 = vld [vmem:[%s201 + $0xc70] sm:$0xff]
      %v612 = vld [vmem:[%s201 + $0xc78] sm:$0xff]
      %v613 = vld [vmem:[%s201 + $0xc80] sm:$0xff]
      %v614 = vld [vmem:[%s201 + $0xc88] sm:$0xff]
      %v615 = vld [vmem:[%s201 + $0xc90] sm:$0xff]
      %v616 = vld [vmem:[%s201 + $0xc98] sm:$0xff]
      %v617 = vld [vmem:[%s201 + $0xca0] sm:$0xff]
      %v618 = vld [vmem:[%s201 + $0xca8] sm:$0xff]
      %v619 = vld [vmem:[%s201 + $0xcb0] sm:$0xff]
      %v620 = vld [vmem:[%s201 + $0xcb8] sm:$0xff]
      %v621 = vld [vmem:[%s201 + $0xcc0] sm:$0xff]
      %v622 = vld [vmem:[%s201 + $0xcc8] sm:$0xff]
      %v623 = vld [vmem:[%s201 + $0xcd0] sm:$0xff]
      %v624 = vld [vmem:[%s201 + $0xcd8] sm:$0xff]
      %v625 = vld [vmem:[%s201 + $0xce0] sm:$0xff]
      %v626 = vld [vmem:[%s201 + $0xce8] sm:$0xff]
      %v627 = vld [vmem:[%s201 + $0xcf0] sm:$0xff]
      %v628 = vld [vmem:[%s201 + $0xcf8] sm:$0xff]
      %v629 = vld [vmem:[%s201 + $0xd00] sm:$0xff]
      %v630 = vld [vmem:[%s201 + $0xd08] sm:$0xff]
      %v631 = vld [vmem:[%s201 + $0xd10] sm:$0xff]
      %v632 = vld [vmem:[%s201 + $0xd18] sm:$0xff]
      %v633 = vld [vmem:[%s201 + $0xd20] sm:$0xff]
      %v634 = vld [vmem:[%s201 + $0xd28] sm:$0xff]
      %v635 = vld [vmem:[%s201 + $0xd30] sm:$0xff]
      %v636 = vld [vmem:[%s201 + $0xd38] sm:$0xff]
      %v637 = vld [vmem:[%s201 + $0xd40] sm:$0xff]
      %v638 = vld [vmem:[%s201 + $0xd48] sm:$0xff]
      %v639 = vld [vmem:[%s201 + $0xd50] sm:$0xff]
      %v640 = vld [vmem:[%s201 + $0xd58] sm:$0xff]
      %v641 = vld [vmem:[%s201 + $0xd60] sm:$0xff]
      %v642 = vld [vmem:[%s201 + $0xd68] sm:$0xff]
      %v643 = vld [vmem:[%s201 + $0xd70] sm:$0xff]
      %v644 = vld [vmem:[%s201 + $0xd78] sm:$0xff]
      %v645 = vld [vmem:[%s201 + $0xd80] sm:$0xff]
      %v646 = vld [vmem:[%s201 + $0xd88] sm:$0xff]
      %v647 = vld [vmem:[%s201 + $0xd90] sm:$0xff]
      %v648 = vld [vmem:[%s201 + $0xd98] sm:$0xff]
      %v649 = vld [vmem:[%s201 + $0xda0] sm:$0xff]
      %v650 = vld [vmem:[%s201 + $0xda8] sm:$0xff]
      %v651 = vld [vmem:[%s201 + $0xdb0] sm:$0xff]
      %v652 = vld [vmem:[%s201 + $0xdb8] sm:$0xff]
      %v653 = vld [vmem:[%s201 + $0xdc0] sm:$0xff]
      %v654 = vld [vmem:[%s201 + $0xdc8] sm:$0xff]
      %v655 = vld [vmem:[%s201 + $0xdd0] sm:$0xff]
      %v656 = vld [vmem:[%s201 + $0xdd8] sm:$0xff]
      %v657 = vld [vmem:[%s201 + $0xde0] sm:$0xff]
      %v658 = vld [vmem:[%s201 + $0xde8] sm:$0xff]
      %v659 = vld [vmem:[%s201 + $0xdf0] sm:$0xff]
      %v660 = vld [vmem:[%s201 + $0xdf8] sm:$0xff]
      %v661 = vld [vmem:[%s201 + $0xe00] sm:$0xff]
      %v662 = vld [vmem:[%s201 + $0xe08] sm:$0xff]
      %v663 = vld [vmem:[%s201 + $0xe10] sm:$0xff]
      %v664 = vld [vmem:[%s201 + $0xe18] sm:$0xff]
      %v665 = vld [vmem:[%s201 + $0xe20] sm:$0xff]
      %v666 = vld [vmem:[%s201 + $0xe28] sm:$0xff]
      %v667 = vld [vmem:[%s201 + $0xe30] sm:$0xff]
      %v668 = vld [vmem:[%s201 + $0xe38] sm:$0xff]
      %v669 = vld [vmem:[%s201 + $0xe40] sm:$0xff]
      %v670 = vld [vmem:[%s201 + $0xe48] sm:$0xff]
      %v671 = vld [vmem:[%s201 + $0xe50] sm:$0xff]
      %v672 = vld [vmem:[%s201 + $0xe58] sm:$0xff]
      %v673 = vld [vmem:[%s201 + $0xe60] sm:$0xff]
      %v674 = vld [vmem:[%s201 + $0xe68] sm:$0xff]
      %v675 = vld [vmem:[%s201 + $0xe70] sm:$0xff]
      %v676 = vld [vmem:[%s201 + $0xe78] sm:$0xff]
      %v677 = vld [vmem:[%s201 + $0xe80] sm:$0xff]
      %v678 = vld [vmem:[%s201 + $0xe88] sm:$0xff]
      %v679 = vld [vmem:[%s201 + $0xe90] sm:$0xff]
      %v680 = vld [vmem:[%s201 + $0xe98] sm:$0xff]
      %v681 = vld [vmem:[%s201 + $0xea0] sm:$0xff]
      %v682 = vld [vmem:[%s201 + $0xea8] sm:$0xff]
      %v683 = vld [vmem:[%s201 + $0xeb0] sm:$0xff]
      %v684 = vld [vmem:[%s201 + $0xeb8] sm:$0xff]
      %v685 = vld [vmem:[%s201 + $0xec0] sm:$0xff]
      %v686 = vld [vmem:[%s201 + $0xec8] sm:$0xff]
      %v687 = vld [vmem:[%s201 + $0xed0] sm:$0xff]
      %v688 = vld [vmem:[%s201 + $0xed8] sm:$0xff]
      %v689 = vld [vmem:[%s201 + $0xee0] sm:$0xff]
      %v690 = vld [vmem:[%s201 + $0xee8] sm:$0xff]
      %v691 = vld [vmem:[%s201 + $0xef0] sm:$0xff]
      %v692 = vld [vmem:[%s201 + $0xef8] sm:$0xff]
      %v693 = vld [vmem:[%s201 + $0xf00] sm:$0xff]
      %v694 = vld [vmem:[%s201 + $0xf08] sm:$0xff]
      %v695 = vld [vmem:[%s201 + $0xf10] sm:$0xff]
      %v696 = vld [vmem:[%s201 + $0xf18] sm:$0xff]
      %v697 = vld [vmem:[%s201 + $0xf20] sm:$0xff]
      %v698 = vld [vmem:[%s201 + $0xf28] sm:$0xff]
      %v699 = vld [vmem:[%s201 + $0xf30] sm:$0xff]
      %v700 = vld [vmem:[%s201 + $0xf38] sm:$0xff]
      %v701 = vld [vmem:[%s201 + $0xf40] sm:$0xff]
      %v702 = vld [vmem:[%s201 + $0xf48] sm:$0xff]
      %v703 = vld [vmem:[%s201 + $0xf50] sm:$0xff]
      %v704 = vld [vmem:[%s201 + $0xf58] sm:$0xff]
      %v705 = vld [vmem:[%s201 + $0xf60] sm:$0xff]
      %v706 = vld [vmem:[%s201 + $0xf68] sm:$0xff]
      %v707 = vld [vmem:[%s201 + $0xf70] sm:$0xff]
      %v708 = vld [vmem:[%s201 + $0xf78] sm:$0xff]
      %v709 = vld [vmem:[%s201 + $0xf80] sm:$0xff]
      %v710 = vld [vmem:[%s201 + $0xf88] sm:$0xff]
      %v711 = vld [vmem:[%s201 + $0xf90] sm:$0xff]
      %v712 = vld [vmem:[%s201 + $0xf98] sm:$0xff]
      %v713 = vld [vmem:[%s201 + $0xfa0] sm:$0xff]
      %v714 = vld [vmem:[%s201 + $0xfa8] sm:$0xff]
      %v715 = vld [vmem:[%s201 + $0xfb0] sm:$0xff]
      %v716 = vld [vmem:[%s201 + $0xfb8] sm:$0xff]
      %v717 = vld [vmem:[%s201 + $0xfc0] sm:$0xff]
      %v718 = vld [vmem:[%s201 + $0xfc8] sm:$0xff]
      %v719 = vld [vmem:[%s201 + $0xfd0] sm:$0xff]
      %v720 = vld [vmem:[%s201 + $0xfd8] sm:$0xff]
      %v721 = vld [vmem:[%s201 + $0xfe0] sm:$0xff]
      %v722 = vld [vmem:[%s201 + $0xfe8] sm:$0xff]
      %v723 = vld [vmem:[%s201 + $0xff0] sm:$0xff]
      %v724 = vld [vmem:[%s201 + $0xff8] sm:$0xff]
      %v725 = vld [vmem:[%s1] sm:$0xff]
      %v726 = vld [vmem:[%s1 + $0x8] sm:$0xff]
      %v727 = vld [vmem:[%s1 + $0x10] sm:$0xff]
      %v728 = vld [vmem:[%s1 + $0x18] sm:$0xff]
      %v729 = vld [vmem:[%s1 + $0x20] sm:$0xff]
      %v730 = vld [vmem:[%s1 + $0x28] sm:$0xff]
      %v731 = vld [vmem:[%s1 + $0x30] sm:$0xff]
      %v732 = vld [vmem:[%s1 + $0x38] sm:$0xff]
      %v733 = vld [vmem:[%s1 + $0x40] sm:$0xff]
      %v734 = vld [vmem:[%s1 + $0x48] sm:$0xff]
      %v735 = vld [vmem:[%s1 + $0x50] sm:$0xff]
      %v736 = vld [vmem:[%s1 + $0x58] sm:$0xff]
      %v737 = vld [vmem:[%s1 + $0x60] sm:$0xff]
      %v738 = vld [vmem:[%s1 + $0x68] sm:$0xff]
      %v739 = vld [vmem:[%s1 + $0x70] sm:$0xff]
      %v740 = vld [vmem:[%s1 + $0x78] sm:$0xff]
      %v741 = vld [vmem:[%s1 + $0x80] sm:$0xff]
      %v742 = vld [vmem:[%s1 + $0x88] sm:$0xff]
      %v743 = vld [vmem:[%s1 + $0x90] sm:$0x7]
      %v744 = vld [vmem:[%s2] sm:$0x1]
      %v746 = vlaneseq
      %v747 = vshrl.u32 %v746, 7
      %v748 = vsub.s32 0, %v747
      %v749 = vrot.slane %v744, %v748
      %vm751 = vcmask 154624
      %v753 = vsel %vm751, %v214, 0
      %v756 = vsel %vm751, %v216, 0
      %v759 = vsel %vm751, %v218, 0
      %v762 = vsel %vm751, %v220, 0
      %v765 = vsel %vm751, %v222, 0
      %v768 = vsel %vm751, %v224, 0
      %v771 = vsel %vm751, %v226, 0
      %v774 = vsel %vm751, %v228, 0
      %v777 = vsel %vm751, %v230, 0
      %v780 = vsel %vm751, %v232, 0
      %v783 = vsel %vm751, %v234, 0
      %v786 = vsel %vm751, %v236, 0
      %v789 = vsel %vm751, %v238, 0
      %v792 = vsel %vm751, %v240, 0
      %v795 = vsel %vm751, %v242, 0
      %v798 = vsel %vm751, %v244, 0
      %v801 = vsel %vm751, %v246, 0
      %v804 = vsel %vm751, %v248, 0
      %v807 = vsel %vm751, %v250, 0
      %v810 = vsel %vm751, %v252, 0
      %v813 = vsel %vm751, %v254, 0
      %v816 = vsel %vm751, %v256, 0
      %v819 = vsel %vm751, %v258, 0
      %v822 = vsel %vm751, %v260, 0
      %v825 = vsel %vm751, %v262, 0
      %v828 = vsel %vm751, %v264, 0
      %v831 = vsel %vm751, %v266, 0
      %v834 = vsel %vm751, %v268, 0
      %v837 = vsel %vm751, %v270, 0
      %v840 = vsel %vm751, %v272, 0
      %v843 = vsel %vm751, %v274, 0
      %v846 = vsel %vm751, %v276, 0
      %v849 = vsel %vm751, %v278, 0
      %v852 = vsel %vm751, %v280, 0
      %v855 = vsel %vm751, %v282, 0
      %v858 = vsel %vm751, %v284, 0
      %v861 = vsel %vm751, %v286, 0
      %v864 = vsel %vm751, %v288, 0
      %v867 = vsel %vm751, %v290, 0
      %v870 = vsel %vm751, %v292, 0
      %v873 = vsel %vm751, %v294, 0
      %v876 = vsel %vm751, %v296, 0
      %v879 = vsel %vm751, %v298, 0
      %v882 = vsel %vm751, %v300, 0
      %v885 = vsel %vm751, %v302, 0
      %v888 = vsel %vm751, %v304, 0
      %v891 = vsel %vm751, %v306, 0
      %v894 = vsel %vm751, %v308, 0
      %v897 = vsel %vm751, %v310, 0
      %v900 = vsel %vm751, %v312, 0
      %v903 = vsel %vm751, %v314, 0
      %v906 = vsel %vm751, %v316, 0
      %v909 = vsel %vm751, %v318, 0
      %v912 = vsel %vm751, %v320, 0
      %v915 = vsel %vm751, %v322, 0
      %v918 = vsel %vm751, %v324, 0
      %v921 = vsel %vm751, %v326, 0
      %v924 = vsel %vm751, %v328, 0
      %v927 = vsel %vm751, %v330, 0
      %v930 = vsel %vm751, %v332, 0
      %v933 = vsel %vm751, %v334, 0
      %v936 = vsel %vm751, %v336, 0
      %v939 = vsel %vm751, %v338, 0
      %v942 = vsel %vm751, %v340, 0
      %v945 = vsel %vm751, %v342, 0
      %v948 = vsel %vm751, %v344, 0
      %v951 = vsel %vm751, %v346, 0
      %v954 = vsel %vm751, %v348, 0
      %v957 = vsel %vm751, %v350, 0
      %v960 = vsel %vm751, %v352, 0
      %v963 = vsel %vm751, %v354, 0
      %v966 = vsel %vm751, %v356, 0
      %v969 = vsel %vm751, %v358, 0
      %v972 = vsel %vm751, %v360, 0
      %v975 = vsel %vm751, %v362, 0
      %v978 = vsel %vm751, %v364, 0
      %v981 = vsel %vm751, %v366, 0
      %v984 = vsel %vm751, %v368, 0
      %v987 = vsel %vm751, %v370, 0
      %v990 = vsel %vm751, %v372, 0
      %v993 = vsel %vm751, %v374, 0
      %v996 = vsel %vm751, %v376, 0
      %v999 = vsel %vm751, %v378, 0
      %v1002 = vsel %vm751, %v380, 0
      %v1005 = vsel %vm751, %v382, 0
      %v1008 = vsel %vm751, %v384, 0
      %v1011 = vsel %vm751, %v386, 0
      %v1014 = vsel %vm751, %v388, 0
      %v1017 = vsel %vm751, %v390, 0
      %v1020 = vsel %vm751, %v392, 0
      %v1023 = vsel %vm751, %v394, 0
      %v1026 = vsel %vm751, %v396, 0
      %v1029 = vsel %vm751, %v398, 0
      %v1032 = vsel %vm751, %v400, 0
      %v1035 = vsel %vm751, %v402, 0
      %v1038 = vsel %vm751, %v404, 0
      %v1041 = vsel %vm751, %v406, 0
      %v1044 = vsel %vm751, %v408, 0
      %v1047 = vsel %vm751, %v410, 0
      %v1050 = vsel %vm751, %v412, 0
      %v1053 = vsel %vm751, %v414, 0
      %v1056 = vsel %vm751, %v416, 0
      %v1059 = vsel %vm751, %v418, 0
      %v1062 = vsel %vm751, %v420, 0
      %v1065 = vsel %vm751, %v422, 0
      %v1068 = vsel %vm751, %v424, 0
      %v1071 = vsel %vm751, %v426, 0
      %v1074 = vsel %vm751, %v428, 0
      %v1077 = vsel %vm751, %v430, 0
      %v1080 = vsel %vm751, %v432, 0
      %v1083 = vsel %vm751, %v434, 0
      %v1086 = vsel %vm751, %v436, 0
      %v1089 = vsel %vm751, %v438, 0
      %v1092 = vsel %vm751, %v440, 0
      %v1095 = vsel %vm751, %v442, 0
      %v1098 = vsel %vm751, %v444, 0
      %v1101 = vsel %vm751, %v446, 0
      %v1104 = vsel %vm751, %v448, 0
      %v1107 = vsel %vm751, %v450, 0
      %v1110 = vsel %vm751, %v452, 0
      %v1113 = vsel %vm751, %v454, 0
      %v1116 = vsel %vm751, %v456, 0
      %v1119 = vsel %vm751, %v458, 0
      %v1122 = vsel %vm751, %v460, 0
      %v1125 = vsel %vm751, %v462, 0
      %v1128 = vsel %vm751, %v464, 0
      %v1131 = vsel %vm751, %v466, 0
      %v1134 = vsel %vm751, %v468, 0
      %v1137 = vsel %vm751, %v470, 0
      %v1140 = vsel %vm751, %v472, 0
      %v1143 = vsel %vm751, %v474, 0
      %v1146 = vsel %vm751, %v476, 0
      %v1149 = vsel %vm751, %v478, 0
      %v1152 = vsel %vm751, %v480, 0
      %v1155 = vsel %vm751, %v482, 0
      %v1158 = vsel %vm751, %v484, 0
      %v1161 = vsel %vm751, %v486, 0
      %v1164 = vsel %vm751, %v488, 0
      %v1167 = vsel %vm751, %v490, 0
      %v1170 = vsel %vm751, %v492, 0
      %v1173 = vsel %vm751, %v494, 0
      %v1176 = vsel %vm751, %v496, 0
      %v1179 = vsel %vm751, %v498, 0
      %v1182 = vsel %vm751, %v500, 0
      %v1185 = vsel %vm751, %v502, 0
      %v1188 = vsel %vm751, %v504, 0
      %v1191 = vsel %vm751, %v506, 0
      %v1194 = vsel %vm751, %v508, 0
      %v1197 = vsel %vm751, %v510, 0
      %v1200 = vsel %vm751, %v512, 0
      %v1203 = vsel %vm751, %v514, 0
      %v1206 = vsel %vm751, %v516, 0
      %v1209 = vsel %vm751, %v518, 0
      %v1212 = vsel %vm751, %v520, 0
      %v1215 = vsel %vm751, %v522, 0
      %v1218 = vsel %vm751, %v524, 0
      %v1221 = vsel %vm751, %v526, 0
      %v1224 = vsel %vm751, %v528, 0
      %v1227 = vsel %vm751, %v530, 0
      %v1230 = vsel %vm751, %v532, 0
      %v1233 = vsel %vm751, %v534, 0
      %v1236 = vsel %vm751, %v536, 0
      %v1239 = vsel %vm751, %v538, 0
      %v1242 = vsel %vm751, %v540, 0
      %v1245 = vsel %vm751, %v542, 0
      %v1248 = vsel %vm751, %v544, 0
      %v1251 = vsel %vm751, %v546, 0
      %v1254 = vsel %vm751, %v548, 0
      %v1257 = vsel %vm751, %v550, 0
      %v1260 = vsel %vm751, %v552, 0
      %v1263 = vsel %vm751, %v554, 0
      %v1266 = vsel %vm751, %v556, 0
      %v1269 = vsel %vm751, %v558, 0
      %v1272 = vsel %vm751, %v560, 0
      %v1275 = vsel %vm751, %v562, 0
      %v1278 = vsel %vm751, %v564, 0
      %v1281 = vsel %vm751, %v566, 0
      %v1284 = vsel %vm751, %v568, 0
      %v1287 = vsel %vm751, %v570, 0
      %v1290 = vsel %vm751, %v572, 0
      %v1293 = vsel %vm751, %v574, 0
      %v1296 = vsel %vm751, %v576, 0
      %v1299 = vsel %vm751, %v578, 0
      %v1302 = vsel %vm751, %v580, 0
      %v1305 = vsel %vm751, %v582, 0
      %v1308 = vsel %vm751, %v584, 0
      %v1311 = vsel %vm751, %v586, 0
      %v1314 = vsel %vm751, %v588, 0
      %v1317 = vsel %vm751, %v590, 0
      %v1320 = vsel %vm751, %v592, 0
      %v1323 = vsel %vm751, %v594, 0
      %v1326 = vsel %vm751, %v596, 0
      %v1329 = vsel %vm751, %v598, 0
      %v1332 = vsel %vm751, %v600, 0
      %v1335 = vsel %vm751, %v602, 0
      %v1338 = vsel %vm751, %v604, 0
      %v1341 = vsel %vm751, %v606, 0
      %v1344 = vsel %vm751, %v608, 0
      %v1347 = vsel %vm751, %v610, 0
      %v1350 = vsel %vm751, %v612, 0
      %v1353 = vsel %vm751, %v614, 0
      %v1356 = vsel %vm751, %v616, 0
      %v1359 = vsel %vm751, %v618, 0
      %v1362 = vsel %vm751, %v620, 0
      %v1365 = vsel %vm751, %v622, 0
      %v1368 = vsel %vm751, %v624, 0
      %v1371 = vsel %vm751, %v626, 0
      %v1374 = vsel %vm751, %v628, 0
      %v1377 = vsel %vm751, %v630, 0
      %v1380 = vsel %vm751, %v632, 0
      %v1383 = vsel %vm751, %v634, 0
      %v1386 = vsel %vm751, %v636, 0
      %v1389 = vsel %vm751, %v638, 0
      %v1392 = vsel %vm751, %v640, 0
      %v1395 = vsel %vm751, %v642, 0
      %v1398 = vsel %vm751, %v644, 0
      %v1401 = vsel %vm751, %v646, 0
      %v1404 = vsel %vm751, %v648, 0
      %v1407 = vsel %vm751, %v650, 0
      %v1410 = vsel %vm751, %v652, 0
      %v1413 = vsel %vm751, %v654, 0
      %v1416 = vsel %vm751, %v656, 0
      %v1419 = vsel %vm751, %v658, 0
      %v1422 = vsel %vm751, %v660, 0
      %v1425 = vsel %vm751, %v662, 0
      %v1428 = vsel %vm751, %v664, 0
      %v1431 = vsel %vm751, %v666, 0
      %v1434 = vsel %vm751, %v668, 0
      %v1437 = vsel %vm751, %v670, 0
      %v1440 = vsel %vm751, %v672, 0
      %v1443 = vsel %vm751, %v674, 0
      %v1446 = vsel %vm751, %v676, 0
      %v1449 = vsel %vm751, %v678, 0
      %v1452 = vsel %vm751, %v680, 0
      %v1455 = vsel %vm751, %v682, 0
      %v1458 = vsel %vm751, %v684, 0
      %v1461 = vsel %vm751, %v686, 0
      %v1464 = vsel %vm751, %v688, 0
      %v1467 = vsel %vm751, %v690, 0
      %v1470 = vsel %vm751, %v692, 0
      %v1473 = vsel %vm751, %v694, 0
      %v1476 = vsel %vm751, %v696, 0
      %v1479 = vsel %vm751, %v698, 0
      %v1482 = vsel %vm751, %v700, 0
      %v1485 = vsel %vm751, %v702, 0
      %v1488 = vsel %vm751, %v704, 0
      %v1491 = vsel %vm751, %v706, 0
      %v1494 = vsel %vm751, %v708, 0
      %v1497 = vsel %vm751, %v710, 0
      %v1500 = vsel %vm751, %v712, 0
      %v1503 = vsel %vm751, %v714, 0
      %v1506 = vsel %vm751, %v716, 0
      %v1509 = vsel %vm751, %v718, 0
      %v1512 = vsel %vm751, %v720, 0
      %v1515 = vsel %vm751, %v722, 0
      %v1518 = vsel %vm751, %v724, 0
      %vm1520 = vcmask 1042432
      %v1522 = vsel %vm1520, %v743, 0
      %1524 = vmatprep.subr.mxu0 0.0
      %1525 = vmatpush1.msra.mxu0 %v740
      %1526 = vmatprep.subr.mxu0 0.0
      %1527 = vmatpush1.msra.mxu0 %v739
      %1528 = vmatprep.subr.mxu0 0.0
      %1529 = vmatpush1.msra.mxu0 %v738
      %1530 = vmatprep.subr.mxu0 0.0
      %1531 = vmatpush1.msra.mxu0 %v737
      %1532 = vmatprep.subr.mxu0 0.0
      %1533 = vmatpush1.msra.mxu0 %v736
      %1534 = vmatprep.subr.mxu0 0.0
      %1535 = vmatpush1.msra.mxu0 %v735
      %1536 = vmatprep.subr.mxu0 0.0
      %1537 = vmatpush1.msra.mxu0 %v734
      %1538 = vmatprep.subr.mxu0 0.0
      %1539 = vmatpush1.msra.mxu0 %v733
      %1540 = vmatprep.subr.mxu0 0.0
      %1541 = vmatpush1.msra.mxu0 %v732
      %1542 = vmatprep.subr.mxu0 0.0
      %1543 = vmatpush1.msra.mxu0 %v731
      %1544 = vmatprep.subr.mxu0 0.0
      %1545 = vmatpush1.msra.mxu0 %v730
      %1546 = vmatprep.subr.mxu0 0.0
      %1547 = vmatpush1.msra.mxu0 %v729
      %1548 = vmatprep.subr.mxu0 0.0
      %1549 = vmatpush1.msra.mxu0 %v728
      %1550 = vmatprep.subr.mxu0 0.0
      %1551 = vmatpush1.msra.mxu0 %v727
      %1552 = vmatprep.subr.mxu0 0.0
      %1553 = vmatpush1.msra.mxu0 %v726
      %1554 = vmatprep.subr.mxu0 0.0
      %1555 = vmatpush1.msra.mxu0 %v725
      %1556 = vmatprep.subr.mxu0 0.0
      %1557 = vmatpush2.msra.mxu0 0.0
      %1558 = vmatprep.subr.mxu0 0.0
      %1559 = vmatpush2.msra.mxu0 0.0
      %1560 = vmatprep.subr.mxu0 0.0
      %1561 = vmatpush2.msra.mxu0 0.0
      %1562 = vmatprep.subr.mxu0 0.0
      %1563 = vmatpush2.msra.mxu0 0.0
      %1564 = vmatprep.subr.mxu0 0.0
      %1565 = vmatpush2.msra.mxu0 0.0
      %1566 = vmatprep.subr.mxu0 0.0
      %1567 = vmatpush2.msra.mxu0 0.0
      %1568 = vmatprep.subr.mxu0 0.0
      %1569 = vmatpush2.msra.mxu0 0.0
      %1570 = vmatprep.subr.mxu0 0.0
      %1571 = vmatpush2.msra.mxu0 0.0
      %1572 = vmatprep.subr.mxu0 0.0
      %1573 = vmatpush2.msra.mxu0 0.0
      %1574 = vmatprep.subr.mxu0 0.0
      %1575 = vmatpush2.msra.mxu0 0.0
      %1576 = vmatprep.subr.mxu0 0.0
      %1577 = vmatpush2.msra.mxu0 0.0
      %1578 = vmatprep.subr.mxu0 0.0
      %1579 = vmatpush2.msra.mxu0 0.0
      %1580 = vmatprep.subr.mxu0 0.0
      %1581 = vmatpush2.msra.mxu0 0.0
      %1582 = vmatprep.subr.mxu0 0.0
      %1583 = vmatpush2.msra.mxu0 %v1522
      %1584 = vmatprep.subr.mxu0 0.0
      %1585 = vmatpush2.msra.mxu0 %v742
      %1586 = vmatprep.subr.mxu0 0.0
      %1587 = vmatpush2.msra.mxu0 %v741
      %1588 = vmatprep.mubr.f32.mxu0 %v753
      %1589 = vmatmul.mubr.f32.gmra.mxu0 %v213
      %v1590 = vpop.f32.mrf.mxu0
      %v1591 = vadd.f32 %v749, %v1590
      %v1592 = vpop.f32.mrf.mxu0
      %1593 = vmatprep.mubr.f32.mxu0 %v756
      %1594 = vmatmul.mubr.f32.gmra.mxu0 %v215
      %v1595 = vpop.f32.mrf.mxu0
      %v1596 = vadd.f32 %v749, %v1595
      %v1597 = vpop.f32.mrf.mxu0
      %1598 = vmatprep.mubr.f32.mxu0 %v759
      %1599 = vmatmul.mubr.f32.gmra.mxu0 %v217
      %v1600 = vpop.f32.mrf.mxu0
      %v1601 = vadd.f32 %v749, %v1600
      %v1602 = vpop.f32.mrf.mxu0
      %1603 = vmatprep.mubr.f32.mxu0 %v762
      %1604 = vmatmul.mubr.f32.gmra.mxu0 %v219
      %v1605 = vpop.f32.mrf.mxu0
      %v1606 = vadd.f32 %v749, %v1605
      %v1607 = vpop.f32.mrf.mxu0
      %1608 = vmatprep.mubr.f32.mxu0 %v765
      %1609 = vmatmul.mubr.f32.gmra.mxu0 %v221
      %v1610 = vpop.f32.mrf.mxu0
      %v1611 = vadd.f32 %v749, %v1610
      %v1612 = vpop.f32.mrf.mxu0
      %1613 = vmatprep.mubr.f32.mxu0 %v768
      %1614 = vmatmul.mubr.f32.gmra.mxu0 %v223
      %v1615 = vpop.f32.mrf.mxu0
      %v1616 = vadd.f32 %v749, %v1615
      %v1617 = vpop.f32.mrf.mxu0
      %1618 = vmatprep.mubr.f32.mxu0 %v771
      %1619 = vmatmul.mubr.f32.gmra.mxu0 %v225
      %v1620 = vpop.f32.mrf.mxu0
      %v1621 = vadd.f32 %v749, %v1620
      %v1622 = vpop.f32.mrf.mxu0
      %1623 = vmatprep.mubr.f32.mxu0 %v774
      %1624 = vmatmul.mubr.f32.gmra.mxu0 %v227
      %v1625 = vpop.f32.mrf.mxu0
      %v1626 = vadd.f32 %v749, %v1625
      %v1627 = vpop.f32.mrf.mxu0
      %1628 = vmatprep.mubr.f32.mxu0 %v777
      %1629 = vmatmul.mubr.f32.gmra.mxu0 %v229
      %v1630 = vpop.f32.mrf.mxu0
      %v1631 = vadd.f32 %v749, %v1630
      %v1632 = vpop.f32.mrf.mxu0
      %1633 = vmatprep.mubr.f32.mxu0 %v780
      %1634 = vmatmul.mubr.f32.gmra.mxu0 %v231
      %v1635 = vpop.f32.mrf.mxu0
      %v1636 = vadd.f32 %v749, %v1635
      %v1637 = vpop.f32.mrf.mxu0
      %1638 = vmatprep.mubr.f32.mxu0 %v783
      %1639 = vmatmul.mubr.f32.gmra.mxu0 %v233
      %v1640 = vpop.f32.mrf.mxu0
      %v1641 = vadd.f32 %v749, %v1640
      %v1642 = vpop.f32.mrf.mxu0
      %1643 = vmatprep.mubr.f32.mxu0 %v786
      %1644 = vmatmul.mubr.f32.gmra.mxu0 %v235
      %v1645 = vpop.f32.mrf.mxu0
      %v1646 = vadd.f32 %v749, %v1645
      %v1647 = vpop.f32.mrf.mxu0
      %1648 = vmatprep.mubr.f32.mxu0 %v789
      %1649 = vmatmul.mubr.f32.gmra.mxu0 %v237
      %v1650 = vpop.f32.mrf.mxu0
      %v1651 = vadd.f32 %v749, %v1650
      %v1652 = vpop.f32.mrf.mxu0
      %1653 = vmatprep.mubr.f32.mxu0 %v792
      %1654 = vmatmul.mubr.f32.gmra.mxu0 %v239
      %v1655 = vpop.f32.mrf.mxu0
      %v1656 = vadd.f32 %v749, %v1655
      %v1657 = vpop.f32.mrf.mxu0
      %1658 = vmatprep.mubr.f32.mxu0 %v795
      %1659 = vmatmul.mubr.f32.gmra.mxu0 %v241
      %v1660 = vpop.f32.mrf.mxu0
      %v1661 = vadd.f32 %v749, %v1660
      %v1662 = vpop.f32.mrf.mxu0
      %1663 = vmatprep.mubr.f32.mxu0 %v798
      %1664 = vmatmul.mubr.f32.gmra.mxu0 %v243
      %v1665 = vpop.f32.mrf.mxu0
      %v1666 = vadd.f32 %v749, %v1665
      %v1667 = vpop.f32.mrf.mxu0
      %1668 = vmatprep.mubr.f32.mxu0 %v801
      %1669 = vmatmul.mubr.f32.gmra.mxu0 %v245
      %v1670 = vpop.f32.mrf.mxu0
      %v1671 = vadd.f32 %v749, %v1670
      %v1672 = vpop.f32.mrf.mxu0
      %1673 = vmatprep.mubr.f32.mxu0 %v804
      %1674 = vmatmul.mubr.f32.gmra.mxu0 %v247
      %v1675 = vpop.f32.mrf.mxu0
      %v1676 = vadd.f32 %v749, %v1675
      %v1677 = vpop.f32.mrf.mxu0
      %1678 = vmatprep.mubr.f32.mxu0 %v807
      %1679 = vmatmul.mubr.f32.gmra.mxu0 %v249
      %v1680 = vpop.f32.mrf.mxu0
      %v1681 = vadd.f32 %v749, %v1680
      %v1682 = vpop.f32.mrf.mxu0
      %1683 = vmatprep.mubr.f32.mxu0 %v810
      %1684 = vmatmul.mubr.f32.gmra.mxu0 %v251
      %v1685 = vpop.f32.mrf.mxu0
      %v1686 = vadd.f32 %v749, %v1685
      %v1687 = vpop.f32.mrf.mxu0
      %1688 = vmatprep.mubr.f32.mxu0 %v813
      %1689 = vmatmul.mubr.f32.gmra.mxu0 %v253
      %v1690 = vpop.f32.mrf.mxu0
      %v1691 = vadd.f32 %v749, %v1690
      %v1692 = vpop.f32.mrf.mxu0
      %1693 = vmatprep.mubr.f32.mxu0 %v816
      %1694 = vmatmul.mubr.f32.gmra.mxu0 %v255
      %v1695 = vpop.f32.mrf.mxu0
      %v1696 = vadd.f32 %v749, %v1695
      %v1697 = vpop.f32.mrf.mxu0
      %1698 = vmatprep.mubr.f32.mxu0 %v819
      %1699 = vmatmul.mubr.f32.gmra.mxu0 %v257
      %v1700 = vpop.f32.mrf.mxu0
      %v1701 = vadd.f32 %v749, %v1700
      %v1702 = vpop.f32.mrf.mxu0
      %1703 = vmatprep.mubr.f32.mxu0 %v822
      %1704 = vmatmul.mubr.f32.gmra.mxu0 %v259
      %v1705 = vpop.f32.mrf.mxu0
      %v1706 = vadd.f32 %v749, %v1705
      %v1707 = vpop.f32.mrf.mxu0
      %1708 = vmatprep.mubr.f32.mxu0 %v825
      %1709 = vmatmul.mubr.f32.gmra.mxu0 %v261
      %v1710 = vpop.f32.mrf.mxu0
      %v1711 = vadd.f32 %v749, %v1710
      %v1712 = vpop.f32.mrf.mxu0
      %1713 = vmatprep.mubr.f32.mxu0 %v828
      %1714 = vmatmul.mubr.f32.gmra.mxu0 %v263
      %v1715 = vpop.f32.mrf.mxu0
      %v1716 = vadd.f32 %v749, %v1715
      %v1717 = vpop.f32.mrf.mxu0
      %1718 = vmatprep.mubr.f32.mxu0 %v831
      %1719 = vmatmul.mubr.f32.gmra.mxu0 %v265
      %v1720 = vpop.f32.mrf.mxu0
      %v1721 = vadd.f32 %v749, %v1720
      %v1722 = vpop.f32.mrf.mxu0
      %1723 = vmatprep.mubr.f32.mxu0 %v834
      %1724 = vmatmul.mubr.f32.gmra.mxu0 %v267
      %v1725 = vpop.f32.mrf.mxu0
      %v1726 = vadd.f32 %v749, %v1725
      %v1727 = vpop.f32.mrf.mxu0
      %1728 = vmatprep.mubr.f32.mxu0 %v837
      %1729 = vmatmul.mubr.f32.gmra.mxu0 %v269
      %v1730 = vpop.f32.mrf.mxu0
      %v1731 = vadd.f32 %v749, %v1730
      %v1732 = vpop.f32.mrf.mxu0
      %1733 = vmatprep.mubr.f32.mxu0 %v840
      %1734 = vmatmul.mubr.f32.gmra.mxu0 %v271
      %v1735 = vpop.f32.mrf.mxu0
      %v1736 = vadd.f32 %v749, %v1735
      %v1737 = vpop.f32.mrf.mxu0
      %1738 = vmatprep.mubr.f32.mxu0 %v843
      %1739 = vmatmul.mubr.f32.gmra.mxu0 %v273
      %v1740 = vpop.f32.mrf.mxu0
      %v1741 = vadd.f32 %v749, %v1740
      %v1742 = vpop.f32.mrf.mxu0
      %1743 = vmatprep.mubr.f32.mxu0 %v846
      %1744 = vmatmul.mubr.f32.gmra.mxu0 %v275
      %v1745 = vpop.f32.mrf.mxu0
      %v1746 = vadd.f32 %v749, %v1745
      %v1747 = vpop.f32.mrf.mxu0
      %1748 = vmatprep.mubr.f32.mxu0 %v849
      %1749 = vmatmul.mubr.f32.gmra.mxu0 %v277
      %v1750 = vpop.f32.mrf.mxu0
      %v1751 = vadd.f32 %v749, %v1750
      %v1752 = vpop.f32.mrf.mxu0
      %1753 = vmatprep.mubr.f32.mxu0 %v852
      %1754 = vmatmul.mubr.f32.gmra.mxu0 %v279
      %v1755 = vpop.f32.mrf.mxu0
      %v1756 = vadd.f32 %v749, %v1755
      %v1757 = vpop.f32.mrf.mxu0
      %1758 = vmatprep.mubr.f32.mxu0 %v855
      %1759 = vmatmul.mubr.f32.gmra.mxu0 %v281
      %v1760 = vpop.f32.mrf.mxu0
      %v1761 = vadd.f32 %v749, %v1760
      %v1762 = vpop.f32.mrf.mxu0
      %1763 = vmatprep.mubr.f32.mxu0 %v858
      %1764 = vmatmul.mubr.f32.gmra.mxu0 %v283
      %v1765 = vpop.f32.mrf.mxu0
      %v1766 = vadd.f32 %v749, %v1765
      %v1767 = vpop.f32.mrf.mxu0
      %1768 = vmatprep.mubr.f32.mxu0 %v861
      %1769 = vmatmul.mubr.f32.gmra.mxu0 %v285
      %v1770 = vpop.f32.mrf.mxu0
      %v1771 = vadd.f32 %v749, %v1770
      %v1772 = vpop.f32.mrf.mxu0
      %1773 = vmatprep.mubr.f32.mxu0 %v864
      %1774 = vmatmul.mubr.f32.gmra.mxu0 %v287
      %v1775 = vpop.f32.mrf.mxu0
      %v1776 = vadd.f32 %v749, %v1775
      %v1777 = vpop.f32.mrf.mxu0
      %1778 = vmatprep.mubr.f32.mxu0 %v867
      %1779 = vmatmul.mubr.f32.gmra.mxu0 %v289
      %v1780 = vpop.f32.mrf.mxu0
      %v1781 = vadd.f32 %v749, %v1780
      %v1782 = vpop.f32.mrf.mxu0
      %1783 = vmatprep.mubr.f32.mxu0 %v870
      %1784 = vmatmul.mubr.f32.gmra.mxu0 %v291
      %v1785 = vpop.f32.mrf.mxu0
      %v1786 = vadd.f32 %v749, %v1785
      %v1787 = vpop.f32.mrf.mxu0
      %1788 = vmatprep.mubr.f32.mxu0 %v873
      %1789 = vmatmul.mubr.f32.gmra.mxu0 %v293
      %v1790 = vpop.f32.mrf.mxu0
      %v1791 = vadd.f32 %v749, %v1790
      %v1792 = vpop.f32.mrf.mxu0
      %1793 = vmatprep.mubr.f32.mxu0 %v876
      %1794 = vmatmul.mubr.f32.gmra.mxu0 %v295
      %v1795 = vpop.f32.mrf.mxu0
      %v1796 = vadd.f32 %v749, %v1795
      %v1797 = vpop.f32.mrf.mxu0
      %1798 = vmatprep.mubr.f32.mxu0 %v879
      %1799 = vmatmul.mubr.f32.gmra.mxu0 %v297
      %v1800 = vpop.f32.mrf.mxu0
      %v1801 = vadd.f32 %v749, %v1800
      %v1802 = vpop.f32.mrf.mxu0
      %1803 = vmatprep.mubr.f32.mxu0 %v882
      %1804 = vmatmul.mubr.f32.gmra.mxu0 %v299
      %v1805 = vpop.f32.mrf.mxu0
      %v1806 = vadd.f32 %v749, %v1805
      %v1807 = vpop.f32.mrf.mxu0
      %1808 = vmatprep.mubr.f32.mxu0 %v885
      %1809 = vmatmul.mubr.f32.gmra.mxu0 %v301
      %v1810 = vpop.f32.mrf.mxu0
      %v1811 = vadd.f32 %v749, %v1810
      %v1812 = vpop.f32.mrf.mxu0
      %1813 = vmatprep.mubr.f32.mxu0 %v888
      %1814 = vmatmul.mubr.f32.gmra.mxu0 %v303
      %v1815 = vpop.f32.mrf.mxu0
      %v1816 = vadd.f32 %v749, %v1815
      %v1817 = vpop.f32.mrf.mxu0
      %1818 = vmatprep.mubr.f32.mxu0 %v891
      %1819 = vmatmul.mubr.f32.gmra.mxu0 %v305
      %v1820 = vpop.f32.mrf.mxu0
      %v1821 = vadd.f32 %v749, %v1820
      %v1822 = vpop.f32.mrf.mxu0
      %1823 = vmatprep.mubr.f32.mxu0 %v894
      %1824 = vmatmul.mubr.f32.gmra.mxu0 %v307
      %v1825 = vpop.f32.mrf.mxu0
      %v1826 = vadd.f32 %v749, %v1825
      %v1827 = vpop.f32.mrf.mxu0
      %1828 = vmatprep.mubr.f32.mxu0 %v897
      %1829 = vmatmul.mubr.f32.gmra.mxu0 %v309
      %v1830 = vpop.f32.mrf.mxu0
      %v1831 = vadd.f32 %v749, %v1830
      %v1832 = vpop.f32.mrf.mxu0
      %1833 = vmatprep.mubr.f32.mxu0 %v900
      %1834 = vmatmul.mubr.f32.gmra.mxu0 %v311
      %v1835 = vpop.f32.mrf.mxu0
      %v1836 = vadd.f32 %v749, %v1835
      %v1837 = vpop.f32.mrf.mxu0
      %1838 = vmatprep.mubr.f32.mxu0 %v903
      %1839 = vmatmul.mubr.f32.gmra.mxu0 %v313
      %v1840 = vpop.f32.mrf.mxu0
      %v1841 = vadd.f32 %v749, %v1840
      %v1842 = vpop.f32.mrf.mxu0
      %1843 = vmatprep.mubr.f32.mxu0 %v906
      %1844 = vmatmul.mubr.f32.gmra.mxu0 %v315
      %v1845 = vpop.f32.mrf.mxu0
      %v1846 = vadd.f32 %v749, %v1845
      %v1847 = vpop.f32.mrf.mxu0
      %1848 = vmatprep.mubr.f32.mxu0 %v909
      %1849 = vmatmul.mubr.f32.gmra.mxu0 %v317
      %v1850 = vpop.f32.mrf.mxu0
      %v1851 = vadd.f32 %v749, %v1850
      %v1852 = vpop.f32.mrf.mxu0
      %1853 = vmatprep.mubr.f32.mxu0 %v912
      %1854 = vmatmul.mubr.f32.gmra.mxu0 %v319
      %v1855 = vpop.f32.mrf.mxu0
      %v1856 = vadd.f32 %v749, %v1855
      %v1857 = vpop.f32.mrf.mxu0
      %1858 = vmatprep.mubr.f32.mxu0 %v915
      %1859 = vmatmul.mubr.f32.gmra.mxu0 %v321
      %v1860 = vpop.f32.mrf.mxu0
      %v1861 = vadd.f32 %v749, %v1860
      %v1862 = vpop.f32.mrf.mxu0
      %1863 = vmatprep.mubr.f32.mxu0 %v918
      %1864 = vmatmul.mubr.f32.gmra.mxu0 %v323
      %v1865 = vpop.f32.mrf.mxu0
      %v1866 = vadd.f32 %v749, %v1865
      %v1867 = vpop.f32.mrf.mxu0
      %1868 = vmatprep.mubr.f32.mxu0 %v921
      %1869 = vmatmul.mubr.f32.gmra.mxu0 %v325
      %v1870 = vpop.f32.mrf.mxu0
      %v1871 = vadd.f32 %v749, %v1870
      %v1872 = vpop.f32.mrf.mxu0
      %1873 = vmatprep.mubr.f32.mxu0 %v924
      %1874 = vmatmul.mubr.f32.gmra.mxu0 %v327
      %v1875 = vpop.f32.mrf.mxu0
      %v1876 = vadd.f32 %v749, %v1875
      %v1877 = vpop.f32.mrf.mxu0
      %1878 = vmatprep.mubr.f32.mxu0 %v927
      %1879 = vmatmul.mubr.f32.gmra.mxu0 %v329
      %v1880 = vpop.f32.mrf.mxu0
      %v1881 = vadd.f32 %v749, %v1880
      %v1882 = vpop.f32.mrf.mxu0
      %1883 = vmatprep.mubr.f32.mxu0 %v930
      %1884 = vmatmul.mubr.f32.gmra.mxu0 %v331
      %v1885 = vpop.f32.mrf.mxu0
      %v1886 = vadd.f32 %v749, %v1885
      %v1887 = vpop.f32.mrf.mxu0
      %1888 = vmatprep.mubr.f32.mxu0 %v933
      %1889 = vmatmul.mubr.f32.gmra.mxu0 %v333
      %v1890 = vpop.f32.mrf.mxu0
      %v1891 = vadd.f32 %v749, %v1890
      %v1892 = vpop.f32.mrf.mxu0
      %1893 = vmatprep.mubr.f32.mxu0 %v936
      %1894 = vmatmul.mubr.f32.gmra.mxu0 %v335
      %v1895 = vpop.f32.mrf.mxu0
      %v1896 = vadd.f32 %v749, %v1895
      %v1897 = vpop.f32.mrf.mxu0
      %1898 = vmatprep.mubr.f32.mxu0 %v939
      %1899 = vmatmul.mubr.f32.gmra.mxu0 %v337
      %v1900 = vpop.f32.mrf.mxu0
      %v1901 = vadd.f32 %v749, %v1900
      %v1902 = vpop.f32.mrf.mxu0
      %1903 = vmatprep.mubr.f32.mxu0 %v942
      %1904 = vmatmul.mubr.f32.gmra.mxu0 %v339
      %v1905 = vpop.f32.mrf.mxu0
      %v1906 = vadd.f32 %v749, %v1905
      %v1907 = vpop.f32.mrf.mxu0
      %1908 = vmatprep.mubr.f32.mxu0 %v945
      %1909 = vmatmul.mubr.f32.gmra.mxu0 %v341
      %v1910 = vpop.f32.mrf.mxu0
      %v1911 = vadd.f32 %v749, %v1910
      %v1912 = vpop.f32.mrf.mxu0
      %1913 = vmatprep.mubr.f32.mxu0 %v948
      %1914 = vmatmul.mubr.f32.gmra.mxu0 %v343
      %v1915 = vpop.f32.mrf.mxu0
      %v1916 = vadd.f32 %v749, %v1915
      %v1917 = vpop.f32.mrf.mxu0
      %1918 = vmatprep.mubr.f32.mxu0 %v951
      %1919 = vmatmul.mubr.f32.gmra.mxu0 %v345
      %v1920 = vpop.f32.mrf.mxu0
      %v1921 = vadd.f32 %v749, %v1920
      %v1922 = vpop.f32.mrf.mxu0
      %1923 = vmatprep.mubr.f32.mxu0 %v954
      %1924 = vmatmul.mubr.f32.gmra.mxu0 %v347
      %v1925 = vpop.f32.mrf.mxu0
      %v1926 = vadd.f32 %v749, %v1925
      %v1927 = vpop.f32.mrf.mxu0
      %1928 = vmatprep.mubr.f32.mxu0 %v957
      %1929 = vmatmul.mubr.f32.gmra.mxu0 %v349
      %v1930 = vpop.f32.mrf.mxu0
      %v1931 = vadd.f32 %v749, %v1930
      %v1932 = vpop.f32.mrf.mxu0
      %1933 = vmatprep.mubr.f32.mxu0 %v960
      %1934 = vmatmul.mubr.f32.gmra.mxu0 %v351
      %v1935 = vpop.f32.mrf.mxu0
      %v1936 = vadd.f32 %v749, %v1935
      %v1937 = vpop.f32.mrf.mxu0
      %1938 = vmatprep.mubr.f32.mxu0 %v963
      %1939 = vmatmul.mubr.f32.gmra.mxu0 %v353
      %v1940 = vpop.f32.mrf.mxu0
      %v1941 = vadd.f32 %v749, %v1940
      %v1942 = vpop.f32.mrf.mxu0
      %1943 = vmatprep.mubr.f32.mxu0 %v966
      %1944 = vmatmul.mubr.f32.gmra.mxu0 %v355
      %v1945 = vpop.f32.mrf.mxu0
      %v1946 = vadd.f32 %v749, %v1945
      %v1947 = vpop.f32.mrf.mxu0
      %1948 = vmatprep.mubr.f32.mxu0 %v969
      %1949 = vmatmul.mubr.f32.gmra.mxu0 %v357
      %v1950 = vpop.f32.mrf.mxu0
      %v1951 = vadd.f32 %v749, %v1950
      %v1952 = vpop.f32.mrf.mxu0
      %1953 = vmatprep.mubr.f32.mxu0 %v972
      %1954 = vmatmul.mubr.f32.gmra.mxu0 %v359
      %v1955 = vpop.f32.mrf.mxu0
      %v1956 = vadd.f32 %v749, %v1955
      %v1957 = vpop.f32.mrf.mxu0
      %1958 = vmatprep.mubr.f32.mxu0 %v975
      %1959 = vmatmul.mubr.f32.gmra.mxu0 %v361
      %v1960 = vpop.f32.mrf.mxu0
      %v1961 = vadd.f32 %v749, %v1960
      %v1962 = vpop.f32.mrf.mxu0
      %1963 = vmatprep.mubr.f32.mxu0 %v978
      %1964 = vmatmul.mubr.f32.gmra.mxu0 %v363
      %v1965 = vpop.f32.mrf.mxu0
      %v1966 = vadd.f32 %v749, %v1965
      %v1967 = vpop.f32.mrf.mxu0
      %1968 = vmatprep.mubr.f32.mxu0 %v981
      %1969 = vmatmul.mubr.f32.gmra.mxu0 %v365
      %v1970 = vpop.f32.mrf.mxu0
      %v1971 = vadd.f32 %v749, %v1970
      %v1972 = vpop.f32.mrf.mxu0
      %1973 = vmatprep.mubr.f32.mxu0 %v984
      %1974 = vmatmul.mubr.f32.gmra.mxu0 %v367
      %v1975 = vpop.f32.mrf.mxu0
      %v1976 = vadd.f32 %v749, %v1975
      %v1977 = vpop.f32.mrf.mxu0
      %1978 = vmatprep.mubr.f32.mxu0 %v987
      %1979 = vmatmul.mubr.f32.gmra.mxu0 %v369
      %v1980 = vpop.f32.mrf.mxu0
      %v1981 = vadd.f32 %v749, %v1980
      %v1982 = vpop.f32.mrf.mxu0
      %1983 = vmatprep.mubr.f32.mxu0 %v990
      %1984 = vmatmul.mubr.f32.gmra.mxu0 %v371
      %v1985 = vpop.f32.mrf.mxu0
      %v1986 = vadd.f32 %v749, %v1985
      %v1987 = vpop.f32.mrf.mxu0
      %1988 = vmatprep.mubr.f32.mxu0 %v993
      %1989 = vmatmul.mubr.f32.gmra.mxu0 %v373
      %v1990 = vpop.f32.mrf.mxu0
      %v1991 = vadd.f32 %v749, %v1990
      %v1992 = vpop.f32.mrf.mxu0
      %1993 = vmatprep.mubr.f32.mxu0 %v996
      %1994 = vmatmul.mubr.f32.gmra.mxu0 %v375
      %v1995 = vpop.f32.mrf.mxu0
      %v1996 = vadd.f32 %v749, %v1995
      %v1997 = vpop.f32.mrf.mxu0
      %1998 = vmatprep.mubr.f32.mxu0 %v999
      %1999 = vmatmul.mubr.f32.gmra.mxu0 %v377
      %v2000 = vpop.f32.mrf.mxu0
      %v2001 = vadd.f32 %v749, %v2000
      %v2002 = vpop.f32.mrf.mxu0
      %2003 = vmatprep.mubr.f32.mxu0 %v1002
      %2004 = vmatmul.mubr.f32.gmra.mxu0 %v379
      %v2005 = vpop.f32.mrf.mxu0
      %v2006 = vadd.f32 %v749, %v2005
      %v2007 = vpop.f32.mrf.mxu0
      %2008 = vmatprep.mubr.f32.mxu0 %v1005
      %2009 = vmatmul.mubr.f32.gmra.mxu0 %v381
      %v2010 = vpop.f32.mrf.mxu0
      %v2011 = vadd.f32 %v749, %v2010
      %v2012 = vpop.f32.mrf.mxu0
      %2013 = vmatprep.mubr.f32.mxu0 %v1008
      %2014 = vmatmul.mubr.f32.gmra.mxu0 %v383
      %v2015 = vpop.f32.mrf.mxu0
      %v2016 = vadd.f32 %v749, %v2015
      %v2017 = vpop.f32.mrf.mxu0
      %2018 = vmatprep.mubr.f32.mxu0 %v1011
      %2019 = vmatmul.mubr.f32.gmra.mxu0 %v385
      %v2020 = vpop.f32.mrf.mxu0
      %v2021 = vadd.f32 %v749, %v2020
      %v2022 = vpop.f32.mrf.mxu0
      %2023 = vmatprep.mubr.f32.mxu0 %v1014
      %2024 = vmatmul.mubr.f32.gmra.mxu0 %v387
      %v2025 = vpop.f32.mrf.mxu0
      %v2026 = vadd.f32 %v749, %v2025
      %v2027 = vpop.f32.mrf.mxu0
      %2028 = vmatprep.mubr.f32.mxu0 %v1017
      %2029 = vmatmul.mubr.f32.gmra.mxu0 %v389
      %v2030 = vpop.f32.mrf.mxu0
      %v2031 = vadd.f32 %v749, %v2030
      %v2032 = vpop.f32.mrf.mxu0
      %2033 = vmatprep.mubr.f32.mxu0 %v1020
      %2034 = vmatmul.mubr.f32.gmra.mxu0 %v391
      %v2035 = vpop.f32.mrf.mxu0
      %v2036 = vadd.f32 %v749, %v2035
      %v2037 = vpop.f32.mrf.mxu0
      %2038 = vmatprep.mubr.f32.mxu0 %v1023
      %2039 = vmatmul.mubr.f32.gmra.mxu0 %v393
      %v2040 = vpop.f32.mrf.mxu0
      %v2041 = vadd.f32 %v749, %v2040
      %v2042 = vpop.f32.mrf.mxu0
      %2043 = vmatprep.mubr.f32.mxu0 %v1026
      %2044 = vmatmul.mubr.f32.gmra.mxu0 %v395
      %v2045 = vpop.f32.mrf.mxu0
      %v2046 = vadd.f32 %v749, %v2045
      %v2047 = vpop.f32.mrf.mxu0
      %2048 = vmatprep.mubr.f32.mxu0 %v1029
      %2049 = vmatmul.mubr.f32.gmra.mxu0 %v397
      %v2050 = vpop.f32.mrf.mxu0
      %v2051 = vadd.f32 %v749, %v2050
      %v2052 = vpop.f32.mrf.mxu0
      %2053 = vmatprep.mubr.f32.mxu0 %v1032
      %2054 = vmatmul.mubr.f32.gmra.mxu0 %v399
      %v2055 = vpop.f32.mrf.mxu0
      %v2056 = vadd.f32 %v749, %v2055
      %v2057 = vpop.f32.mrf.mxu0
      %2058 = vmatprep.mubr.f32.mxu0 %v1035
      %2059 = vmatmul.mubr.f32.gmra.mxu0 %v401
      %v2060 = vpop.f32.mrf.mxu0
      %v2061 = vadd.f32 %v749, %v2060
      %v2062 = vpop.f32.mrf.mxu0
      %2063 = vmatprep.mubr.f32.mxu0 %v1038
      %2064 = vmatmul.mubr.f32.gmra.mxu0 %v403
      %v2065 = vpop.f32.mrf.mxu0
      %v2066 = vadd.f32 %v749, %v2065
      %v2067 = vpop.f32.mrf.mxu0
      %2068 = vmatprep.mubr.f32.mxu0 %v1041
      %2069 = vmatmul.mubr.f32.gmra.mxu0 %v405
      %v2070 = vpop.f32.mrf.mxu0
      %v2071 = vadd.f32 %v749, %v2070
      %v2072 = vpop.f32.mrf.mxu0
      %2073 = vmatprep.mubr.f32.mxu0 %v1044
      %2074 = vmatmul.mubr.f32.gmra.mxu0 %v407
      %v2075 = vpop.f32.mrf.mxu0
      %v2076 = vadd.f32 %v749, %v2075
      %v2077 = vpop.f32.mrf.mxu0
      %2078 = vmatprep.mubr.f32.mxu0 %v1047
      %2079 = vmatmul.mubr.f32.gmra.mxu0 %v409
      %v2080 = vpop.f32.mrf.mxu0
      %v2081 = vadd.f32 %v749, %v2080
      %v2082 = vpop.f32.mrf.mxu0
      %2083 = vmatprep.mubr.f32.mxu0 %v1050
      %2084 = vmatmul.mubr.f32.gmra.mxu0 %v411
      %v2085 = vpop.f32.mrf.mxu0
      %v2086 = vadd.f32 %v749, %v2085
      %v2087 = vpop.f32.mrf.mxu0
      %2088 = vmatprep.mubr.f32.mxu0 %v1053
      %2089 = vmatmul.mubr.f32.gmra.mxu0 %v413
      %v2090 = vpop.f32.mrf.mxu0
      %v2091 = vadd.f32 %v749, %v2090
      %v2092 = vpop.f32.mrf.mxu0
      %2093 = vmatprep.mubr.f32.mxu0 %v1056
      %2094 = vmatmul.mubr.f32.gmra.mxu0 %v415
      %v2095 = vpop.f32.mrf.mxu0
      %v2096 = vadd.f32 %v749, %v2095
      %v2097 = vpop.f32.mrf.mxu0
      %2098 = vmatprep.mubr.f32.mxu0 %v1059
      %2099 = vmatmul.mubr.f32.gmra.mxu0 %v417
      %v2100 = vpop.f32.mrf.mxu0
      %v2101 = vadd.f32 %v749, %v2100
      %v2102 = vpop.f32.mrf.mxu0
      %2103 = vmatprep.mubr.f32.mxu0 %v1062
      %2104 = vmatmul.mubr.f32.gmra.mxu0 %v419
      %v2105 = vpop.f32.mrf.mxu0
      %v2106 = vadd.f32 %v749, %v2105
      %v2107 = vpop.f32.mrf.mxu0
      %2108 = vmatprep.mubr.f32.mxu0 %v1065
      %2109 = vmatmul.mubr.f32.gmra.mxu0 %v421
      %v2110 = vpop.f32.mrf.mxu0
      %v2111 = vadd.f32 %v749, %v2110
      %v2112 = vpop.f32.mrf.mxu0
      %2113 = vmatprep.mubr.f32.mxu0 %v1068
      %2114 = vmatmul.mubr.f32.gmra.mxu0 %v423
      %v2115 = vpop.f32.mrf.mxu0
      %v2116 = vadd.f32 %v749, %v2115
      %v2117 = vpop.f32.mrf.mxu0
      %2118 = vmatprep.mubr.f32.mxu0 %v1071
      %2119 = vmatmul.mubr.f32.gmra.mxu0 %v425
      %v2120 = vpop.f32.mrf.mxu0
      %v2121 = vadd.f32 %v749, %v2120
      %v2122 = vpop.f32.mrf.mxu0
      %2123 = vmatprep.mubr.f32.mxu0 %v1074
      %2124 = vmatmul.mubr.f32.gmra.mxu0 %v427
      %v2125 = vpop.f32.mrf.mxu0
      %v2126 = vadd.f32 %v749, %v2125
      %v2127 = vpop.f32.mrf.mxu0
      %2128 = vmatprep.mubr.f32.mxu0 %v1077
      %2129 = vmatmul.mubr.f32.gmra.mxu0 %v429
      %v2130 = vpop.f32.mrf.mxu0
      %v2131 = vadd.f32 %v749, %v2130
      %v2132 = vpop.f32.mrf.mxu0
      %2133 = vmatprep.mubr.f32.mxu0 %v1080
      %2134 = vmatmul.mubr.f32.gmra.mxu0 %v431
      %v2135 = vpop.f32.mrf.mxu0
      %v2136 = vadd.f32 %v749, %v2135
      %v2137 = vpop.f32.mrf.mxu0
      %2138 = vmatprep.mubr.f32.mxu0 %v1083
      %2139 = vmatmul.mubr.f32.gmra.mxu0 %v433
      %v2140 = vpop.f32.mrf.mxu0
      %v2141 = vadd.f32 %v749, %v2140
      %v2142 = vpop.f32.mrf.mxu0
      %2143 = vmatprep.mubr.f32.mxu0 %v1086
      %2144 = vmatmul.mubr.f32.gmra.mxu0 %v435
      %v2145 = vpop.f32.mrf.mxu0
      %v2146 = vadd.f32 %v749, %v2145
      %v2147 = vpop.f32.mrf.mxu0
      %2148 = vmatprep.mubr.f32.mxu0 %v1089
      %2149 = vmatmul.mubr.f32.gmra.mxu0 %v437
      %v2150 = vpop.f32.mrf.mxu0
      %v2151 = vadd.f32 %v749, %v2150
      %v2152 = vpop.f32.mrf.mxu0
      %2153 = vmatprep.mubr.f32.mxu0 %v1092
      %2154 = vmatmul.mubr.f32.gmra.mxu0 %v439
      %v2155 = vpop.f32.mrf.mxu0
      %v2156 = vadd.f32 %v749, %v2155
      %v2157 = vpop.f32.mrf.mxu0
      %2158 = vmatprep.mubr.f32.mxu0 %v1095
      %2159 = vmatmul.mubr.f32.gmra.mxu0 %v441
      %v2160 = vpop.f32.mrf.mxu0
      %v2161 = vadd.f32 %v749, %v2160
      %v2162 = vpop.f32.mrf.mxu0
      %2163 = vmatprep.mubr.f32.mxu0 %v1098
      %2164 = vmatmul.mubr.f32.gmra.mxu0 %v443
      %v2165 = vpop.f32.mrf.mxu0
      %v2166 = vadd.f32 %v749, %v2165
      %v2167 = vpop.f32.mrf.mxu0
      %2168 = vmatprep.mubr.f32.mxu0 %v1101
      %2169 = vmatmul.mubr.f32.gmra.mxu0 %v445
      %v2170 = vpop.f32.mrf.mxu0
      %v2171 = vadd.f32 %v749, %v2170
      %v2172 = vpop.f32.mrf.mxu0
      %2173 = vmatprep.mubr.f32.mxu0 %v1104
      %2174 = vmatmul.mubr.f32.gmra.mxu0 %v447
      %v2175 = vpop.f32.mrf.mxu0
      %v2176 = vadd.f32 %v749, %v2175
      %v2177 = vpop.f32.mrf.mxu0
      %2178 = vmatprep.mubr.f32.mxu0 %v1107
      %2179 = vmatmul.mubr.f32.gmra.mxu0 %v449
      %v2180 = vpop.f32.mrf.mxu0
      %v2181 = vadd.f32 %v749, %v2180
      %v2182 = vpop.f32.mrf.mxu0
      %2183 = vmatprep.mubr.f32.mxu0 %v1110
      %2184 = vmatmul.mubr.f32.gmra.mxu0 %v451
      %v2185 = vpop.f32.mrf.mxu0
      %v2186 = vadd.f32 %v749, %v2185
      %v2187 = vpop.f32.mrf.mxu0
      %2188 = vmatprep.mubr.f32.mxu0 %v1113
      %2189 = vmatmul.mubr.f32.gmra.mxu0 %v453
      %v2190 = vpop.f32.mrf.mxu0
      %v2191 = vadd.f32 %v749, %v2190
      %v2192 = vpop.f32.mrf.mxu0
      %2193 = vmatprep.mubr.f32.mxu0 %v1116
      %2194 = vmatmul.mubr.f32.gmra.mxu0 %v455
      %v2195 = vpop.f32.mrf.mxu0
      %v2196 = vadd.f32 %v749, %v2195
      %v2197 = vpop.f32.mrf.mxu0
      %2198 = vmatprep.mubr.f32.mxu0 %v1119
      %2199 = vmatmul.mubr.f32.gmra.mxu0 %v457
      %v2200 = vpop.f32.mrf.mxu0
      %v2201 = vadd.f32 %v749, %v2200
      %v2202 = vpop.f32.mrf.mxu0
      %2203 = vmatprep.mubr.f32.mxu0 %v1122
      %2204 = vmatmul.mubr.f32.gmra.mxu0 %v459
      %v2205 = vpop.f32.mrf.mxu0
      %v2206 = vadd.f32 %v749, %v2205
      %v2207 = vpop.f32.mrf.mxu0
      %2208 = vmatprep.mubr.f32.mxu0 %v1125
      %2209 = vmatmul.mubr.f32.gmra.mxu0 %v461
      %v2210 = vpop.f32.mrf.mxu0
      %v2211 = vadd.f32 %v749, %v2210
      %v2212 = vpop.f32.mrf.mxu0
      %2213 = vmatprep.mubr.f32.mxu0 %v1128
      %2214 = vmatmul.mubr.f32.gmra.mxu0 %v463
      %v2215 = vpop.f32.mrf.mxu0
      %v2216 = vadd.f32 %v749, %v2215
      %v2217 = vpop.f32.mrf.mxu0
      %2218 = vmatprep.mubr.f32.mxu0 %v1131
      %2219 = vmatmul.mubr.f32.gmra.mxu0 %v465
      %v2220 = vpop.f32.mrf.mxu0
      %v2221 = vadd.f32 %v749, %v2220
      %v2222 = vpop.f32.mrf.mxu0
      %2223 = vmatprep.mubr.f32.mxu0 %v1134
      %2224 = vmatmul.mubr.f32.gmra.mxu0 %v467
      %v2225 = vpop.f32.mrf.mxu0
      %v2226 = vadd.f32 %v749, %v2225
      %v2227 = vpop.f32.mrf.mxu0
      %2228 = vmatprep.mubr.f32.mxu0 %v1137
      %2229 = vmatmul.mubr.f32.gmra.mxu0 %v469
      %v2230 = vpop.f32.mrf.mxu0
      %v2231 = vadd.f32 %v749, %v2230
      %v2232 = vpop.f32.mrf.mxu0
      %2233 = vmatprep.mubr.f32.mxu0 %v1140
      %2234 = vmatmul.mubr.f32.gmra.mxu0 %v471
      %v2235 = vpop.f32.mrf.mxu0
      %v2236 = vadd.f32 %v749, %v2235
      %v2237 = vpop.f32.mrf.mxu0
      %2238 = vmatprep.mubr.f32.mxu0 %v1143
      %2239 = vmatmul.mubr.f32.gmra.mxu0 %v473
      %v2240 = vpop.f32.mrf.mxu0
      %v2241 = vadd.f32 %v749, %v2240
      %v2242 = vpop.f32.mrf.mxu0
      %2243 = vmatprep.mubr.f32.mxu0 %v1146
      %2244 = vmatmul.mubr.f32.gmra.mxu0 %v475
      %v2245 = vpop.f32.mrf.mxu0
      %v2246 = vadd.f32 %v749, %v2245
      %v2247 = vpop.f32.mrf.mxu0
      %2248 = vmatprep.mubr.f32.mxu0 %v1149
      %2249 = vmatmul.mubr.f32.gmra.mxu0 %v477
      %v2250 = vpop.f32.mrf.mxu0
      %v2251 = vadd.f32 %v749, %v2250
      %v2252 = vpop.f32.mrf.mxu0
      %2253 = vmatprep.mubr.f32.mxu0 %v1152
      %2254 = vmatmul.mubr.f32.gmra.mxu0 %v479
      %v2255 = vpop.f32.mrf.mxu0
      %v2256 = vadd.f32 %v749, %v2255
      %v2257 = vpop.f32.mrf.mxu0
      %2258 = vmatprep.mubr.f32.mxu0 %v1155
      %2259 = vmatmul.mubr.f32.gmra.mxu0 %v481
      %v2260 = vpop.f32.mrf.mxu0
      %v2261 = vadd.f32 %v749, %v2260
      %v2262 = vpop.f32.mrf.mxu0
      %2263 = vmatprep.mubr.f32.mxu0 %v1158
      %2264 = vmatmul.mubr.f32.gmra.mxu0 %v483
      %v2265 = vpop.f32.mrf.mxu0
      %v2266 = vadd.f32 %v749, %v2265
      %v2267 = vpop.f32.mrf.mxu0
      %2268 = vmatprep.mubr.f32.mxu0 %v1161
      %2269 = vmatmul.mubr.f32.gmra.mxu0 %v485
      %v2270 = vpop.f32.mrf.mxu0
      %v2271 = vadd.f32 %v749, %v2270
      %v2272 = vpop.f32.mrf.mxu0
      %2273 = vmatprep.mubr.f32.mxu0 %v1164
      %2274 = vmatmul.mubr.f32.gmra.mxu0 %v487
      %v2275 = vpop.f32.mrf.mxu0
      %v2276 = vadd.f32 %v749, %v2275
      %v2277 = vpop.f32.mrf.mxu0
      %2278 = vmatprep.mubr.f32.mxu0 %v1167
      %2279 = vmatmul.mubr.f32.gmra.mxu0 %v489
      %v2280 = vpop.f32.mrf.mxu0
      %v2281 = vadd.f32 %v749, %v2280
      %v2282 = vpop.f32.mrf.mxu0
      %2283 = vmatprep.mubr.f32.mxu0 %v1170
      %2284 = vmatmul.mubr.f32.gmra.mxu0 %v491
      %v2285 = vpop.f32.mrf.mxu0
      %v2286 = vadd.f32 %v749, %v2285
      %v2287 = vpop.f32.mrf.mxu0
      %2288 = vmatprep.mubr.f32.mxu0 %v1173
      %2289 = vmatmul.mubr.f32.gmra.mxu0 %v493
      %v2290 = vpop.f32.mrf.mxu0
      %v2291 = vadd.f32 %v749, %v2290
      %v2292 = vpop.f32.mrf.mxu0
      %2293 = vmatprep.mubr.f32.mxu0 %v1176
      %2294 = vmatmul.mubr.f32.gmra.mxu0 %v495
      %v2295 = vpop.f32.mrf.mxu0
      %v2296 = vadd.f32 %v749, %v2295
      %v2297 = vpop.f32.mrf.mxu0
      %2298 = vmatprep.mubr.f32.mxu0 %v1179
      %2299 = vmatmul.mubr.f32.gmra.mxu0 %v497
      %v2300 = vpop.f32.mrf.mxu0
      %v2301 = vadd.f32 %v749, %v2300
      %v2302 = vpop.f32.mrf.mxu0
      %2303 = vmatprep.mubr.f32.mxu0 %v1182
      %2304 = vmatmul.mubr.f32.gmra.mxu0 %v499
      %v2305 = vpop.f32.mrf.mxu0
      %v2306 = vadd.f32 %v749, %v2305
      %v2307 = vpop.f32.mrf.mxu0
      %2308 = vmatprep.mubr.f32.mxu0 %v1185
      %2309 = vmatmul.mubr.f32.gmra.mxu0 %v501
      %v2310 = vpop.f32.mrf.mxu0
      %v2311 = vadd.f32 %v749, %v2310
      %v2312 = vpop.f32.mrf.mxu0
      %2313 = vmatprep.mubr.f32.mxu0 %v1188
      %2314 = vmatmul.mubr.f32.gmra.mxu0 %v503
      %v2315 = vpop.f32.mrf.mxu0
      %v2316 = vadd.f32 %v749, %v2315
      %v2317 = vpop.f32.mrf.mxu0
      %2318 = vmatprep.mubr.f32.mxu0 %v1191
      %2319 = vmatmul.mubr.f32.gmra.mxu0 %v505
      %v2320 = vpop.f32.mrf.mxu0
      %v2321 = vadd.f32 %v749, %v2320
      %v2322 = vpop.f32.mrf.mxu0
      %2323 = vmatprep.mubr.f32.mxu0 %v1194
      %2324 = vmatmul.mubr.f32.gmra.mxu0 %v507
      %v2325 = vpop.f32.mrf.mxu0
      %v2326 = vadd.f32 %v749, %v2325
      %v2327 = vpop.f32.mrf.mxu0
      %2328 = vmatprep.mubr.f32.mxu0 %v1197
      %2329 = vmatmul.mubr.f32.gmra.mxu0 %v509
      %v2330 = vpop.f32.mrf.mxu0
      %v2331 = vadd.f32 %v749, %v2330
      %v2332 = vpop.f32.mrf.mxu0
      %2333 = vmatprep.mubr.f32.mxu0 %v1200
      %2334 = vmatmul.mubr.f32.gmra.mxu0 %v511
      %v2335 = vpop.f32.mrf.mxu0
      %v2336 = vadd.f32 %v749, %v2335
      %v2337 = vpop.f32.mrf.mxu0
      %2338 = vmatprep.mubr.f32.mxu0 %v1203
      %2339 = vmatmul.mubr.f32.gmra.mxu0 %v513
      %v2340 = vpop.f32.mrf.mxu0
      %v2341 = vadd.f32 %v749, %v2340
      %v2342 = vpop.f32.mrf.mxu0
      %2343 = vmatprep.mubr.f32.mxu0 %v1206
      %2344 = vmatmul.mubr.f32.gmra.mxu0 %v515
      %v2345 = vpop.f32.mrf.mxu0
      %v2346 = vadd.f32 %v749, %v2345
      %v2347 = vpop.f32.mrf.mxu0
      %2348 = vmatprep.mubr.f32.mxu0 %v1209
      %2349 = vmatmul.mubr.f32.gmra.mxu0 %v517
      %v2350 = vpop.f32.mrf.mxu0
      %v2351 = vadd.f32 %v749, %v2350
      %v2352 = vpop.f32.mrf.mxu0
      %2353 = vmatprep.mubr.f32.mxu0 %v1212
      %2354 = vmatmul.mubr.f32.gmra.mxu0 %v519
      %v2355 = vpop.f32.mrf.mxu0
      %v2356 = vadd.f32 %v749, %v2355
      %v2357 = vpop.f32.mrf.mxu0
      %2358 = vmatprep.mubr.f32.mxu0 %v1215
      %2359 = vmatmul.mubr.f32.gmra.mxu0 %v521
      %v2360 = vpop.f32.mrf.mxu0
      %v2361 = vadd.f32 %v749, %v2360
      %v2362 = vpop.f32.mrf.mxu0
      %2363 = vmatprep.mubr.f32.mxu0 %v1218
      %2364 = vmatmul.mubr.f32.gmra.mxu0 %v523
      %v2365 = vpop.f32.mrf.mxu0
      %v2366 = vadd.f32 %v749, %v2365
      %v2367 = vpop.f32.mrf.mxu0
      %2368 = vmatprep.mubr.f32.mxu0 %v1221
      %2369 = vmatmul.mubr.f32.gmra.mxu0 %v525
      %v2370 = vpop.f32.mrf.mxu0
      %v2371 = vadd.f32 %v749, %v2370
      %v2372 = vpop.f32.mrf.mxu0
      %2373 = vmatprep.mubr.f32.mxu0 %v1224
      %2374 = vmatmul.mubr.f32.gmra.mxu0 %v527
      %v2375 = vpop.f32.mrf.mxu0
      %v2376 = vadd.f32 %v749, %v2375
      %v2377 = vpop.f32.mrf.mxu0
      %2378 = vmatprep.mubr.f32.mxu0 %v1227
      %2379 = vmatmul.mubr.f32.gmra.mxu0 %v529
      %v2380 = vpop.f32.mrf.mxu0
      %v2381 = vadd.f32 %v749, %v2380
      %v2382 = vpop.f32.mrf.mxu0
      %2383 = vmatprep.mubr.f32.mxu0 %v1230
      %2384 = vmatmul.mubr.f32.gmra.mxu0 %v531
      %v2385 = vpop.f32.mrf.mxu0
      %v2386 = vadd.f32 %v749, %v2385
      %v2387 = vpop.f32.mrf.mxu0
      %2388 = vmatprep.mubr.f32.mxu0 %v1233
      %2389 = vmatmul.mubr.f32.gmra.mxu0 %v533
      %v2390 = vpop.f32.mrf.mxu0
      %v2391 = vadd.f32 %v749, %v2390
      %v2392 = vpop.f32.mrf.mxu0
      %2393 = vmatprep.mubr.f32.mxu0 %v1236
      %2394 = vmatmul.mubr.f32.gmra.mxu0 %v535
      %v2395 = vpop.f32.mrf.mxu0
      %v2396 = vadd.f32 %v749, %v2395
      %v2397 = vpop.f32.mrf.mxu0
      %2398 = vmatprep.mubr.f32.mxu0 %v1239
      %2399 = vmatmul.mubr.f32.gmra.mxu0 %v537
      %v2400 = vpop.f32.mrf.mxu0
      %v2401 = vadd.f32 %v749, %v2400
      %v2402 = vpop.f32.mrf.mxu0
      %2403 = vmatprep.mubr.f32.mxu0 %v1242
      %2404 = vmatmul.mubr.f32.gmra.mxu0 %v539
      %v2405 = vpop.f32.mrf.mxu0
      %v2406 = vadd.f32 %v749, %v2405
      %v2407 = vpop.f32.mrf.mxu0
      %2408 = vmatprep.mubr.f32.mxu0 %v1245
      %2409 = vmatmul.mubr.f32.gmra.mxu0 %v541
      %v2410 = vpop.f32.mrf.mxu0
      %v2411 = vadd.f32 %v749, %v2410
      %v2412 = vpop.f32.mrf.mxu0
      %2413 = vmatprep.mubr.f32.mxu0 %v1248
      %2414 = vmatmul.mubr.f32.gmra.mxu0 %v543
      %v2415 = vpop.f32.mrf.mxu0
      %v2416 = vadd.f32 %v749, %v2415
      %v2417 = vpop.f32.mrf.mxu0
      %2418 = vmatprep.mubr.f32.mxu0 %v1251
      %2419 = vmatmul.mubr.f32.gmra.mxu0 %v545
      %v2420 = vpop.f32.mrf.mxu0
      %v2421 = vadd.f32 %v749, %v2420
      %v2422 = vpop.f32.mrf.mxu0
      %2423 = vmatprep.mubr.f32.mxu0 %v1254
      %2424 = vmatmul.mubr.f32.gmra.mxu0 %v547
      %v2425 = vpop.f32.mrf.mxu0
      %v2426 = vadd.f32 %v749, %v2425
      %v2427 = vpop.f32.mrf.mxu0
      %2428 = vmatprep.mubr.f32.mxu0 %v1257
      %2429 = vmatmul.mubr.f32.gmra.mxu0 %v549
      %v2430 = vpop.f32.mrf.mxu0
      %v2431 = vadd.f32 %v749, %v2430
      %v2432 = vpop.f32.mrf.mxu0
      %2433 = vmatprep.mubr.f32.mxu0 %v1260
      %2434 = vmatmul.mubr.f32.gmra.mxu0 %v551
      %v2435 = vpop.f32.mrf.mxu0
      %v2436 = vadd.f32 %v749, %v2435
      %v2437 = vpop.f32.mrf.mxu0
      %2438 = vmatprep.mubr.f32.mxu0 %v1263
      %2439 = vmatmul.mubr.f32.gmra.mxu0 %v553
      %v2440 = vpop.f32.mrf.mxu0
      %v2441 = vadd.f32 %v749, %v2440
      %v2442 = vpop.f32.mrf.mxu0
      %2443 = vmatprep.mubr.f32.mxu0 %v1266
      %2444 = vmatmul.mubr.f32.gmra.mxu0 %v555
      %v2445 = vpop.f32.mrf.mxu0
      %v2446 = vadd.f32 %v749, %v2445
      %v2447 = vpop.f32.mrf.mxu0
      %2448 = vmatprep.mubr.f32.mxu0 %v1269
      %2449 = vmatmul.mubr.f32.gmra.mxu0 %v557
      %v2450 = vpop.f32.mrf.mxu0
      %v2451 = vadd.f32 %v749, %v2450
      %v2452 = vpop.f32.mrf.mxu0
      %2453 = vmatprep.mubr.f32.mxu0 %v1272
      %2454 = vmatmul.mubr.f32.gmra.mxu0 %v559
      %v2455 = vpop.f32.mrf.mxu0
      %v2456 = vadd.f32 %v749, %v2455
      %v2457 = vpop.f32.mrf.mxu0
      %2458 = vmatprep.mubr.f32.mxu0 %v1275
      %2459 = vmatmul.mubr.f32.gmra.mxu0 %v561
      %v2460 = vpop.f32.mrf.mxu0
      %v2461 = vadd.f32 %v749, %v2460
      %v2462 = vpop.f32.mrf.mxu0
      %2463 = vmatprep.mubr.f32.mxu0 %v1278
      %2464 = vmatmul.mubr.f32.gmra.mxu0 %v563
      %v2465 = vpop.f32.mrf.mxu0
      %v2466 = vadd.f32 %v749, %v2465
      %v2467 = vpop.f32.mrf.mxu0
      %2468 = vmatprep.mubr.f32.mxu0 %v1281
      %2469 = vmatmul.mubr.f32.gmra.mxu0 %v565
      %v2470 = vpop.f32.mrf.mxu0
      %v2471 = vadd.f32 %v749, %v2470
      %v2472 = vpop.f32.mrf.mxu0
      %2473 = vmatprep.mubr.f32.mxu0 %v1284
      %2474 = vmatmul.mubr.f32.gmra.mxu0 %v567
      %v2475 = vpop.f32.mrf.mxu0
      %v2476 = vadd.f32 %v749, %v2475
      %v2477 = vpop.f32.mrf.mxu0
      %2478 = vmatprep.mubr.f32.mxu0 %v1287
      %2479 = vmatmul.mubr.f32.gmra.mxu0 %v569
      %v2480 = vpop.f32.mrf.mxu0
      %v2481 = vadd.f32 %v749, %v2480
      %v2482 = vpop.f32.mrf.mxu0
      %2483 = vmatprep.mubr.f32.mxu0 %v1290
      %2484 = vmatmul.mubr.f32.gmra.mxu0 %v571
      %v2485 = vpop.f32.mrf.mxu0
      %v2486 = vadd.f32 %v749, %v2485
      %v2487 = vpop.f32.mrf.mxu0
      %2488 = vmatprep.mubr.f32.mxu0 %v1293
      %2489 = vmatmul.mubr.f32.gmra.mxu0 %v573
      %v2490 = vpop.f32.mrf.mxu0
      %v2491 = vadd.f32 %v749, %v2490
      %v2492 = vpop.f32.mrf.mxu0
      %2493 = vmatprep.mubr.f32.mxu0 %v1296
      %2494 = vmatmul.mubr.f32.gmra.mxu0 %v575
      %v2495 = vpop.f32.mrf.mxu0
      %v2496 = vadd.f32 %v749, %v2495
      %v2497 = vpop.f32.mrf.mxu0
      %2498 = vmatprep.mubr.f32.mxu0 %v1299
      %2499 = vmatmul.mubr.f32.gmra.mxu0 %v577
      %v2500 = vpop.f32.mrf.mxu0
      %v2501 = vadd.f32 %v749, %v2500
      %v2502 = vpop.f32.mrf.mxu0
      %2503 = vmatprep.mubr.f32.mxu0 %v1302
      %2504 = vmatmul.mubr.f32.gmra.mxu0 %v579
      %v2505 = vpop.f32.mrf.mxu0
      %v2506 = vadd.f32 %v749, %v2505
      %v2507 = vpop.f32.mrf.mxu0
      %2508 = vmatprep.mubr.f32.mxu0 %v1305
      %2509 = vmatmul.mubr.f32.gmra.mxu0 %v581
      %v2510 = vpop.f32.mrf.mxu0
      %v2511 = vadd.f32 %v749, %v2510
      %v2512 = vpop.f32.mrf.mxu0
      %2513 = vmatprep.mubr.f32.mxu0 %v1308
      %2514 = vmatmul.mubr.f32.gmra.mxu0 %v583
      %v2515 = vpop.f32.mrf.mxu0
      %v2516 = vadd.f32 %v749, %v2515
      %v2517 = vpop.f32.mrf.mxu0
      %2518 = vmatprep.mubr.f32.mxu0 %v1311
      %2519 = vmatmul.mubr.f32.gmra.mxu0 %v585
      %v2520 = vpop.f32.mrf.mxu0
      %v2521 = vadd.f32 %v749, %v2520
      %v2522 = vpop.f32.mrf.mxu0
      %2523 = vmatprep.mubr.f32.mxu0 %v1314
      %2524 = vmatmul.mubr.f32.gmra.mxu0 %v587
      %v2525 = vpop.f32.mrf.mxu0
      %v2526 = vadd.f32 %v749, %v2525
      %v2527 = vpop.f32.mrf.mxu0
      %2528 = vmatprep.mubr.f32.mxu0 %v1317
      %2529 = vmatmul.mubr.f32.gmra.mxu0 %v589
      %v2530 = vpop.f32.mrf.mxu0
      %v2531 = vadd.f32 %v749, %v2530
      %v2532 = vpop.f32.mrf.mxu0
      %2533 = vmatprep.mubr.f32.mxu0 %v1320
      %2534 = vmatmul.mubr.f32.gmra.mxu0 %v591
      %v2535 = vpop.f32.mrf.mxu0
      %v2536 = vadd.f32 %v749, %v2535
      %v2537 = vpop.f32.mrf.mxu0
      %2538 = vmatprep.mubr.f32.mxu0 %v1323
      %2539 = vmatmul.mubr.f32.gmra.mxu0 %v593
      %v2540 = vpop.f32.mrf.mxu0
      %v2541 = vadd.f32 %v749, %v2540
      %v2542 = vpop.f32.mrf.mxu0
      %2543 = vmatprep.mubr.f32.mxu0 %v1326
      %2544 = vmatmul.mubr.f32.gmra.mxu0 %v595
      %v2545 = vpop.f32.mrf.mxu0
      %v2546 = vadd.f32 %v749, %v2545
      %v2547 = vpop.f32.mrf.mxu0
      %2548 = vmatprep.mubr.f32.mxu0 %v1329
      %2549 = vmatmul.mubr.f32.gmra.mxu0 %v597
      %v2550 = vpop.f32.mrf.mxu0
      %v2551 = vadd.f32 %v749, %v2550
      %v2552 = vpop.f32.mrf.mxu0
      %2553 = vmatprep.mubr.f32.mxu0 %v1332
      %2554 = vmatmul.mubr.f32.gmra.mxu0 %v599
      %v2555 = vpop.f32.mrf.mxu0
      %v2556 = vadd.f32 %v749, %v2555
      %v2557 = vpop.f32.mrf.mxu0
      %2558 = vmatprep.mubr.f32.mxu0 %v1335
      %2559 = vmatmul.mubr.f32.gmra.mxu0 %v601
      %v2560 = vpop.f32.mrf.mxu0
      %v2561 = vadd.f32 %v749, %v2560
      %v2562 = vpop.f32.mrf.mxu0
      %2563 = vmatprep.mubr.f32.mxu0 %v1338
      %2564 = vmatmul.mubr.f32.gmra.mxu0 %v603
      %v2565 = vpop.f32.mrf.mxu0
      %v2566 = vadd.f32 %v749, %v2565
      %v2567 = vpop.f32.mrf.mxu0
      %2568 = vmatprep.mubr.f32.mxu0 %v1341
      %2569 = vmatmul.mubr.f32.gmra.mxu0 %v605
      %v2570 = vpop.f32.mrf.mxu0
      %v2571 = vadd.f32 %v749, %v2570
      %v2572 = vpop.f32.mrf.mxu0
      %2573 = vmatprep.mubr.f32.mxu0 %v1344
      %2574 = vmatmul.mubr.f32.gmra.mxu0 %v607
      %v2575 = vpop.f32.mrf.mxu0
      %v2576 = vadd.f32 %v749, %v2575
      %v2577 = vpop.f32.mrf.mxu0
      %2578 = vmatprep.mubr.f32.mxu0 %v1347
      %2579 = vmatmul.mubr.f32.gmra.mxu0 %v609
      %v2580 = vpop.f32.mrf.mxu0
      %v2581 = vadd.f32 %v749, %v2580
      %v2582 = vpop.f32.mrf.mxu0
      %2583 = vmatprep.mubr.f32.mxu0 %v1350
      %2584 = vmatmul.mubr.f32.gmra.mxu0 %v611
      %v2585 = vpop.f32.mrf.mxu0
      %v2586 = vadd.f32 %v749, %v2585
      %v2587 = vpop.f32.mrf.mxu0
      %2588 = vmatprep.mubr.f32.mxu0 %v1353
      %2589 = vmatmul.mubr.f32.gmra.mxu0 %v613
      %v2590 = vpop.f32.mrf.mxu0
      %v2591 = vadd.f32 %v749, %v2590
      %v2592 = vpop.f32.mrf.mxu0
      %2593 = vmatprep.mubr.f32.mxu0 %v1356
      %2594 = vmatmul.mubr.f32.gmra.mxu0 %v615
      %v2595 = vpop.f32.mrf.mxu0
      %v2596 = vadd.f32 %v749, %v2595
      %v2597 = vpop.f32.mrf.mxu0
      %2598 = vmatprep.mubr.f32.mxu0 %v1359
      %2599 = vmatmul.mubr.f32.gmra.mxu0 %v617
      %v2600 = vpop.f32.mrf.mxu0
      %v2601 = vadd.f32 %v749, %v2600
      %v2602 = vpop.f32.mrf.mxu0
      %2603 = vmatprep.mubr.f32.mxu0 %v1362
      %2604 = vmatmul.mubr.f32.gmra.mxu0 %v619
      %v2605 = vpop.f32.mrf.mxu0
      %v2606 = vadd.f32 %v749, %v2605
      %v2607 = vpop.f32.mrf.mxu0
      %2608 = vmatprep.mubr.f32.mxu0 %v1365
      %2609 = vmatmul.mubr.f32.gmra.mxu0 %v621
      %v2610 = vpop.f32.mrf.mxu0
      %v2611 = vadd.f32 %v749, %v2610
      %v2612 = vpop.f32.mrf.mxu0
      %2613 = vmatprep.mubr.f32.mxu0 %v1368
      %2614 = vmatmul.mubr.f32.gmra.mxu0 %v623
      %v2615 = vpop.f32.mrf.mxu0
      %v2616 = vadd.f32 %v749, %v2615
      %v2617 = vpop.f32.mrf.mxu0
      %2618 = vmatprep.mubr.f32.mxu0 %v1371
      %2619 = vmatmul.mubr.f32.gmra.mxu0 %v625
      %v2620 = vpop.f32.mrf.mxu0
      %v2621 = vadd.f32 %v749, %v2620
      %v2622 = vpop.f32.mrf.mxu0
      %2623 = vmatprep.mubr.f32.mxu0 %v1374
      %2624 = vmatmul.mubr.f32.gmra.mxu0 %v627
      %v2625 = vpop.f32.mrf.mxu0
      %v2626 = vadd.f32 %v749, %v2625
      %v2627 = vpop.f32.mrf.mxu0
      %2628 = vmatprep.mubr.f32.mxu0 %v1377
      %2629 = vmatmul.mubr.f32.gmra.mxu0 %v629
      %v2630 = vpop.f32.mrf.mxu0
      %v2631 = vadd.f32 %v749, %v2630
      %v2632 = vpop.f32.mrf.mxu0
      %2633 = vmatprep.mubr.f32.mxu0 %v1380
      %2634 = vmatmul.mubr.f32.gmra.mxu0 %v631
      %v2635 = vpop.f32.mrf.mxu0
      %v2636 = vadd.f32 %v749, %v2635
      %v2637 = vpop.f32.mrf.mxu0
      %2638 = vmatprep.mubr.f32.mxu0 %v1383
      %2639 = vmatmul.mubr.f32.gmra.mxu0 %v633
      %v2640 = vpop.f32.mrf.mxu0
      %v2641 = vadd.f32 %v749, %v2640
      %v2642 = vpop.f32.mrf.mxu0
      %2643 = vmatprep.mubr.f32.mxu0 %v1386
      %2644 = vmatmul.mubr.f32.gmra.mxu0 %v635
      %v2645 = vpop.f32.mrf.mxu0
      %v2646 = vadd.f32 %v749, %v2645
      %v2647 = vpop.f32.mrf.mxu0
      %2648 = vmatprep.mubr.f32.mxu0 %v1389
      %2649 = vmatmul.mubr.f32.gmra.mxu0 %v637
      %v2650 = vpop.f32.mrf.mxu0
      %v2651 = vadd.f32 %v749, %v2650
      %v2652 = vpop.f32.mrf.mxu0
      %2653 = vmatprep.mubr.f32.mxu0 %v1392
      %2654 = vmatmul.mubr.f32.gmra.mxu0 %v639
      %v2655 = vpop.f32.mrf.mxu0
      %v2656 = vadd.f32 %v749, %v2655
      %v2657 = vpop.f32.mrf.mxu0
      %2658 = vmatprep.mubr.f32.mxu0 %v1395
      %2659 = vmatmul.mubr.f32.gmra.mxu0 %v641
      %v2660 = vpop.f32.mrf.mxu0
      %v2661 = vadd.f32 %v749, %v2660
      %v2662 = vpop.f32.mrf.mxu0
      %2663 = vmatprep.mubr.f32.mxu0 %v1398
      %2664 = vmatmul.mubr.f32.gmra.mxu0 %v643
      %v2665 = vpop.f32.mrf.mxu0
      %v2666 = vadd.f32 %v749, %v2665
      %v2667 = vpop.f32.mrf.mxu0
      %2668 = vmatprep.mubr.f32.mxu0 %v1401
      %2669 = vmatmul.mubr.f32.gmra.mxu0 %v645
      %v2670 = vpop.f32.mrf.mxu0
      %v2671 = vadd.f32 %v749, %v2670
      %v2672 = vpop.f32.mrf.mxu0
      %2673 = vmatprep.mubr.f32.mxu0 %v1404
      %2674 = vmatmul.mubr.f32.gmra.mxu0 %v647
      %v2675 = vpop.f32.mrf.mxu0
      %v2676 = vadd.f32 %v749, %v2675
      %v2677 = vpop.f32.mrf.mxu0
      %2678 = vmatprep.mubr.f32.mxu0 %v1407
      %2679 = vmatmul.mubr.f32.gmra.mxu0 %v649
      %v2680 = vpop.f32.mrf.mxu0
      %v2681 = vadd.f32 %v749, %v2680
      %v2682 = vpop.f32.mrf.mxu0
      %2683 = vmatprep.mubr.f32.mxu0 %v1410
      %2684 = vmatmul.mubr.f32.gmra.mxu0 %v651
      %v2685 = vpop.f32.mrf.mxu0
      %v2686 = vadd.f32 %v749, %v2685
      %v2687 = vpop.f32.mrf.mxu0
      %2688 = vmatprep.mubr.f32.mxu0 %v1413
      %2689 = vmatmul.mubr.f32.gmra.mxu0 %v653
      %v2690 = vpop.f32.mrf.mxu0
      %v2691 = vadd.f32 %v749, %v2690
      %v2692 = vpop.f32.mrf.mxu0
      %2693 = vmatprep.mubr.f32.mxu0 %v1416
      %2694 = vmatmul.mubr.f32.gmra.mxu0 %v655
      %v2695 = vpop.f32.mrf.mxu0
      %v2696 = vadd.f32 %v749, %v2695
      %v2697 = vpop.f32.mrf.mxu0
      %2698 = vmatprep.mubr.f32.mxu0 %v1419
      %2699 = vmatmul.mubr.f32.gmra.mxu0 %v657
      %v2700 = vpop.f32.mrf.mxu0
      %v2701 = vadd.f32 %v749, %v2700
      %v2702 = vpop.f32.mrf.mxu0
      %2703 = vmatprep.mubr.f32.mxu0 %v1422
      %2704 = vmatmul.mubr.f32.gmra.mxu0 %v659
      %v2705 = vpop.f32.mrf.mxu0
      %v2706 = vadd.f32 %v749, %v2705
      %v2707 = vpop.f32.mrf.mxu0
      %2708 = vmatprep.mubr.f32.mxu0 %v1425
      %2709 = vmatmul.mubr.f32.gmra.mxu0 %v661
      %v2710 = vpop.f32.mrf.mxu0
      %v2711 = vadd.f32 %v749, %v2710
      %v2712 = vpop.f32.mrf.mxu0
      %2713 = vmatprep.mubr.f32.mxu0 %v1428
      %2714 = vmatmul.mubr.f32.gmra.mxu0 %v663
      %v2715 = vpop.f32.mrf.mxu0
      %v2716 = vadd.f32 %v749, %v2715
      %v2717 = vpop.f32.mrf.mxu0
      %2718 = vmatprep.mubr.f32.mxu0 %v1431
      %2719 = vmatmul.mubr.f32.gmra.mxu0 %v665
      %v2720 = vpop.f32.mrf.mxu0
      %v2721 = vadd.f32 %v749, %v2720
      %v2722 = vpop.f32.mrf.mxu0
      %2723 = vmatprep.mubr.f32.mxu0 %v1434
      %2724 = vmatmul.mubr.f32.gmra.mxu0 %v667
      %v2725 = vpop.f32.mrf.mxu0
      %v2726 = vadd.f32 %v749, %v2725
      %v2727 = vpop.f32.mrf.mxu0
      %2728 = vmatprep.mubr.f32.mxu0 %v1437
      %2729 = vmatmul.mubr.f32.gmra.mxu0 %v669
      %v2730 = vpop.f32.mrf.mxu0
      %v2731 = vadd.f32 %v749, %v2730
      %v2732 = vpop.f32.mrf.mxu0
      %2733 = vmatprep.mubr.f32.mxu0 %v1440
      %2734 = vmatmul.mubr.f32.gmra.mxu0 %v671
      %v2735 = vpop.f32.mrf.mxu0
      %v2736 = vadd.f32 %v749, %v2735
      %v2737 = vpop.f32.mrf.mxu0
      %2738 = vmatprep.mubr.f32.mxu0 %v1443
      %2739 = vmatmul.mubr.f32.gmra.mxu0 %v673
      %v2740 = vpop.f32.mrf.mxu0
      %v2741 = vadd.f32 %v749, %v2740
      %v2742 = vpop.f32.mrf.mxu0
      %2743 = vmatprep.mubr.f32.mxu0 %v1446
      %2744 = vmatmul.mubr.f32.gmra.mxu0 %v675
      %v2745 = vpop.f32.mrf.mxu0
      %v2746 = vadd.f32 %v749, %v2745
      %v2747 = vpop.f32.mrf.mxu0
      %2748 = vmatprep.mubr.f32.mxu0 %v1449
      %2749 = vmatmul.mubr.f32.gmra.mxu0 %v677
      %v2750 = vpop.f32.mrf.mxu0
      %v2751 = vadd.f32 %v749, %v2750
      %v2752 = vpop.f32.mrf.mxu0
      %2753 = vmatprep.mubr.f32.mxu0 %v1452
      %2754 = vmatmul.mubr.f32.gmra.mxu0 %v679
      %v2755 = vpop.f32.mrf.mxu0
      %v2756 = vadd.f32 %v749, %v2755
      %v2757 = vpop.f32.mrf.mxu0
      %2758 = vmatprep.mubr.f32.mxu0 %v1455
      %2759 = vmatmul.mubr.f32.gmra.mxu0 %v681
      %v2760 = vpop.f32.mrf.mxu0
      %v2761 = vadd.f32 %v749, %v2760
      %v2762 = vpop.f32.mrf.mxu0
      %2763 = vmatprep.mubr.f32.mxu0 %v1458
      %2764 = vmatmul.mubr.f32.gmra.mxu0 %v683
      %v2765 = vpop.f32.mrf.mxu0
      %v2766 = vadd.f32 %v749, %v2765
      %v2767 = vpop.f32.mrf.mxu0
      %2768 = vmatprep.mubr.f32.mxu0 %v1461
      %2769 = vmatmul.mubr.f32.gmra.mxu0 %v685
      %v2770 = vpop.f32.mrf.mxu0
      %v2771 = vadd.f32 %v749, %v2770
      %v2772 = vpop.f32.mrf.mxu0
      %2773 = vmatprep.mubr.f32.mxu0 %v1464
      %2774 = vmatmul.mubr.f32.gmra.mxu0 %v687
      %v2775 = vpop.f32.mrf.mxu0
      %v2776 = vadd.f32 %v749, %v2775
      %v2777 = vpop.f32.mrf.mxu0
      %2778 = vmatprep.mubr.f32.mxu0 %v1467
      %2779 = vmatmul.mubr.f32.gmra.mxu0 %v689
      %v2780 = vpop.f32.mrf.mxu0
      %v2781 = vadd.f32 %v749, %v2780
      %v2782 = vpop.f32.mrf.mxu0
      %2783 = vmatprep.mubr.f32.mxu0 %v1470
      %2784 = vmatmul.mubr.f32.gmra.mxu0 %v691
      %v2785 = vpop.f32.mrf.mxu0
      %v2786 = vadd.f32 %v749, %v2785
      %v2787 = vpop.f32.mrf.mxu0
      %2788 = vmatprep.mubr.f32.mxu0 %v1473
      %2789 = vmatmul.mubr.f32.gmra.mxu0 %v693
      %v2790 = vpop.f32.mrf.mxu0
      %v2791 = vadd.f32 %v749, %v2790
      %v2792 = vpop.f32.mrf.mxu0
      %2793 = vmatprep.mubr.f32.mxu0 %v1476
      %2794 = vmatmul.mubr.f32.gmra.mxu0 %v695
      %v2795 = vpop.f32.mrf.mxu0
      %v2796 = vadd.f32 %v749, %v2795
      %v2797 = vpop.f32.mrf.mxu0
      %2798 = vmatprep.mubr.f32.mxu0 %v1479
      %2799 = vmatmul.mubr.f32.gmra.mxu0 %v697
      %v2800 = vpop.f32.mrf.mxu0
      %v2801 = vadd.f32 %v749, %v2800
      %v2802 = vpop.f32.mrf.mxu0
      %2803 = vmatprep.mubr.f32.mxu0 %v1482
      %2804 = vmatmul.mubr.f32.gmra.mxu0 %v699
      %v2805 = vpop.f32.mrf.mxu0
      %v2806 = vadd.f32 %v749, %v2805
      %v2807 = vpop.f32.mrf.mxu0
      %2808 = vmatprep.mubr.f32.mxu0 %v1485
      %2809 = vmatmul.mubr.f32.gmra.mxu0 %v701
      %v2810 = vpop.f32.mrf.mxu0
      %v2811 = vadd.f32 %v749, %v2810
      %v2812 = vpop.f32.mrf.mxu0
      %2813 = vmatprep.mubr.f32.mxu0 %v1488
      %2814 = vmatmul.mubr.f32.gmra.mxu0 %v703
      %v2815 = vpop.f32.mrf.mxu0
      %v2816 = vadd.f32 %v749, %v2815
      %v2817 = vpop.f32.mrf.mxu0
      %2818 = vmatprep.mubr.f32.mxu0 %v1491
      %2819 = vmatmul.mubr.f32.gmra.mxu0 %v705
      %v2820 = vpop.f32.mrf.mxu0
      %v2821 = vadd.f32 %v749, %v2820
      %v2822 = vpop.f32.mrf.mxu0
      %2823 = vmatprep.mubr.f32.mxu0 %v1494
      %2824 = vmatmul.mubr.f32.gmra.mxu0 %v707
      %v2825 = vpop.f32.mrf.mxu0
      %v2826 = vadd.f32 %v749, %v2825
      %v2827 = vpop.f32.mrf.mxu0
      %2828 = vmatprep.mubr.f32.mxu0 %v1497
      %2829 = vmatmul.mubr.f32.gmra.mxu0 %v709
      %v2830 = vpop.f32.mrf.mxu0
      %v2831 = vadd.f32 %v749, %v2830
      %v2832 = vpop.f32.mrf.mxu0
      %2833 = vmatprep.mubr.f32.mxu0 %v1500
      %2834 = vmatmul.mubr.f32.gmra.mxu0 %v711
      %v2835 = vpop.f32.mrf.mxu0
      %v2836 = vadd.f32 %v749, %v2835
      %v2837 = vpop.f32.mrf.mxu0
      %2838 = vmatprep.mubr.f32.mxu0 %v1503
      %2839 = vmatmul.mubr.f32.gmra.mxu0 %v713
      %v2840 = vpop.f32.mrf.mxu0
      %v2841 = vadd.f32 %v749, %v2840
      %v2842 = vpop.f32.mrf.mxu0
      %2843 = vmatprep.mubr.f32.mxu0 %v1506
      %2844 = vmatmul.mubr.f32.gmra.mxu0 %v715
      %v2845 = vpop.f32.mrf.mxu0
      %v2846 = vadd.f32 %v749, %v2845
      %v2847 = vpop.f32.mrf.mxu0
      %2848 = vmatprep.mubr.f32.mxu0 %v1509
      %2849 = vmatmul.mubr.f32.gmra.mxu0 %v717
      %v2850 = vpop.f32.mrf.mxu0
      %v2851 = vadd.f32 %v749, %v2850
      %v2852 = vpop.f32.mrf.mxu0
      %2853 = vmatprep.mubr.f32.mxu0 %v1512
      %2854 = vmatmul.mubr.f32.gmra.mxu0 %v719
      %v2855 = vpop.f32.mrf.mxu0
      %v2856 = vadd.f32 %v749, %v2855
      %v2857 = vpop.f32.mrf.mxu0
      %2858 = vmatprep.mubr.f32.mxu0 %v1515
      %2859 = vmatmul.mubr.f32.gmra.mxu0 %v721
      %v2860 = vpop.f32.mrf.mxu0
      %v2861 = vadd.f32 %v749, %v2860
      %v2862 = vpop.f32.mrf.mxu0
      %2863 = vmatprep.mubr.f32.mxu0 %v1518
      %2864 = vmatmul.mubr.f32.gmra.mxu0 %v723
      %v2865 = vpop.f32.mrf.mxu0
      %v2866 = vadd.f32 %v749, %v2865
      %v2867 = vpop.f32.mrf.mxu0
      %2868 = vdwg.mxu0
      %vm2869 = vcmp.ge.f32.partialorder %v1591, 0.0
      %vm2870 = vcmp.ge.f32.partialorder %v1596, 0.0
      %vm2871 = vcmp.ge.f32.partialorder %v1601, 0.0
      %vm2872 = vcmp.ge.f32.partialorder %v1606, 0.0
      %vm2873 = vcmp.ge.f32.partialorder %v1611, 0.0
      %vm2874 = vcmp.ge.f32.partialorder %v1616, 0.0
      %vm2875 = vcmp.ge.f32.partialorder %v1621, 0.0
      %vm2876 = vcmp.ge.f32.partialorder %v1626, 0.0
      %vm2877 = vcmp.ge.f32.partialorder %v1631, 0.0
      %vm2878 = vcmp.ge.f32.partialorder %v1636, 0.0
      %vm2879 = vcmp.ge.f32.partialorder %v1641, 0.0
      %vm2880 = vcmp.ge.f32.partialorder %v1646, 0.0
      %vm2881 = vcmp.ge.f32.partialorder %v1651, 0.0
      %vm2882 = vcmp.ge.f32.partialorder %v1656, 0.0
      %vm2883 = vcmp.ge.f32.partialorder %v1661, 0.0
      %vm2884 = vcmp.ge.f32.partialorder %v1666, 0.0
      %vm2885 = vcmp.ge.f32.partialorder %v1671, 0.0
      %vm2886 = vcmp.ge.f32.partialorder %v1676, 0.0
      %vm2887 = vcmp.ge.f32.partialorder %v1681, 0.0
      %vm2888 = vcmp.ge.f32.partialorder %v1686, 0.0
      %vm2889 = vcmp.ge.f32.partialorder %v1691, 0.0
      %vm2890 = vcmp.ge.f32.partialorder %v1696, 0.0
      %vm2891 = vcmp.ge.f32.partialorder %v1701, 0.0
      %vm2892 = vcmp.ge.f32.partialorder %v1706, 0.0
      %vm2893 = vcmp.ge.f32.partialorder %v1711, 0.0
      %vm2894 = vcmp.ge.f32.partialorder %v1716, 0.0
      %vm2895 = vcmp.ge.f32.partialorder %v1721, 0.0
      %vm2896 = vcmp.ge.f32.partialorder %v1726, 0.0
      %vm2897 = vcmp.ge.f32.partialorder %v1731, 0.0
      %vm2898 = vcmp.ge.f32.partialorder %v1736, 0.0
      %vm2899 = vcmp.ge.f32.partialorder %v1741, 0.0
      %vm2900 = vcmp.ge.f32.partialorder %v1746, 0.0
      %vm2901 = vcmp.ge.f32.partialorder %v1751, 0.0
      %vm2902 = vcmp.ge.f32.partialorder %v1756, 0.0
      %vm2903 = vcmp.ge.f32.partialorder %v1761, 0.0
      %vm2904 = vcmp.ge.f32.partialorder %v1766, 0.0
      %vm2905 = vcmp.ge.f32.partialorder %v1771, 0.0
      %vm2906 = vcmp.ge.f32.partialorder %v1776, 0.0
      %vm2907 = vcmp.ge.f32.partialorder %v1781, 0.0
      %vm2908 = vcmp.ge.f32.partialorder %v1786, 0.0
      %vm2909 = vcmp.ge.f32.partialorder %v1791, 0.0
      %vm2910 = vcmp.ge.f32.partialorder %v1796, 0.0
      %vm2911 = vcmp.ge.f32.partialorder %v1801, 0.0
      %vm2912 = vcmp.ge.f32.partialorder %v1806, 0.0
      %vm2913 = vcmp.ge.f32.partialorder %v1811, 0.0
      %vm2914 = vcmp.ge.f32.partialorder %v1816, 0.0
      %vm2915 = vcmp.ge.f32.partialorder %v1821, 0.0
      %vm2916 = vcmp.ge.f32.partialorder %v1826, 0.0
      %vm2917 = vcmp.ge.f32.partialorder %v1831, 0.0
      %vm2918 = vcmp.ge.f32.partialorder %v1836, 0.0
      %vm2919 = vcmp.ge.f32.partialorder %v1841, 0.0
      %vm2920 = vcmp.ge.f32.partialorder %v1846, 0.0
      %vm2921 = vcmp.ge.f32.partialorder %v1851, 0.0
      %vm2922 = vcmp.ge.f32.partialorder %v1856, 0.0
      %vm2923 = vcmp.ge.f32.partialorder %v1861, 0.0
      %vm2924 = vcmp.ge.f32.partialorder %v1866, 0.0
      %vm2925 = vcmp.ge.f32.partialorder %v1871, 0.0
      %vm2926 = vcmp.ge.f32.partialorder %v1876, 0.0
      %vm2927 = vcmp.ge.f32.partialorder %v1881, 0.0
      %vm2928 = vcmp.ge.f32.partialorder %v1886, 0.0
      %vm2929 = vcmp.ge.f32.partialorder %v1891, 0.0
      %vm2930 = vcmp.ge.f32.partialorder %v1896, 0.0
      %vm2931 = vcmp.ge.f32.partialorder %v1901, 0.0
      %vm2932 = vcmp.ge.f32.partialorder %v1906, 0.0
      %vm2933 = vcmp.ge.f32.partialorder %v1911, 0.0
      %vm2934 = vcmp.ge.f32.partialorder %v1916, 0.0
      %vm2935 = vcmp.ge.f32.partialorder %v1921, 0.0
      %vm2936 = vcmp.ge.f32.partialorder %v1926, 0.0
      %vm2937 = vcmp.ge.f32.partialorder %v1931, 0.0
      %vm2938 = vcmp.ge.f32.partialorder %v1936, 0.0
      %vm2939 = vcmp.ge.f32.partialorder %v1941, 0.0
      %vm2940 = vcmp.ge.f32.partialorder %v1946, 0.0
      %vm2941 = vcmp.ge.f32.partialorder %v1951, 0.0
      %vm2942 = vcmp.ge.f32.partialorder %v1956, 0.0
      %vm2943 = vcmp.ge.f32.partialorder %v1961, 0.0
      %vm2944 = vcmp.ge.f32.partialorder %v1966, 0.0
      %vm2945 = vcmp.ge.f32.partialorder %v1971, 0.0
      %vm2946 = vcmp.ge.f32.partialorder %v1976, 0.0
      %vm2947 = vcmp.ge.f32.partialorder %v1981, 0.0
      %vm2948 = vcmp.ge.f32.partialorder %v1986, 0.0
      %vm2949 = vcmp.ge.f32.partialorder %v1991, 0.0
      %vm2950 = vcmp.ge.f32.partialorder %v1996, 0.0
      %vm2951 = vcmp.ge.f32.partialorder %v2001, 0.0
      %vm2952 = vcmp.ge.f32.partialorder %v2006, 0.0
      %vm2953 = vcmp.ge.f32.partialorder %v2011, 0.0
      %vm2954 = vcmp.ge.f32.partialorder %v2016, 0.0
      %vm2955 = vcmp.ge.f32.partialorder %v2021, 0.0
      %vm2956 = vcmp.ge.f32.partialorder %v2026, 0.0
      %vm2957 = vcmp.ge.f32.partialorder %v2031, 0.0
      %vm2958 = vcmp.ge.f32.partialorder %v2036, 0.0
      %vm2959 = vcmp.ge.f32.partialorder %v2041, 0.0
      %vm2960 = vcmp.ge.f32.partialorder %v2046, 0.0
      %vm2961 = vcmp.ge.f32.partialorder %v2051, 0.0
      %vm2962 = vcmp.ge.f32.partialorder %v2056, 0.0
      %vm2963 = vcmp.ge.f32.partialorder %v2061, 0.0
      %vm2964 = vcmp.ge.f32.partialorder %v2066, 0.0
      %vm2965 = vcmp.ge.f32.partialorder %v2071, 0.0
      %vm2966 = vcmp.ge.f32.partialorder %v2076, 0.0
      %vm2967 = vcmp.ge.f32.partialorder %v2081, 0.0
      %vm2968 = vcmp.ge.f32.partialorder %v2086, 0.0
      %vm2969 = vcmp.ge.f32.partialorder %v2091, 0.0
      %vm2970 = vcmp.ge.f32.partialorder %v2096, 0.0
      %vm2971 = vcmp.ge.f32.partialorder %v2101, 0.0
      %vm2972 = vcmp.ge.f32.partialorder %v2106, 0.0
      %vm2973 = vcmp.ge.f32.partialorder %v2111, 0.0
      %vm2974 = vcmp.ge.f32.partialorder %v2116, 0.0
      %vm2975 = vcmp.ge.f32.partialorder %v2121, 0.0
      %vm2976 = vcmp.ge.f32.partialorder %v2126, 0.0
      %vm2977 = vcmp.ge.f32.partialorder %v2131, 0.0
      %vm2978 = vcmp.ge.f32.partialorder %v2136, 0.0
      %vm2979 = vcmp.ge.f32.partialorder %v2141, 0.0
      %vm2980 = vcmp.ge.f32.partialorder %v2146, 0.0
      %vm2981 = vcmp.ge.f32.partialorder %v2151, 0.0
      %vm2982 = vcmp.ge.f32.partialorder %v2156, 0.0
      %vm2983 = vcmp.ge.f32.partialorder %v2161, 0.0
      %vm2984 = vcmp.ge.f32.partialorder %v2166, 0.0
      %vm2985 = vcmp.ge.f32.partialorder %v2171, 0.0
      %vm2986 = vcmp.ge.f32.partialorder %v2176, 0.0
      %vm2987 = vcmp.ge.f32.partialorder %v2181, 0.0
      %vm2988 = vcmp.ge.f32.partialorder %v2186, 0.0
      %vm2989 = vcmp.ge.f32.partialorder %v2191, 0.0
      %vm2990 = vcmp.ge.f32.partialorder %v2196, 0.0
      %vm2991 = vcmp.ge.f32.partialorder %v2201, 0.0
      %vm2992 = vcmp.ge.f32.partialorder %v2206, 0.0
      %vm2993 = vcmp.ge.f32.partialorder %v2211, 0.0
      %vm2994 = vcmp.ge.f32.partialorder %v2216, 0.0
      %vm2995 = vcmp.ge.f32.partialorder %v2221, 0.0
      %vm2996 = vcmp.ge.f32.partialorder %v2226, 0.0
      %vm2997 = vcmp.ge.f32.partialorder %v2231, 0.0
      %vm2998 = vcmp.ge.f32.partialorder %v2236, 0.0
      %vm2999 = vcmp.ge.f32.partialorder %v2241, 0.0
      %vm3000 = vcmp.ge.f32.partialorder %v2246, 0.0
      %vm3001 = vcmp.ge.f32.partialorder %v2251, 0.0
      %vm3002 = vcmp.ge.f32.partialorder %v2256, 0.0
      %vm3003 = vcmp.ge.f32.partialorder %v2261, 0.0
      %vm3004 = vcmp.ge.f32.partialorder %v2266, 0.0
      %vm3005 = vcmp.ge.f32.partialorder %v2271, 0.0
      %vm3006 = vcmp.ge.f32.partialorder %v2276, 0.0
      %vm3007 = vcmp.ge.f32.partialorder %v2281, 0.0
      %vm3008 = vcmp.ge.f32.partialorder %v2286, 0.0
      %vm3009 = vcmp.ge.f32.partialorder %v2291, 0.0
      %vm3010 = vcmp.ge.f32.partialorder %v2296, 0.0
      %vm3011 = vcmp.ge.f32.partialorder %v2301, 0.0
      %vm3012 = vcmp.ge.f32.partialorder %v2306, 0.0
      %vm3013 = vcmp.ge.f32.partialorder %v2311, 0.0
      %vm3014 = vcmp.ge.f32.partialorder %v2316, 0.0
      %vm3015 = vcmp.ge.f32.partialorder %v2321, 0.0
      %vm3016 = vcmp.ge.f32.partialorder %v2326, 0.0
      %vm3017 = vcmp.ge.f32.partialorder %v2331, 0.0
      %vm3018 = vcmp.ge.f32.partialorder %v2336, 0.0
      %vm3019 = vcmp.ge.f32.partialorder %v2341, 0.0
      %vm3020 = vcmp.ge.f32.partialorder %v2346, 0.0
      %vm3021 = vcmp.ge.f32.partialorder %v2351, 0.0
      %vm3022 = vcmp.ge.f32.partialorder %v2356, 0.0
      %vm3023 = vcmp.ge.f32.partialorder %v2361, 0.0
      %vm3024 = vcmp.ge.f32.partialorder %v2366, 0.0
      %vm3025 = vcmp.ge.f32.partialorder %v2371, 0.0
      %vm3026 = vcmp.ge.f32.partialorder %v2376, 0.0
      %vm3027 = vcmp.ge.f32.partialorder %v2381, 0.0
      %vm3028 = vcmp.ge.f32.partialorder %v2386, 0.0
      %vm3029 = vcmp.ge.f32.partialorder %v2391, 0.0
      %vm3030 = vcmp.ge.f32.partialorder %v2396, 0.0
      %vm3031 = vcmp.ge.f32.partialorder %v2401, 0.0
      %vm3032 = vcmp.ge.f32.partialorder %v2406, 0.0
      %vm3033 = vcmp.ge.f32.partialorder %v2411, 0.0
      %vm3034 = vcmp.ge.f32.partialorder %v2416, 0.0
      %vm3035 = vcmp.ge.f32.partialorder %v2421, 0.0
      %vm3036 = vcmp.ge.f32.partialorder %v2426, 0.0
      %vm3037 = vcmp.ge.f32.partialorder %v2431, 0.0
      %vm3038 = vcmp.ge.f32.partialorder %v2436, 0.0
      %vm3039 = vcmp.ge.f32.partialorder %v2441, 0.0
      %vm3040 = vcmp.ge.f32.partialorder %v2446, 0.0
      %vm3041 = vcmp.ge.f32.partialorder %v2451, 0.0
      %vm3042 = vcmp.ge.f32.partialorder %v2456, 0.0
      %vm3043 = vcmp.ge.f32.partialorder %v2461, 0.0
      %vm3044 = vcmp.ge.f32.partialorder %v2466, 0.0
      %vm3045 = vcmp.ge.f32.partialorder %v2471, 0.0
      %vm3046 = vcmp.ge.f32.partialorder %v2476, 0.0
      %vm3047 = vcmp.ge.f32.partialorder %v2481, 0.0
      %vm3048 = vcmp.ge.f32.partialorder %v2486, 0.0
      %vm3049 = vcmp.ge.f32.partialorder %v2491, 0.0
      %vm3050 = vcmp.ge.f32.partialorder %v2496, 0.0
      %vm3051 = vcmp.ge.f32.partialorder %v2501, 0.0
      %vm3052 = vcmp.ge.f32.partialorder %v2506, 0.0
      %vm3053 = vcmp.ge.f32.partialorder %v2511, 0.0
      %vm3054 = vcmp.ge.f32.partialorder %v2516, 0.0
      %vm3055 = vcmp.ge.f32.partialorder %v2521, 0.0
      %vm3056 = vcmp.ge.f32.partialorder %v2526, 0.0
      %vm3057 = vcmp.ge.f32.partialorder %v2531, 0.0
      %vm3058 = vcmp.ge.f32.partialorder %v2536, 0.0
      %vm3059 = vcmp.ge.f32.partialorder %v2541, 0.0
      %vm3060 = vcmp.ge.f32.partialorder %v2546, 0.0
      %vm3061 = vcmp.ge.f32.partialorder %v2551, 0.0
      %vm3062 = vcmp.ge.f32.partialorder %v2556, 0.0
      %vm3063 = vcmp.ge.f32.partialorder %v2561, 0.0
      %vm3064 = vcmp.ge.f32.partialorder %v2566, 0.0
      %vm3065 = vcmp.ge.f32.partialorder %v2571, 0.0
      %vm3066 = vcmp.ge.f32.partialorder %v2576, 0.0
      %vm3067 = vcmp.ge.f32.partialorder %v2581, 0.0
      %vm3068 = vcmp.ge.f32.partialorder %v2586, 0.0
      %vm3069 = vcmp.ge.f32.partialorder %v2591, 0.0
      %vm3070 = vcmp.ge.f32.partialorder %v2596, 0.0
      %vm3071 = vcmp.ge.f32.partialorder %v2601, 0.0
      %vm3072 = vcmp.ge.f32.partialorder %v2606, 0.0
      %vm3073 = vcmp.ge.f32.partialorder %v2611, 0.0
      %vm3074 = vcmp.ge.f32.partialorder %v2616, 0.0
      %vm3075 = vcmp.ge.f32.partialorder %v2621, 0.0
      %vm3076 = vcmp.ge.f32.partialorder %v2626, 0.0
      %vm3077 = vcmp.ge.f32.partialorder %v2631, 0.0
      %vm3078 = vcmp.ge.f32.partialorder %v2636, 0.0
      %vm3079 = vcmp.ge.f32.partialorder %v2641, 0.0
      %vm3080 = vcmp.ge.f32.partialorder %v2646, 0.0
      %vm3081 = vcmp.ge.f32.partialorder %v2651, 0.0
      %vm3082 = vcmp.ge.f32.partialorder %v2656, 0.0
      %vm3083 = vcmp.ge.f32.partialorder %v2661, 0.0
      %vm3084 = vcmp.ge.f32.partialorder %v2666, 0.0
      %vm3085 = vcmp.ge.f32.partialorder %v2671, 0.0
      %vm3086 = vcmp.ge.f32.partialorder %v2676, 0.0
      %vm3087 = vcmp.ge.f32.partialorder %v2681, 0.0
      %vm3088 = vcmp.ge.f32.partialorder %v2686, 0.0
      %vm3089 = vcmp.ge.f32.partialorder %v2691, 0.0
      %vm3090 = vcmp.ge.f32.partialorder %v2696, 0.0
      %vm3091 = vcmp.ge.f32.partialorder %v2701, 0.0
      %vm3092 = vcmp.ge.f32.partialorder %v2706, 0.0
      %vm3093 = vcmp.ge.f32.partialorder %v2711, 0.0
      %vm3094 = vcmp.ge.f32.partialorder %v2716, 0.0
      %vm3095 = vcmp.ge.f32.partialorder %v2721, 0.0
      %vm3096 = vcmp.ge.f32.partialorder %v2726, 0.0
      %vm3097 = vcmp.ge.f32.partialorder %v2731, 0.0
      %vm3098 = vcmp.ge.f32.partialorder %v2736, 0.0
      %vm3099 = vcmp.ge.f32.partialorder %v2741, 0.0
      %vm3100 = vcmp.ge.f32.partialorder %v2746, 0.0
      %vm3101 = vcmp.ge.f32.partialorder %v2751, 0.0
      %vm3102 = vcmp.ge.f32.partialorder %v2756, 0.0
      %vm3103 = vcmp.ge.f32.partialorder %v2761, 0.0
      %vm3104 = vcmp.ge.f32.partialorder %v2766, 0.0
      %vm3105 = vcmp.ge.f32.partialorder %v2771, 0.0
      %vm3106 = vcmp.ge.f32.partialorder %v2776, 0.0
      %vm3107 = vcmp.ge.f32.partialorder %v2781, 0.0
      %vm3108 = vcmp.ge.f32.partialorder %v2786, 0.0
      %vm3109 = vcmp.ge.f32.partialorder %v2791, 0.0
      %vm3110 = vcmp.ge.f32.partialorder %v2796, 0.0
      %vm3111 = vcmp.ge.f32.partialorder %v2801, 0.0
      %vm3112 = vcmp.ge.f32.partialorder %v2806, 0.0
      %vm3113 = vcmp.ge.f32.partialorder %v2811, 0.0
      %vm3114 = vcmp.ge.f32.partialorder %v2816, 0.0
      %vm3115 = vcmp.ge.f32.partialorder %v2821, 0.0
      %vm3116 = vcmp.ge.f32.partialorder %v2826, 0.0
      %vm3117 = vcmp.ge.f32.partialorder %v2831, 0.0
      %vm3118 = vcmp.ge.f32.partialorder %v2836, 0.0
      %vm3119 = vcmp.ge.f32.partialorder %v2841, 0.0
      %vm3120 = vcmp.ge.f32.partialorder %v2846, 0.0
      %vm3121 = vcmp.ge.f32.partialorder %v2851, 0.0
      %vm3122 = vcmp.ge.f32.partialorder %v2856, 0.0
      %vm3123 = vcmp.ge.f32.partialorder %v2861, 0.0
      %vm3124 = vcmp.ge.f32.partialorder %v2866, 0.0
      %v3125 = vmul.f32 %v1591, 0.1
      %v3126 = vmul.f32 %v1596, 0.1
      %v3127 = vmul.f32 %v1601, 0.1
      %v3128 = vmul.f32 %v1606, 0.1
      %v3129 = vmul.f32 %v1611, 0.1
      %v3130 = vmul.f32 %v1616, 0.1
      %v3131 = vmul.f32 %v1621, 0.1
      %v3132 = vmul.f32 %v1626, 0.1
      %v3133 = vmul.f32 %v1631, 0.1
      %v3134 = vmul.f32 %v1636, 0.1
      %v3135 = vmul.f32 %v1641, 0.1
      %v3136 = vmul.f32 %v1646, 0.1
      %v3137 = vmul.f32 %v1651, 0.1
      %v3138 = vmul.f32 %v1656, 0.1
      %v3139 = vmul.f32 %v1661, 0.1
      %v3140 = vmul.f32 %v1666, 0.1
      %v3141 = vmul.f32 %v1671, 0.1
      %v3142 = vmul.f32 %v1676, 0.1
      %v3143 = vmul.f32 %v1681, 0.1
      %v3144 = vmul.f32 %v1686, 0.1
      %v3145 = vmul.f32 %v1691, 0.1
      %v3146 = vmul.f32 %v1696, 0.1
      %v3147 = vmul.f32 %v1701, 0.1
      %v3148 = vmul.f32 %v1706, 0.1
      %v3149 = vmul.f32 %v1711, 0.1
      %v3150 = vmul.f32 %v1716, 0.1
      %v3151 = vmul.f32 %v1721, 0.1
      %v3152 = vmul.f32 %v1726, 0.1
      %v3153 = vmul.f32 %v1731, 0.1
      %v3154 = vmul.f32 %v1736, 0.1
      %v3155 = vmul.f32 %v1741, 0.1
      %v3156 = vmul.f32 %v1746, 0.1
      %v3157 = vmul.f32 %v1751, 0.1
      %v3158 = vmul.f32 %v1756, 0.1
      %v3159 = vmul.f32 %v1761, 0.1
      %v3160 = vmul.f32 %v1766, 0.1
      %v3161 = vmul.f32 %v1771, 0.1
      %v3162 = vmul.f32 %v1776, 0.1
      %v3163 = vmul.f32 %v1781, 0.1
      %v3164 = vmul.f32 %v1786, 0.1
      %v3165 = vmul.f32 %v1791, 0.1
      %v3166 = vmul.f32 %v1796, 0.1
      %v3167 = vmul.f32 %v1801, 0.1
      %v3168 = vmul.f32 %v1806, 0.1
      %v3169 = vmul.f32 %v1811, 0.1
      %v3170 = vmul.f32 %v1816, 0.1
      %v3171 = vmul.f32 %v1821, 0.1
      %v3172 = vmul.f32 %v1826, 0.1
      %v3173 = vmul.f32 %v1831, 0.1
      %v3174 = vmul.f32 %v1836, 0.1
      %v3175 = vmul.f32 %v1841, 0.1
      %v3176 = vmul.f32 %v1846, 0.1
      %v3177 = vmul.f32 %v1851, 0.1
      %v3178 = vmul.f32 %v1856, 0.1
      %v3179 = vmul.f32 %v1861, 0.1
      %v3180 = vmul.f32 %v1866, 0.1
      %v3181 = vmul.f32 %v1871, 0.1
      %v3182 = vmul.f32 %v1876, 0.1
      %v3183 = vmul.f32 %v1881, 0.1
      %v3184 = vmul.f32 %v1886, 0.1
      %v3185 = vmul.f32 %v1891, 0.1
      %v3186 = vmul.f32 %v1896, 0.1
      %v3187 = vmul.f32 %v1901, 0.1
      %v3188 = vmul.f32 %v1906, 0.1
      %v3189 = vmul.f32 %v1911, 0.1
      %v3190 = vmul.f32 %v1916, 0.1
      %v3191 = vmul.f32 %v1921, 0.1
      %v3192 = vmul.f32 %v1926, 0.1
      %v3193 = vmul.f32 %v1931, 0.1
      %v3194 = vmul.f32 %v1936, 0.1
      %v3195 = vmul.f32 %v1941, 0.1
      %v3196 = vmul.f32 %v1946, 0.1
      %v3197 = vmul.f32 %v1951, 0.1
      %v3198 = vmul.f32 %v1956, 0.1
      %v3199 = vmul.f32 %v1961, 0.1
      %v3200 = vmul.f32 %v1966, 0.1
      %v3201 = vmul.f32 %v1971, 0.1
      %v3202 = vmul.f32 %v1976, 0.1
      %v3203 = vmul.f32 %v1981, 0.1
      %v3204 = vmul.f32 %v1986, 0.1
      %v3205 = vmul.f32 %v1991, 0.1
      %v3206 = vmul.f32 %v1996, 0.1
      %v3207 = vmul.f32 %v2001, 0.1
      %v3208 = vmul.f32 %v2006, 0.1
      %v3209 = vmul.f32 %v2011, 0.1
      %v3210 = vmul.f32 %v2016, 0.1
      %v3211 = vmul.f32 %v2021, 0.1
      %v3212 = vmul.f32 %v2026, 0.1
      %v3213 = vmul.f32 %v2031, 0.1
      %v3214 = vmul.f32 %v2036, 0.1
      %v3215 = vmul.f32 %v2041, 0.1
      %v3216 = vmul.f32 %v2046, 0.1
      %v3217 = vmul.f32 %v2051, 0.1
      %v3218 = vmul.f32 %v2056, 0.1
      %v3219 = vmul.f32 %v2061, 0.1
      %v3220 = vmul.f32 %v2066, 0.1
      %v3221 = vmul.f32 %v2071, 0.1
      %v3222 = vmul.f32 %v2076, 0.1
      %v3223 = vmul.f32 %v2081, 0.1
      %v3224 = vmul.f32 %v2086, 0.1
      %v3225 = vmul.f32 %v2091, 0.1
      %v3226 = vmul.f32 %v2096, 0.1
      %v3227 = vmul.f32 %v2101, 0.1
      %v3228 = vmul.f32 %v2106, 0.1
      %v3229 = vmul.f32 %v2111, 0.1
      %v3230 = vmul.f32 %v2116, 0.1
      %v3231 = vmul.f32 %v2121, 0.1
      %v3232 = vmul.f32 %v2126, 0.1
      %v3233 = vmul.f32 %v2131, 0.1
      %v3234 = vmul.f32 %v2136, 0.1
      %v3235 = vmul.f32 %v2141, 0.1
      %v3236 = vmul.f32 %v2146, 0.1
      %v3237 = vmul.f32 %v2151, 0.1
      %v3238 = vmul.f32 %v2156, 0.1
      %v3239 = vmul.f32 %v2161, 0.1
      %v3240 = vmul.f32 %v2166, 0.1
      %v3241 = vmul.f32 %v2171, 0.1
      %v3242 = vmul.f32 %v2176, 0.1
      %v3243 = vmul.f32 %v2181, 0.1
      %v3244 = vmul.f32 %v2186, 0.1
      %v3245 = vmul.f32 %v2191, 0.1
      %v3246 = vmul.f32 %v2196, 0.1
      %v3247 = vmul.f32 %v2201, 0.1
      %v3248 = vmul.f32 %v2206, 0.1
      %v3249 = vmul.f32 %v2211, 0.1
      %v3250 = vmul.f32 %v2216, 0.1
      %v3251 = vmul.f32 %v2221, 0.1
      %v3252 = vmul.f32 %v2226, 0.1
      %v3253 = vmul.f32 %v2231, 0.1
      %v3254 = vmul.f32 %v2236, 0.1
      %v3255 = vmul.f32 %v2241, 0.1
      %v3256 = vmul.f32 %v2246, 0.1
      %v3257 = vmul.f32 %v2251, 0.1
      %v3258 = vmul.f32 %v2256, 0.1
      %v3259 = vmul.f32 %v2261, 0.1
      %v3260 = vmul.f32 %v2266, 0.1
      %v3261 = vmul.f32 %v2271, 0.1
      %v3262 = vmul.f32 %v2276, 0.1
      %v3263 = vmul.f32 %v2281, 0.1
      %v3264 = vmul.f32 %v2286, 0.1
      %v3265 = vmul.f32 %v2291, 0.1
      %v3266 = vmul.f32 %v2296, 0.1
      %v3267 = vmul.f32 %v2301, 0.1
      %v3268 = vmul.f32 %v2306, 0.1
      %v3269 = vmul.f32 %v2311, 0.1
      %v3270 = vmul.f32 %v2316, 0.1
      %v3271 = vmul.f32 %v2321, 0.1
      %v3272 = vmul.f32 %v2326, 0.1
      %v3273 = vmul.f32 %v2331, 0.1
      %v3274 = vmul.f32 %v2336, 0.1
      %v3275 = vmul.f32 %v2341, 0.1
      %v3276 = vmul.f32 %v2346, 0.1
      %v3277 = vmul.f32 %v2351, 0.1
      %v3278 = vmul.f32 %v2356, 0.1
      %v3279 = vmul.f32 %v2361, 0.1
      %v3280 = vmul.f32 %v2366, 0.1
      %v3281 = vmul.f32 %v2371, 0.1
      %v3282 = vmul.f32 %v2376, 0.1
      %v3283 = vmul.f32 %v2381, 0.1
      %v3284 = vmul.f32 %v2386, 0.1
      %v3285 = vmul.f32 %v2391, 0.1
      %v3286 = vmul.f32 %v2396, 0.1
      %v3287 = vmul.f32 %v2401, 0.1
      %v3288 = vmul.f32 %v2406, 0.1
      %v3289 = vmul.f32 %v2411, 0.1
      %v3290 = vmul.f32 %v2416, 0.1
      %v3291 = vmul.f32 %v2421, 0.1
      %v3292 = vmul.f32 %v2426, 0.1
      %v3293 = vmul.f32 %v2431, 0.1
      %v3294 = vmul.f32 %v2436, 0.1
      %v3295 = vmul.f32 %v2441, 0.1
      %v3296 = vmul.f32 %v2446, 0.1
      %v3297 = vmul.f32 %v2451, 0.1
      %v3298 = vmul.f32 %v2456, 0.1
      %v3299 = vmul.f32 %v2461, 0.1
      %v3300 = vmul.f32 %v2466, 0.1
      %v3301 = vmul.f32 %v2471, 0.1
      %v3302 = vmul.f32 %v2476, 0.1
      %v3303 = vmul.f32 %v2481, 0.1
      %v3304 = vmul.f32 %v2486, 0.1
      %v3305 = vmul.f32 %v2491, 0.1
      %v3306 = vmul.f32 %v2496, 0.1
      %v3307 = vmul.f32 %v2501, 0.1
      %v3308 = vmul.f32 %v2506, 0.1
      %v3309 = vmul.f32 %v2511, 0.1
      %v3310 = vmul.f32 %v2516, 0.1
      %v3311 = vmul.f32 %v2521, 0.1
      %v3312 = vmul.f32 %v2526, 0.1
      %v3313 = vmul.f32 %v2531, 0.1
      %v3314 = vmul.f32 %v2536, 0.1
      %v3315 = vmul.f32 %v2541, 0.1
      %v3316 = vmul.f32 %v2546, 0.1
      %v3317 = vmul.f32 %v2551, 0.1
      %v3318 = vmul.f32 %v2556, 0.1
      %v3319 = vmul.f32 %v2561, 0.1
      %v3320 = vmul.f32 %v2566, 0.1
      %v3321 = vmul.f32 %v2571, 0.1
      %v3322 = vmul.f32 %v2576, 0.1
      %v3323 = vmul.f32 %v2581, 0.1
      %v3324 = vmul.f32 %v2586, 0.1
      %v3325 = vmul.f32 %v2591, 0.1
      %v3326 = vmul.f32 %v2596, 0.1
      %v3327 = vmul.f32 %v2601, 0.1
      %v3328 = vmul.f32 %v2606, 0.1
      %v3329 = vmul.f32 %v2611, 0.1
      %v3330 = vmul.f32 %v2616, 0.1
      %v3331 = vmul.f32 %v2621, 0.1
      %v3332 = vmul.f32 %v2626, 0.1
      %v3333 = vmul.f32 %v2631, 0.1
      %v3334 = vmul.f32 %v2636, 0.1
      %v3335 = vmul.f32 %v2641, 0.1
      %v3336 = vmul.f32 %v2646, 0.1
      %v3337 = vmul.f32 %v2651, 0.1
      %v3338 = vmul.f32 %v2656, 0.1
      %v3339 = vmul.f32 %v2661, 0.1
      %v3340 = vmul.f32 %v2666, 0.1
      %v3341 = vmul.f32 %v2671, 0.1
      %v3342 = vmul.f32 %v2676, 0.1
      %v3343 = vmul.f32 %v2681, 0.1
      %v3344 = vmul.f32 %v2686, 0.1
      %v3345 = vmul.f32 %v2691, 0.1
      %v3346 = vmul.f32 %v2696, 0.1
      %v3347 = vmul.f32 %v2701, 0.1
      %v3348 = vmul.f32 %v2706, 0.1
      %v3349 = vmul.f32 %v2711, 0.1
      %v3350 = vmul.f32 %v2716, 0.1
      %v3351 = vmul.f32 %v2721, 0.1
      %v3352 = vmul.f32 %v2726, 0.1
      %v3353 = vmul.f32 %v2731, 0.1
      %v3354 = vmul.f32 %v2736, 0.1
      %v3355 = vmul.f32 %v2741, 0.1
      %v3356 = vmul.f32 %v2746, 0.1
      %v3357 = vmul.f32 %v2751, 0.1
      %v3358 = vmul.f32 %v2756, 0.1
      %v3359 = vmul.f32 %v2761, 0.1
      %v3360 = vmul.f32 %v2766, 0.1
      %v3361 = vmul.f32 %v2771, 0.1
      %v3362 = vmul.f32 %v2776, 0.1
      %v3363 = vmul.f32 %v2781, 0.1
      %v3364 = vmul.f32 %v2786, 0.1
      %v3365 = vmul.f32 %v2791, 0.1
      %v3366 = vmul.f32 %v2796, 0.1
      %v3367 = vmul.f32 %v2801, 0.1
      %v3368 = vmul.f32 %v2806, 0.1
      %v3369 = vmul.f32 %v2811, 0.1
      %v3370 = vmul.f32 %v2816, 0.1
      %v3371 = vmul.f32 %v2821, 0.1
      %v3372 = vmul.f32 %v2826, 0.1
      %v3373 = vmul.f32 %v2831, 0.1
      %v3374 = vmul.f32 %v2836, 0.1
      %v3375 = vmul.f32 %v2841, 0.1
      %v3376 = vmul.f32 %v2846, 0.1
      %v3377 = vmul.f32 %v2851, 0.1
      %v3378 = vmul.f32 %v2856, 0.1
      %v3379 = vmul.f32 %v2861, 0.1
      %v3380 = vmul.f32 %v2866, 0.1
      %v3381 = vsel %vm2869, %v1591, %v3125
      %v3382 = vsel %vm2870, %v1596, %v3126
      %v3383 = vsel %vm2871, %v1601, %v3127
      %v3384 = vsel %vm2872, %v1606, %v3128
      %v3385 = vsel %vm2873, %v1611, %v3129
      %v3386 = vsel %vm2874, %v1616, %v3130
      %v3387 = vsel %vm2875, %v1621, %v3131
      %v3388 = vsel %vm2876, %v1626, %v3132
      %v3389 = vsel %vm2877, %v1631, %v3133
      %v3390 = vsel %vm2878, %v1636, %v3134
      %v3391 = vsel %vm2879, %v1641, %v3135
      %v3392 = vsel %vm2880, %v1646, %v3136
      %v3393 = vsel %vm2881, %v1651, %v3137
      %v3394 = vsel %vm2882, %v1656, %v3138
      %v3395 = vsel %vm2883, %v1661, %v3139
      %v3396 = vsel %vm2884, %v1666, %v3140
      %v3397 = vsel %vm2885, %v1671, %v3141
      %v3398 = vsel %vm2886, %v1676, %v3142
      %v3399 = vsel %vm2887, %v1681, %v3143
      %v3400 = vsel %vm2888, %v1686, %v3144
      %v3401 = vsel %vm2889, %v1691, %v3145
      %v3402 = vsel %vm2890, %v1696, %v3146
      %v3403 = vsel %vm2891, %v1701, %v3147
      %v3404 = vsel %vm2892, %v1706, %v3148
      %v3405 = vsel %vm2893, %v1711, %v3149
      %v3406 = vsel %vm2894, %v1716, %v3150
      %v3407 = vsel %vm2895, %v1721, %v3151
      %v3408 = vsel %vm2896, %v1726, %v3152
      %v3409 = vsel %vm2897, %v1731, %v3153
      %v3410 = vsel %vm2898, %v1736, %v3154
      %v3411 = vsel %vm2899, %v1741, %v3155
      %v3412 = vsel %vm2900, %v1746, %v3156
      %v3413 = vsel %vm2901, %v1751, %v3157
      %v3414 = vsel %vm2902, %v1756, %v3158
      %v3415 = vsel %vm2903, %v1761, %v3159
      %v3416 = vsel %vm2904, %v1766, %v3160
      %v3417 = vsel %vm2905, %v1771, %v3161
      %v3418 = vsel %vm2906, %v1776, %v3162
      %v3419 = vsel %vm2907, %v1781, %v3163
      %v3420 = vsel %vm2908, %v1786, %v3164
      %v3421 = vsel %vm2909, %v1791, %v3165
      %v3422 = vsel %vm2910, %v1796, %v3166
      %v3423 = vsel %vm2911, %v1801, %v3167
      %v3424 = vsel %vm2912, %v1806, %v3168
      %v3425 = vsel %vm2913, %v1811, %v3169
      %v3426 = vsel %vm2914, %v1816, %v3170
      %v3427 = vsel %vm2915, %v1821, %v3171
      %v3428 = vsel %vm2916, %v1826, %v3172
      %v3429 = vsel %vm2917, %v1831, %v3173
      %v3430 = vsel %vm2918, %v1836, %v3174
      %v3431 = vsel %vm2919, %v1841, %v3175
      %v3432 = vsel %vm2920, %v1846, %v3176
      %v3433 = vsel %vm2921, %v1851, %v3177
      %v3434 = vsel %vm2922, %v1856, %v3178
      %v3435 = vsel %vm2923, %v1861, %v3179
      %v3436 = vsel %vm2924, %v1866, %v3180
      %v3437 = vsel %vm2925, %v1871, %v3181
      %v3438 = vsel %vm2926, %v1876, %v3182
      %v3439 = vsel %vm2927, %v1881, %v3183
      %v3440 = vsel %vm2928, %v1886, %v3184
      %v3441 = vsel %vm2929, %v1891, %v3185
      %v3442 = vsel %vm2930, %v1896, %v3186
      %v3443 = vsel %vm2931, %v1901, %v3187
      %v3444 = vsel %vm2932, %v1906, %v3188
      %v3445 = vsel %vm2933, %v1911, %v3189
      %v3446 = vsel %vm2934, %v1916, %v3190
      %v3447 = vsel %vm2935, %v1921, %v3191
      %v3448 = vsel %vm2936, %v1926, %v3192
      %v3449 = vsel %vm2937, %v1931, %v3193
      %v3450 = vsel %vm2938, %v1936, %v3194
      %v3451 = vsel %vm2939, %v1941, %v3195
      %v3452 = vsel %vm2940, %v1946, %v3196
      %v3453 = vsel %vm2941, %v1951, %v3197
      %v3454 = vsel %vm2942, %v1956, %v3198
      %v3455 = vsel %vm2943, %v1961, %v3199
      %v3456 = vsel %vm2944, %v1966, %v3200
      %v3457 = vsel %vm2945, %v1971, %v3201
      %v3458 = vsel %vm2946, %v1976, %v3202
      %v3459 = vsel %vm2947, %v1981, %v3203
      %v3460 = vsel %vm2948, %v1986, %v3204
      %v3461 = vsel %vm2949, %v1991, %v3205
      %v3462 = vsel %vm2950, %v1996, %v3206
      %v3463 = vsel %vm2951, %v2001, %v3207
      %v3464 = vsel %vm2952, %v2006, %v3208
      %v3465 = vsel %vm2953, %v2011, %v3209
      %v3466 = vsel %vm2954, %v2016, %v3210
      %v3467 = vsel %vm2955, %v2021, %v3211
      %v3468 = vsel %vm2956, %v2026, %v3212
      %v3469 = vsel %vm2957, %v2031, %v3213
      %v3470 = vsel %vm2958, %v2036, %v3214
      %v3471 = vsel %vm2959, %v2041, %v3215
      %v3472 = vsel %vm2960, %v2046, %v3216
      %v3473 = vsel %vm2961, %v2051, %v3217
      %v3474 = vsel %vm2962, %v2056, %v3218
      %v3475 = vsel %vm2963, %v2061, %v3219
      %v3476 = vsel %vm2964, %v2066, %v3220
      %v3477 = vsel %vm2965, %v2071, %v3221
      %v3478 = vsel %vm2966, %v2076, %v3222
      %v3479 = vsel %vm2967, %v2081, %v3223
      %v3480 = vsel %vm2968, %v2086, %v3224
      %v3481 = vsel %vm2969, %v2091, %v3225
      %v3482 = vsel %vm2970, %v2096, %v3226
      %v3483 = vsel %vm2971, %v2101, %v3227
      %v3484 = vsel %vm2972, %v2106, %v3228
      %v3485 = vsel %vm2973, %v2111, %v3229
      %v3486 = vsel %vm2974, %v2116, %v3230
      %v3487 = vsel %vm2975, %v2121, %v3231
      %v3488 = vsel %vm2976, %v2126, %v3232
      %v3489 = vsel %vm2977, %v2131, %v3233
      %v3490 = vsel %vm2978, %v2136, %v3234
      %v3491 = vsel %vm2979, %v2141, %v3235
      %v3492 = vsel %vm2980, %v2146, %v3236
      %v3493 = vsel %vm2981, %v2151, %v3237
      %v3494 = vsel %vm2982, %v2156, %v3238
      %v3495 = vsel %vm2983, %v2161, %v3239
      %v3496 = vsel %vm2984, %v2166, %v3240
      %v3497 = vsel %vm2985, %v2171, %v3241
      %v3498 = vsel %vm2986, %v2176, %v3242
      %v3499 = vsel %vm2987, %v2181, %v3243
      %v3500 = vsel %vm2988, %v2186, %v3244
      %v3501 = vsel %vm2989, %v2191, %v3245
      %v3502 = vsel %vm2990, %v2196, %v3246
      %v3503 = vsel %vm2991, %v2201, %v3247
      %v3504 = vsel %vm2992, %v2206, %v3248
      %v3505 = vsel %vm2993, %v2211, %v3249
      %v3506 = vsel %vm2994, %v2216, %v3250
      %v3507 = vsel %vm2995, %v2221, %v3251
      %v3508 = vsel %vm2996, %v2226, %v3252
      %v3509 = vsel %vm2997, %v2231, %v3253
      %v3510 = vsel %vm2998, %v2236, %v3254
      %v3511 = vsel %vm2999, %v2241, %v3255
      %v3512 = vsel %vm3000, %v2246, %v3256
      %v3513 = vsel %vm3001, %v2251, %v3257
      %v3514 = vsel %vm3002, %v2256, %v3258
      %v3515 = vsel %vm3003, %v2261, %v3259
      %v3516 = vsel %vm3004, %v2266, %v3260
      %v3517 = vsel %vm3005, %v2271, %v3261
      %v3518 = vsel %vm3006, %v2276, %v3262
      %v3519 = vsel %vm3007, %v2281, %v3263
      %v3520 = vsel %vm3008, %v2286, %v3264
      %v3521 = vsel %vm3009, %v2291, %v3265
      %v3522 = vsel %vm3010, %v2296, %v3266
      %v3523 = vsel %vm3011, %v2301, %v3267
      %v3524 = vsel %vm3012, %v2306, %v3268
      %v3525 = vsel %vm3013, %v2311, %v3269
      %v3526 = vsel %vm3014, %v2316, %v3270
      %v3527 = vsel %vm3015, %v2321, %v3271
      %v3528 = vsel %vm3016, %v2326, %v3272
      %v3529 = vsel %vm3017, %v2331, %v3273
      %v3530 = vsel %vm3018, %v2336, %v3274
      %v3531 = vsel %vm3019, %v2341, %v3275
      %v3532 = vsel %vm3020, %v2346, %v3276
      %v3533 = vsel %vm3021, %v2351, %v3277
      %v3534 = vsel %vm3022, %v2356, %v3278
      %v3535 = vsel %vm3023, %v2361, %v3279
      %v3536 = vsel %vm3024, %v2366, %v3280
      %v3537 = vsel %vm3025, %v2371, %v3281
      %v3538 = vsel %vm3026, %v2376, %v3282
      %v3539 = vsel %vm3027, %v2381, %v3283
      %v3540 = vsel %vm3028, %v2386, %v3284
      %v3541 = vsel %vm3029, %v2391, %v3285
      %v3542 = vsel %vm3030, %v2396, %v3286
      %v3543 = vsel %vm3031, %v2401, %v3287
      %v3544 = vsel %vm3032, %v2406, %v3288
      %v3545 = vsel %vm3033, %v2411, %v3289
      %v3546 = vsel %vm3034, %v2416, %v3290
      %v3547 = vsel %vm3035, %v2421, %v3291
      %v3548 = vsel %vm3036, %v2426, %v3292
      %v3549 = vsel %vm3037, %v2431, %v3293
      %v3550 = vsel %vm3038, %v2436, %v3294
      %v3551 = vsel %vm3039, %v2441, %v3295
      %v3552 = vsel %vm3040, %v2446, %v3296
      %v3553 = vsel %vm3041, %v2451, %v3297
      %v3554 = vsel %vm3042, %v2456, %v3298
      %v3555 = vsel %vm3043, %v2461, %v3299
      %v3556 = vsel %vm3044, %v2466, %v3300
      %v3557 = vsel %vm3045, %v2471, %v3301
      %v3558 = vsel %vm3046, %v2476, %v3302
      %v3559 = vsel %vm3047, %v2481, %v3303
      %v3560 = vsel %vm3048, %v2486, %v3304
      %v3561 = vsel %vm3049, %v2491, %v3305
      %v3562 = vsel %vm3050, %v2496, %v3306
      %v3563 = vsel %vm3051, %v2501, %v3307
      %v3564 = vsel %vm3052, %v2506, %v3308
      %v3565 = vsel %vm3053, %v2511, %v3309
      %v3566 = vsel %vm3054, %v2516, %v3310
      %v3567 = vsel %vm3055, %v2521, %v3311
      %v3568 = vsel %vm3056, %v2526, %v3312
      %v3569 = vsel %vm3057, %v2531, %v3313
      %v3570 = vsel %vm3058, %v2536, %v3314
      %v3571 = vsel %vm3059, %v2541, %v3315
      %v3572 = vsel %vm3060, %v2546, %v3316
      %v3573 = vsel %vm3061, %v2551, %v3317
      %v3574 = vsel %vm3062, %v2556, %v3318
      %v3575 = vsel %vm3063, %v2561, %v3319
      %v3576 = vsel %vm3064, %v2566, %v3320
      %v3577 = vsel %vm3065, %v2571, %v3321
      %v3578 = vsel %vm3066, %v2576, %v3322
      %v3579 = vsel %vm3067, %v2581, %v3323
      %v3580 = vsel %vm3068, %v2586, %v3324
      %v3581 = vsel %vm3069, %v2591, %v3325
      %v3582 = vsel %vm3070, %v2596, %v3326
      %v3583 = vsel %vm3071, %v2601, %v3327
      %v3584 = vsel %vm3072, %v2606, %v3328
      %v3585 = vsel %vm3073, %v2611, %v3329
      %v3586 = vsel %vm3074, %v2616, %v3330
      %v3587 = vsel %vm3075, %v2621, %v3331
      %v3588 = vsel %vm3076, %v2626, %v3332
      %v3589 = vsel %vm3077, %v2631, %v3333
      %v3590 = vsel %vm3078, %v2636, %v3334
      %v3591 = vsel %vm3079, %v2641, %v3335
      %v3592 = vsel %vm3080, %v2646, %v3336
      %v3593 = vsel %vm3081, %v2651, %v3337
      %v3594 = vsel %vm3082, %v2656, %v3338
      %v3595 = vsel %vm3083, %v2661, %v3339
      %v3596 = vsel %vm3084, %v2666, %v3340
      %v3597 = vsel %vm3085, %v2671, %v3341
      %v3598 = vsel %vm3086, %v2676, %v3342
      %v3599 = vsel %vm3087, %v2681, %v3343
      %v3600 = vsel %vm3088, %v2686, %v3344
      %v3601 = vsel %vm3089, %v2691, %v3345
      %v3602 = vsel %vm3090, %v2696, %v3346
      %v3603 = vsel %vm3091, %v2701, %v3347
      %v3604 = vsel %vm3092, %v2706, %v3348
      %v3605 = vsel %vm3093, %v2711, %v3349
      %v3606 = vsel %vm3094, %v2716, %v3350
      %v3607 = vsel %vm3095, %v2721, %v3351
      %v3608 = vsel %vm3096, %v2726, %v3352
      %v3609 = vsel %vm3097, %v2731, %v3353
      %v3610 = vsel %vm3098, %v2736, %v3354
      %v3611 = vsel %vm3099, %v2741, %v3355
      %v3612 = vsel %vm3100, %v2746, %v3356
      %v3613 = vsel %vm3101, %v2751, %v3357
      %v3614 = vsel %vm3102, %v2756, %v3358
      %v3615 = vsel %vm3103, %v2761, %v3359
      %v3616 = vsel %vm3104, %v2766, %v3360
      %v3617 = vsel %vm3105, %v2771, %v3361
      %v3618 = vsel %vm3106, %v2776, %v3362
      %v3619 = vsel %vm3107, %v2781, %v3363
      %v3620 = vsel %vm3108, %v2786, %v3364
      %v3621 = vsel %vm3109, %v2791, %v3365
      %v3622 = vsel %vm3110, %v2796, %v3366
      %v3623 = vsel %vm3111, %v2801, %v3367
      %v3624 = vsel %vm3112, %v2806, %v3368
      %v3625 = vsel %vm3113, %v2811, %v3369
      %v3626 = vsel %vm3114, %v2816, %v3370
      %v3627 = vsel %vm3115, %v2821, %v3371
      %v3628 = vsel %vm3116, %v2826, %v3372
      %v3629 = vsel %vm3117, %v2831, %v3373
      %v3630 = vsel %vm3118, %v2836, %v3374
      %v3631 = vsel %vm3119, %v2841, %v3375
      %v3632 = vsel %vm3120, %v2846, %v3376
      %v3633 = vsel %vm3121, %v2851, %v3377
      %v3634 = vsel %vm3122, %v2856, %v3378
      %v3635 = vsel %vm3123, %v2861, %v3379
      %v3636 = vsel %vm3124, %v2866, %v3380
      %vm3637 = vcmask 130048
      %3638 = vst.msk [vmem:[%s211] sm:$0xff] %vm3637, %v3381
      %3639 = vst.msk [vmem:[%s211 + $0x8] sm:$0xff] %vm3637, %v3382
      %3640 = vst.msk [vmem:[%s211 + $0x10] sm:$0xff] %vm3637, %v3383
      %3641 = vst.msk [vmem:[%s211 + $0x18] sm:$0xff] %vm3637, %v3384
      %3642 = vst.msk [vmem:[%s211 + $0x20] sm:$0xff] %vm3637, %v3385
      %3643 = vst.msk [vmem:[%s211 + $0x28] sm:$0xff] %vm3637, %v3386
      %3644 = vst.msk [vmem:[%s211 + $0x30] sm:$0xff] %vm3637, %v3387
      %3645 = vst.msk [vmem:[%s211 + $0x38] sm:$0xff] %vm3637, %v3388
      %3646 = vst.msk [vmem:[%s211 + $0x40] sm:$0xff] %vm3637, %v3389
      %3647 = vst.msk [vmem:[%s211 + $0x48] sm:$0xff] %vm3637, %v3390
      %3648 = vst.msk [vmem:[%s211 + $0x50] sm:$0xff] %vm3637, %v3391
      %3649 = vst.msk [vmem:[%s211 + $0x58] sm:$0xff] %vm3637, %v3392
      %3650 = vst.msk [vmem:[%s211 + $0x60] sm:$0xff] %vm3637, %v3393
      %3651 = vst.msk [vmem:[%s211 + $0x68] sm:$0xff] %vm3637, %v3394
      %3652 = vst.msk [vmem:[%s211 + $0x70] sm:$0xff] %vm3637, %v3395
      %3653 = vst.msk [vmem:[%s211 + $0x78] sm:$0xff] %vm3637, %v3396
      %3654 = vst.msk [vmem:[%s211 + $0x80] sm:$0xff] %vm3637, %v3397
      %3655 = vst.msk [vmem:[%s211 + $0x88] sm:$0xff] %vm3637, %v3398
      %3656 = vst.msk [vmem:[%s211 + $0x90] sm:$0xff] %vm3637, %v3399
      %3657 = vst.msk [vmem:[%s211 + $0x98] sm:$0xff] %vm3637, %v3400
      %3658 = vst.msk [vmem:[%s211 + $0xa0] sm:$0xff] %vm3637, %v3401
      %3659 = vst.msk [vmem:[%s211 + $0xa8] sm:$0xff] %vm3637, %v3402
      %3660 = vst.msk [vmem:[%s211 + $0xb0] sm:$0xff] %vm3637, %v3403
      %3661 = vst.msk [vmem:[%s211 + $0xb8] sm:$0xff] %vm3637, %v3404
      %3662 = vst.msk [vmem:[%s211 + $0xc0] sm:$0xff] %vm3637, %v3405
      %3663 = vst.msk [vmem:[%s211 + $0xc8] sm:$0xff] %vm3637, %v3406
      %3664 = vst.msk [vmem:[%s211 + $0xd0] sm:$0xff] %vm3637, %v3407
      %3665 = vst.msk [vmem:[%s211 + $0xd8] sm:$0xff] %vm3637, %v3408
      %3666 = vst.msk [vmem:[%s211 + $0xe0] sm:$0xff] %vm3637, %v3409
      %3667 = vst.msk [vmem:[%s211 + $0xe8] sm:$0xff] %vm3637, %v3410
      %3668 = vst.msk [vmem:[%s211 + $0xf0] sm:$0xff] %vm3637, %v3411
      %3669 = vst.msk [vmem:[%s211 + $0xf8] sm:$0xff] %vm3637, %v3412
      %3670 = vst.msk [vmem:[%s211 + $0x100] sm:$0xff] %vm3637, %v3413
      %3671 = vst.msk [vmem:[%s211 + $0x108] sm:$0xff] %vm3637, %v3414
      %3672 = vst.msk [vmem:[%s211 + $0x110] sm:$0xff] %vm3637, %v3415
      %3673 = vst.msk [vmem:[%s211 + $0x118] sm:$0xff] %vm3637, %v3416
      %3674 = vst.msk [vmem:[%s211 + $0x120] sm:$0xff] %vm3637, %v3417
      %3675 = vst.msk [vmem:[%s211 + $0x128] sm:$0xff] %vm3637, %v3418
      %3676 = vst.msk [vmem:[%s211 + $0x130] sm:$0xff] %vm3637, %v3419
      %3677 = vst.msk [vmem:[%s211 + $0x138] sm:$0xff] %vm3637, %v3420
      %3678 = vst.msk [vmem:[%s211 + $0x140] sm:$0xff] %vm3637, %v3421
      %3679 = vst.msk [vmem:[%s211 + $0x148] sm:$0xff] %vm3637, %v3422
      %3680 = vst.msk [vmem:[%s211 + $0x150] sm:$0xff] %vm3637, %v3423
      %3681 = vst.msk [vmem:[%s211 + $0x158] sm:$0xff] %vm3637, %v3424
      %3682 = vst.msk [vmem:[%s211 + $0x160] sm:$0xff] %vm3637, %v3425
      %3683 = vst.msk [vmem:[%s211 + $0x168] sm:$0xff] %vm3637, %v3426
      %3684 = vst.msk [vmem:[%s211 + $0x170] sm:$0xff] %vm3637, %v3427
      %3685 = vst.msk [vmem:[%s211 + $0x178] sm:$0xff] %vm3637, %v3428
      %3686 = vst.msk [vmem:[%s211 + $0x180] sm:$0xff] %vm3637, %v3429
      %3687 = vst.msk [vmem:[%s211 + $0x188] sm:$0xff] %vm3637, %v3430
      %3688 = vst.msk [vmem:[%s211 + $0x190] sm:$0xff] %vm3637, %v3431
      %3689 = vst.msk [vmem:[%s211 + $0x198] sm:$0xff] %vm3637, %v3432
      %3690 = vst.msk [vmem:[%s211 + $0x1a0] sm:$0xff] %vm3637, %v3433
      %3691 = vst.msk [vmem:[%s211 + $0x1a8] sm:$0xff] %vm3637, %v3434
      %3692 = vst.msk [vmem:[%s211 + $0x1b0] sm:$0xff] %vm3637, %v3435
      %3693 = vst.msk [vmem:[%s211 + $0x1b8] sm:$0xff] %vm3637, %v3436
      %3694 = vst.msk [vmem:[%s211 + $0x1c0] sm:$0xff] %vm3637, %v3437
      %3695 = vst.msk [vmem:[%s211 + $0x1c8] sm:$0xff] %vm3637, %v3438
      %3696 = vst.msk [vmem:[%s211 + $0x1d0] sm:$0xff] %vm3637, %v3439
      %3697 = vst.msk [vmem:[%s211 + $0x1d8] sm:$0xff] %vm3637, %v3440
      %3698 = vst.msk [vmem:[%s211 + $0x1e0] sm:$0xff] %vm3637, %v3441
      %3699 = vst.msk [vmem:[%s211 + $0x1e8] sm:$0xff] %vm3637, %v3442
      %3700 = vst.msk [vmem:[%s211 + $0x1f0] sm:$0xff] %vm3637, %v3443
      %3701 = vst.msk [vmem:[%s211 + $0x1f8] sm:$0xff] %vm3637, %v3444
      %3702 = vst.msk [vmem:[%s211 + $0x200] sm:$0xff] %vm3637, %v3445
      %3703 = vst.msk [vmem:[%s211 + $0x208] sm:$0xff] %vm3637, %v3446
      %3704 = vst.msk [vmem:[%s211 + $0x210] sm:$0xff] %vm3637, %v3447
      %3705 = vst.msk [vmem:[%s211 + $0x218] sm:$0xff] %vm3637, %v3448
      %3706 = vst.msk [vmem:[%s211 + $0x220] sm:$0xff] %vm3637, %v3449
      %3707 = vst.msk [vmem:[%s211 + $0x228] sm:$0xff] %vm3637, %v3450
      %3708 = vst.msk [vmem:[%s211 + $0x230] sm:$0xff] %vm3637, %v3451
      %3709 = vst.msk [vmem:[%s211 + $0x238] sm:$0xff] %vm3637, %v3452
      %3710 = vst.msk [vmem:[%s211 + $0x240] sm:$0xff] %vm3637, %v3453
      %3711 = vst.msk [vmem:[%s211 + $0x248] sm:$0xff] %vm3637, %v3454
      %3712 = vst.msk [vmem:[%s211 + $0x250] sm:$0xff] %vm3637, %v3455
      %3713 = vst.msk [vmem:[%s211 + $0x258] sm:$0xff] %vm3637, %v3456
      %3714 = vst.msk [vmem:[%s211 + $0x260] sm:$0xff] %vm3637, %v3457
      %3715 = vst.msk [vmem:[%s211 + $0x268] sm:$0xff] %vm3637, %v3458
      %3716 = vst.msk [vmem:[%s211 + $0x270] sm:$0xff] %vm3637, %v3459
      %3717 = vst.msk [vmem:[%s211 + $0x278] sm:$0xff] %vm3637, %v3460
      %3718 = vst.msk [vmem:[%s211 + $0x280] sm:$0xff] %vm3637, %v3461
      %3719 = vst.msk [vmem:[%s211 + $0x288] sm:$0xff] %vm3637, %v3462
      %3720 = vst.msk [vmem:[%s211 + $0x290] sm:$0xff] %vm3637, %v3463
      %3721 = vst.msk [vmem:[%s211 + $0x298] sm:$0xff] %vm3637, %v3464
      %3722 = vst.msk [vmem:[%s211 + $0x2a0] sm:$0xff] %vm3637, %v3465
      %3723 = vst.msk [vmem:[%s211 + $0x2a8] sm:$0xff] %vm3637, %v3466
      %3724 = vst.msk [vmem:[%s211 + $0x2b0] sm:$0xff] %vm3637, %v3467
      %3725 = vst.msk [vmem:[%s211 + $0x2b8] sm:$0xff] %vm3637, %v3468
      %3726 = vst.msk [vmem:[%s211 + $0x2c0] sm:$0xff] %vm3637, %v3469
      %3727 = vst.msk [vmem:[%s211 + $0x2c8] sm:$0xff] %vm3637, %v3470
      %3728 = vst.msk [vmem:[%s211 + $0x2d0] sm:$0xff] %vm3637, %v3471
      %3729 = vst.msk [vmem:[%s211 + $0x2d8] sm:$0xff] %vm3637, %v3472
      %3730 = vst.msk [vmem:[%s211 + $0x2e0] sm:$0xff] %vm3637, %v3473
      %3731 = vst.msk [vmem:[%s211 + $0x2e8] sm:$0xff] %vm3637, %v3474
      %3732 = vst.msk [vmem:[%s211 + $0x2f0] sm:$0xff] %vm3637, %v3475
      %3733 = vst.msk [vmem:[%s211 + $0x2f8] sm:$0xff] %vm3637, %v3476
      %3734 = vst.msk [vmem:[%s211 + $0x300] sm:$0xff] %vm3637, %v3477
      %3735 = vst.msk [vmem:[%s211 + $0x308] sm:$0xff] %vm3637, %v3478
      %3736 = vst.msk [vmem:[%s211 + $0x310] sm:$0xff] %vm3637, %v3479
      %3737 = vst.msk [vmem:[%s211 + $0x318] sm:$0xff] %vm3637, %v3480
      %3738 = vst.msk [vmem:[%s211 + $0x320] sm:$0xff] %vm3637, %v3481
      %3739 = vst.msk [vmem:[%s211 + $0x328] sm:$0xff] %vm3637, %v3482
      %3740 = vst.msk [vmem:[%s211 + $0x330] sm:$0xff] %vm3637, %v3483
      %3741 = vst.msk [vmem:[%s211 + $0x338] sm:$0xff] %vm3637, %v3484
      %3742 = vst.msk [vmem:[%s211 + $0x340] sm:$0xff] %vm3637, %v3485
      %3743 = vst.msk [vmem:[%s211 + $0x348] sm:$0xff] %vm3637, %v3486
      %3744 = vst.msk [vmem:[%s211 + $0x350] sm:$0xff] %vm3637, %v3487
      %3745 = vst.msk [vmem:[%s211 + $0x358] sm:$0xff] %vm3637, %v3488
      %3746 = vst.msk [vmem:[%s211 + $0x360] sm:$0xff] %vm3637, %v3489
      %3747 = vst.msk [vmem:[%s211 + $0x368] sm:$0xff] %vm3637, %v3490
      %3748 = vst.msk [vmem:[%s211 + $0x370] sm:$0xff] %vm3637, %v3491
      %3749 = vst.msk [vmem:[%s211 + $0x378] sm:$0xff] %vm3637, %v3492
      %3750 = vst.msk [vmem:[%s211 + $0x380] sm:$0xff] %vm3637, %v3493
      %3751 = vst.msk [vmem:[%s211 + $0x388] sm:$0xff] %vm3637, %v3494
      %3752 = vst.msk [vmem:[%s211 + $0x390] sm:$0xff] %vm3637, %v3495
      %3753 = vst.msk [vmem:[%s211 + $0x398] sm:$0xff] %vm3637, %v3496
      %3754 = vst.msk [vmem:[%s211 + $0x3a0] sm:$0xff] %vm3637, %v3497
      %3755 = vst.msk [vmem:[%s211 + $0x3a8] sm:$0xff] %vm3637, %v3498
      %3756 = vst.msk [vmem:[%s211 + $0x3b0] sm:$0xff] %vm3637, %v3499
      %3757 = vst.msk [vmem:[%s211 + $0x3b8] sm:$0xff] %vm3637, %v3500
      %3758 = vst.msk [vmem:[%s211 + $0x3c0] sm:$0xff] %vm3637, %v3501
      %3759 = vst.msk [vmem:[%s211 + $0x3c8] sm:$0xff] %vm3637, %v3502
      %3760 = vst.msk [vmem:[%s211 + $0x3d0] sm:$0xff] %vm3637, %v3503
      %3761 = vst.msk [vmem:[%s211 + $0x3d8] sm:$0xff] %vm3637, %v3504
      %3762 = vst.msk [vmem:[%s211 + $0x3e0] sm:$0xff] %vm3637, %v3505
      %3763 = vst.msk [vmem:[%s211 + $0x3e8] sm:$0xff] %vm3637, %v3506
      %3764 = vst.msk [vmem:[%s211 + $0x3f0] sm:$0xff] %vm3637, %v3507
      %3765 = vst.msk [vmem:[%s211 + $0x3f8] sm:$0xff] %vm3637, %v3508
      %3766 = vst.msk [vmem:[%s211 + $0x400] sm:$0xff] %vm3637, %v3509
      %3767 = vst.msk [vmem:[%s211 + $0x408] sm:$0xff] %vm3637, %v3510
      %3768 = vst.msk [vmem:[%s211 + $0x410] sm:$0xff] %vm3637, %v3511
      %3769 = vst.msk [vmem:[%s211 + $0x418] sm:$0xff] %vm3637, %v3512
      %3770 = vst.msk [vmem:[%s211 + $0x420] sm:$0xff] %vm3637, %v3513
      %3771 = vst.msk [vmem:[%s211 + $0x428] sm:$0xff] %vm3637, %v3514
      %3772 = vst.msk [vmem:[%s211 + $0x430] sm:$0xff] %vm3637, %v3515
      %3773 = vst.msk [vmem:[%s211 + $0x438] sm:$0xff] %vm3637, %v3516
      %3774 = vst.msk [vmem:[%s211 + $0x440] sm:$0xff] %vm3637, %v3517
      %3775 = vst.msk [vmem:[%s211 + $0x448] sm:$0xff] %vm3637, %v3518
      %3776 = vst.msk [vmem:[%s211 + $0x450] sm:$0xff] %vm3637, %v3519
      %3777 = vst.msk [vmem:[%s211 + $0x458] sm:$0xff] %vm3637, %v3520
      %3778 = vst.msk [vmem:[%s211 + $0x460] sm:$0xff] %vm3637, %v3521
      %3779 = vst.msk [vmem:[%s211 + $0x468] sm:$0xff] %vm3637, %v3522
      %3780 = vst.msk [vmem:[%s211 + $0x470] sm:$0xff] %vm3637, %v3523
      %3781 = vst.msk [vmem:[%s211 + $0x478] sm:$0xff] %vm3637, %v3524
      %3782 = vst.msk [vmem:[%s211 + $0x480] sm:$0xff] %vm3637, %v3525
      %3783 = vst.msk [vmem:[%s211 + $0x488] sm:$0xff] %vm3637, %v3526
      %3784 = vst.msk [vmem:[%s211 + $0x490] sm:$0xff] %vm3637, %v3527
      %3785 = vst.msk [vmem:[%s211 + $0x498] sm:$0xff] %vm3637, %v3528
      %3786 = vst.msk [vmem:[%s211 + $0x4a0] sm:$0xff] %vm3637, %v3529
      %3787 = vst.msk [vmem:[%s211 + $0x4a8] sm:$0xff] %vm3637, %v3530
      %3788 = vst.msk [vmem:[%s211 + $0x4b0] sm:$0xff] %vm3637, %v3531
      %3789 = vst.msk [vmem:[%s211 + $0x4b8] sm:$0xff] %vm3637, %v3532
      %3790 = vst.msk [vmem:[%s211 + $0x4c0] sm:$0xff] %vm3637, %v3533
      %3791 = vst.msk [vmem:[%s211 + $0x4c8] sm:$0xff] %vm3637, %v3534
      %3792 = vst.msk [vmem:[%s211 + $0x4d0] sm:$0xff] %vm3637, %v3535
      %3793 = vst.msk [vmem:[%s211 + $0x4d8] sm:$0xff] %vm3637, %v3536
      %3794 = vst.msk [vmem:[%s211 + $0x4e0] sm:$0xff] %vm3637, %v3537
      %3795 = vst.msk [vmem:[%s211 + $0x4e8] sm:$0xff] %vm3637, %v3538
      %3796 = vst.msk [vmem:[%s211 + $0x4f0] sm:$0xff] %vm3637, %v3539
      %3797 = vst.msk [vmem:[%s211 + $0x4f8] sm:$0xff] %vm3637, %v3540
      %3798 = vst.msk [vmem:[%s211 + $0x500] sm:$0xff] %vm3637, %v3541
      %3799 = vst.msk [vmem:[%s211 + $0x508] sm:$0xff] %vm3637, %v3542
      %3800 = vst.msk [vmem:[%s211 + $0x510] sm:$0xff] %vm3637, %v3543
      %3801 = vst.msk [vmem:[%s211 + $0x518] sm:$0xff] %vm3637, %v3544
      %3802 = vst.msk [vmem:[%s211 + $0x520] sm:$0xff] %vm3637, %v3545
      %3803 = vst.msk [vmem:[%s211 + $0x528] sm:$0xff] %vm3637, %v3546
      %3804 = vst.msk [vmem:[%s211 + $0x530] sm:$0xff] %vm3637, %v3547
      %3805 = vst.msk [vmem:[%s211 + $0x538] sm:$0xff] %vm3637, %v3548
      %3806 = vst.msk [vmem:[%s211 + $0x540] sm:$0xff] %vm3637, %v3549
      %3807 = vst.msk [vmem:[%s211 + $0x548] sm:$0xff] %vm3637, %v3550
      %3808 = vst.msk [vmem:[%s211 + $0x550] sm:$0xff] %vm3637, %v3551
      %3809 = vst.msk [vmem:[%s211 + $0x558] sm:$0xff] %vm3637, %v3552
      %3810 = vst.msk [vmem:[%s211 + $0x560] sm:$0xff] %vm3637, %v3553
      %3811 = vst.msk [vmem:[%s211 + $0x568] sm:$0xff] %vm3637, %v3554
      %3812 = vst.msk [vmem:[%s211 + $0x570] sm:$0xff] %vm3637, %v3555
      %3813 = vst.msk [vmem:[%s211 + $0x578] sm:$0xff] %vm3637, %v3556
      %3814 = vst.msk [vmem:[%s211 + $0x580] sm:$0xff] %vm3637, %v3557
      %3815 = vst.msk [vmem:[%s211 + $0x588] sm:$0xff] %vm3637, %v3558
      %3816 = vst.msk [vmem:[%s211 + $0x590] sm:$0xff] %vm3637, %v3559
      %3817 = vst.msk [vmem:[%s211 + $0x598] sm:$0xff] %vm3637, %v3560
      %3818 = vst.msk [vmem:[%s211 + $0x5a0] sm:$0xff] %vm3637, %v3561
      %3819 = vst.msk [vmem:[%s211 + $0x5a8] sm:$0xff] %vm3637, %v3562
      %3820 = vst.msk [vmem:[%s211 + $0x5b0] sm:$0xff] %vm3637, %v3563
      %3821 = vst.msk [vmem:[%s211 + $0x5b8] sm:$0xff] %vm3637, %v3564
      %3822 = vst.msk [vmem:[%s211 + $0x5c0] sm:$0xff] %vm3637, %v3565
      %3823 = vst.msk [vmem:[%s211 + $0x5c8] sm:$0xff] %vm3637, %v3566
      %3824 = vst.msk [vmem:[%s211 + $0x5d0] sm:$0xff] %vm3637, %v3567
      %3825 = vst.msk [vmem:[%s211 + $0x5d8] sm:$0xff] %vm3637, %v3568
      %3826 = vst.msk [vmem:[%s211 + $0x5e0] sm:$0xff] %vm3637, %v3569
      %3827 = vst.msk [vmem:[%s211 + $0x5e8] sm:$0xff] %vm3637, %v3570
      %3828 = vst.msk [vmem:[%s211 + $0x5f0] sm:$0xff] %vm3637, %v3571
      %3829 = vst.msk [vmem:[%s211 + $0x5f8] sm:$0xff] %vm3637, %v3572
      %3830 = vst.msk [vmem:[%s211 + $0x600] sm:$0xff] %vm3637, %v3573
      %3831 = vst.msk [vmem:[%s211 + $0x608] sm:$0xff] %vm3637, %v3574
      %3832 = vst.msk [vmem:[%s211 + $0x610] sm:$0xff] %vm3637, %v3575
      %3833 = vst.msk [vmem:[%s211 + $0x618] sm:$0xff] %vm3637, %v3576
      %3834 = vst.msk [vmem:[%s211 + $0x620] sm:$0xff] %vm3637, %v3577
      %3835 = vst.msk [vmem:[%s211 + $0x628] sm:$0xff] %vm3637, %v3578
      %3836 = vst.msk [vmem:[%s211 + $0x630] sm:$0xff] %vm3637, %v3579
      %3837 = vst.msk [vmem:[%s211 + $0x638] sm:$0xff] %vm3637, %v3580
      %3838 = vst.msk [vmem:[%s211 + $0x640] sm:$0xff] %vm3637, %v3581
      %3839 = vst.msk [vmem:[%s211 + $0x648] sm:$0xff] %vm3637, %v3582
      %3840 = vst.msk [vmem:[%s211 + $0x650] sm:$0xff] %vm3637, %v3583
      %3841 = vst.msk [vmem:[%s211 + $0x658] sm:$0xff] %vm3637, %v3584
      %3842 = vst.msk [vmem:[%s211 + $0x660] sm:$0xff] %vm3637, %v3585
      %3843 = vst.msk [vmem:[%s211 + $0x668] sm:$0xff] %vm3637, %v3586
      %3844 = vst.msk [vmem:[%s211 + $0x670] sm:$0xff] %vm3637, %v3587
      %3845 = vst.msk [vmem:[%s211 + $0x678] sm:$0xff] %vm3637, %v3588
      %3846 = vst.msk [vmem:[%s211 + $0x680] sm:$0xff] %vm3637, %v3589
      %3847 = vst.msk [vmem:[%s211 + $0x688] sm:$0xff] %vm3637, %v3590
      %3848 = vst.msk [vmem:[%s211 + $0x690] sm:$0xff] %vm3637, %v3591
      %3849 = vst.msk [vmem:[%s211 + $0x698] sm:$0xff] %vm3637, %v3592
      %3850 = vst.msk [vmem:[%s211 + $0x6a0] sm:$0xff] %vm3637, %v3593
      %3851 = vst.msk [vmem:[%s211 + $0x6a8] sm:$0xff] %vm3637, %v3594
      %3852 = vst.msk [vmem:[%s211 + $0x6b0] sm:$0xff] %vm3637, %v3595
      %3853 = vst.msk [vmem:[%s211 + $0x6b8] sm:$0xff] %vm3637, %v3596
      %3854 = vst.msk [vmem:[%s211 + $0x6c0] sm:$0xff] %vm3637, %v3597
      %3855 = vst.msk [vmem:[%s211 + $0x6c8] sm:$0xff] %vm3637, %v3598
      %3856 = vst.msk [vmem:[%s211 + $0x6d0] sm:$0xff] %vm3637, %v3599
      %3857 = vst.msk [vmem:[%s211 + $0x6d8] sm:$0xff] %vm3637, %v3600
      %3858 = vst.msk [vmem:[%s211 + $0x6e0] sm:$0xff] %vm3637, %v3601
      %3859 = vst.msk [vmem:[%s211 + $0x6e8] sm:$0xff] %vm3637, %v3602
      %3860 = vst.msk [vmem:[%s211 + $0x6f0] sm:$0xff] %vm3637, %v3603
      %3861 = vst.msk [vmem:[%s211 + $0x6f8] sm:$0xff] %vm3637, %v3604
      %3862 = vst.msk [vmem:[%s211 + $0x700] sm:$0xff] %vm3637, %v3605
      %3863 = vst.msk [vmem:[%s211 + $0x708] sm:$0xff] %vm3637, %v3606
      %3864 = vst.msk [vmem:[%s211 + $0x710] sm:$0xff] %vm3637, %v3607
      %3865 = vst.msk [vmem:[%s211 + $0x718] sm:$0xff] %vm3637, %v3608
      %3866 = vst.msk [vmem:[%s211 + $0x720] sm:$0xff] %vm3637, %v3609
      %3867 = vst.msk [vmem:[%s211 + $0x728] sm:$0xff] %vm3637, %v3610
      %3868 = vst.msk [vmem:[%s211 + $0x730] sm:$0xff] %vm3637, %v3611
      %3869 = vst.msk [vmem:[%s211 + $0x738] sm:$0xff] %vm3637, %v3612
      %3870 = vst.msk [vmem:[%s211 + $0x740] sm:$0xff] %vm3637, %v3613
      %3871 = vst.msk [vmem:[%s211 + $0x748] sm:$0xff] %vm3637, %v3614
      %3872 = vst.msk [vmem:[%s211 + $0x750] sm:$0xff] %vm3637, %v3615
      %3873 = vst.msk [vmem:[%s211 + $0x758] sm:$0xff] %vm3637, %v3616
      %3874 = vst.msk [vmem:[%s211 + $0x760] sm:$0xff] %vm3637, %v3617
      %3875 = vst.msk [vmem:[%s211 + $0x768] sm:$0xff] %vm3637, %v3618
      %3876 = vst.msk [vmem:[%s211 + $0x770] sm:$0xff] %vm3637, %v3619
      %3877 = vst.msk [vmem:[%s211 + $0x778] sm:$0xff] %vm3637, %v3620
      %3878 = vst.msk [vmem:[%s211 + $0x780] sm:$0xff] %vm3637, %v3621
      %3879 = vst.msk [vmem:[%s211 + $0x788] sm:$0xff] %vm3637, %v3622
      %3880 = vst.msk [vmem:[%s211 + $0x790] sm:$0xff] %vm3637, %v3623
      %3881 = vst.msk [vmem:[%s211 + $0x798] sm:$0xff] %vm3637, %v3624
      %3882 = vst.msk [vmem:[%s211 + $0x7a0] sm:$0xff] %vm3637, %v3625
      %3883 = vst.msk [vmem:[%s211 + $0x7a8] sm:$0xff] %vm3637, %v3626
      %3884 = vst.msk [vmem:[%s211 + $0x7b0] sm:$0xff] %vm3637, %v3627
      %3885 = vst.msk [vmem:[%s211 + $0x7b8] sm:$0xff] %vm3637, %v3628
      %3886 = vst.msk [vmem:[%s211 + $0x7c0] sm:$0xff] %vm3637, %v3629
      %3887 = vst.msk [vmem:[%s211 + $0x7c8] sm:$0xff] %vm3637, %v3630
      %3888 = vst.msk [vmem:[%s211 + $0x7d0] sm:$0xff] %vm3637, %v3631
      %3889 = vst.msk [vmem:[%s211 + $0x7d8] sm:$0xff] %vm3637, %v3632
      %3890 = vst.msk [vmem:[%s211 + $0x7e0] sm:$0xff] %vm3637, %v3633
      %3891 = vst.msk [vmem:[%s211 + $0x7e8] sm:$0xff] %vm3637, %v3634
      %3892 = vst.msk [vmem:[%s211 + $0x7f0] sm:$0xff] %vm3637, %v3635
      %3893 = vst.msk [vmem:[%s211 + $0x7f8] sm:$0xff] %vm3637, %v3636
      %s3894 = smul.u32 256, %s19
      %p3895 = scmp.lt.s32.totalorder %s18, 1
      %s3896 = scalar_select %p3895, %s18, 1
      %p3897 = scmp.lt.s32.totalorder %s3894, 511
      %s3898 = scalar_select %p3897, %s3894, 511
      %s3899 = smul.addr %s3896, 512
      %s3900 = sadd.s32 %s3898, %s3899
      %s3901 = smul.addr %s3900, 8
      %s3902 = scalar_lea.vmem %s3, %s3901
      // Predicated region
      $region33: #{tpu_custom_call.1} parent=31 // pred_check
        %p3903 = pneg %p116
      $region34: #{tpu_custom_call.1} parent=31 // pred_check_branch
        %3905 = sbr.rel (%p3903) target = $region36
      $region35: #{tpu_custom_call.1} parent=31 // pred_region
        %s3906 = smul.u32 256, %s19
      $region36: #{tpu_custom_call.1} parent=31 // pred_fallthru
        _
    $region32: #{tpu_custom_call.1} parent=5 // pred_fallthru
      _
    %p3907 = scmp.le.s32.totalorder 2, %s9
    // Predicated region
    $region37: #{tpu_custom_call.1} parent=5 // pred_check
      %p3908 = pneg %p3907
    $region38: #{tpu_custom_call.1} parent=5 // pred_check_branch
      %3910 = sbr.rel (%p3908) target = $region40
    $region39: #{tpu_custom_call.1} parent=5 // pred_region
      %s3911 = ssub.s32 %s9, 2
      // Predicated region
      $region41: #{tpu_custom_call.1} parent=39 // pred_check
        %p3912 = pneg %p122
      $region42: #{tpu_custom_call.1} parent=39 // pred_check_branch
        %3914 = sbr.rel (%p3912) target = $region44
      $region43: #{tpu_custom_call.1} parent=39 // pred_region
        %s3915 = smul.u32 256, %s21
        %p3916 = scmp.lt.s32.totalorder %s20, 1
        %s3917 = scalar_select %p3916, %s20, 1
        %p3918 = scmp.lt.s32.totalorder %s3915, 511
        %s3919 = scalar_select %p3918, %s3915, 511
        %s3920 = smul.addr %s3917, 512
        %s3921 = sadd.s32 %s3919, %s3920
        %s3922 = smul.addr %s3921, 8
        %s3923 = scalar_lea.vmem %s3, %s3922
      $region44: #{tpu_custom_call.1} parent=39 // pred_fallthru
        _
    $region40: #{tpu_custom_call.1} parent=5 // pred_fallthru
      _
  $region6: #{tpu_custom_call.1} parent=0 // loop_footer
    %s13 = sadd.s32 1, %s9
  $region7: #{tpu_custom_call.1} parent=0 // loop_footer_branch
    %8 = sbr.rel target = $region3
  $region8: #{tpu_custom_call.1} parent=0 // loop_exit
    _

</llo_original>
